<compile_context>
chip_gen: v7x
topology: tpu7x:2x2x1
jax: 0.10.0
libtpu: 0.0.40
codegen_flags: <defaults>
</compile_context>

<pallas_src>
import functools

import jax
import jax.numpy as jnp
from jax.experimental import pallas as pl
from jax.experimental.pallas import tpu as pltpu

BN_EPS = 1e-5


def _vmem_limit_bytes():
    """~3/4 of physical VMEM (v5e/v6e: 96 MiB, v7x: 48 MiB); safe fallback."""
    try:
        cap = int(pltpu.get_tpu_info().vmem_capacity_bytes)
    except Exception:
        cap = 64 * 1024 * 1024
    return (cap // 4) * 3


_VMEM_LIMIT = _vmem_limit_bytes()


def _pick_rows(n, target):
    """Largest divisor of n <= target, preferring multiples of 128, then 8.

    Falls back to n (whole slab) only for the elementwise affine pass.
    TODO(synk): pad + mask the tail tile instead of the whole-slab fallback.
    """
    if n <= target:
        return n
    for step in (128, 8):
        best = None
        for t in range(step, target + 1, step):
            if n % t == 0:
                best = t
        if best is not None:
            return best
    return n


# ----------------------------------------------------------------------------
# Shared conv core: zero-pad into a VMEM scratch plane, 9 shifted-window dots
# (bf16 operands, f32 accumulation), bias, store y, emit per-image (mean, M2).
# ----------------------------------------------------------------------------
def _conv3x3_core(x_f32, w_ref, b_ref, y_ref, s_ref, xp_ref, *, H, W, Cin, Cout):
    xp_ref[...] = jnp.zeros_like(xp_ref)                    # padding=1 border
    xp_ref[pl.ds(1, H), pl.ds(1, W), :] = x_f32.astype(xp_ref.dtype)

    w = w_ref[...]                                          # (3,3,Cin,Cout) bf16
    acc = jnp.broadcast_to(b_ref[...], (H * W, Cout))       # f32 bias init
    for dy in range(3):
        for dx in range(3):
            win = xp_ref[pl.ds(dy, H), pl.ds(dx, W), :]     # (H, W, Cin)
            lhs = win.reshape(H * W, Cin).astype(jnp.bfloat16)
            acc = acc + jnp.dot(lhs, w[dy, dx],
                                preferred_element_type=jnp.float32)

    y_ref[0] = acc.reshape(H, W, Cout).astype(y_ref.dtype)

    # Per-image centered statistics (merged Chan/Welford-style in the wrapper),
    # computed from the f32 accumulator before the bf16 downcast.
    mean = jnp.sum(acc, axis=0, keepdims=True) * (1.0 / (H * W))
    m2 = jnp.sum((acc - mean) ** 2, axis=0, keepdims=True)
    s_ref[0, 0:1, :] = mean
    s_ref[0, 1:2, :] = m2


def _pool_conv_kernel(x_ref, w_ref, b_ref, y_ref, s_ref, xp_ref,
                      *, H, W, Cin, Cout):
    # x_ref: (1, H, 2, W, 2*Cin) free view of the pre-pool NHWC input.
    x = x_ref[0]
    x = jnp.maximum(x[:, 0], x[:, 1])               # max over the two window rows
    x = jnp.maximum(x[..., :Cin], x[..., Cin:])     # max over the two window cols
    _conv3x3_core(x, w_ref, b_ref, y_ref, s_ref, xp_ref,
                  H=H, W=W, Cin=Cin, Cout=Cout)


def _bnrelu_conv_kernel(y_prev_ref, sc_ref, sh_ref, w_ref, b_ref, y_ref, s_ref,
                        xp_ref, *, H, W, Cin, Cout):
    # Layer-1 BatchNorm + ReLU applied on the fly to the raw conv-1 output
    # (so the normalized activation never hits HBM). Padding happens after the
    # ReLU inside the core, matching Conv2d(padding=1) semantics.
    x = jnp.maximum(y_prev_ref[0].astype(jnp.float32) * sc_ref[...] + sh_ref[...],
                    0.0)
    _conv3x3_core(x, w_ref, b_ref, y_ref, s_ref, xp_ref,
                  H=H, W=W, Cin=Cin, Cout=Cout)


# ----------------------------------------------------------------------------
# pallas_call wrappers
# ----------------------------------------------------------------------------
def pool_conv_bn_stats(x_nhwc, w, b):
    """MaxPool2d(2) + Conv3x3(pad=1, bias) + per-image BN partial stats.
    x: (N, 2H, 2W, Cin) NHWC. Returns y: (N,H,W,Cout) bf16, stats: (N,2,Cout)."""
    N, H0, W0, Cin = x_nhwc.shape
    H, W = H0 // 2, W0 // 2
    Cout = w.shape[-1]
    x6 = x_nhwc[:, :2 * H, :2 * W, :].reshape(N, H, 2, W, 2 * Cin)  # free view
    wb = w.astype(jnp.bfloat16)
    b2 = b.reshape(1, Cout).astype(jnp.float32)
    kernel = functools.partial(_pool_conv_kernel, H=H, W=W, Cin=Cin, Cout=Cout)
    return pl.pallas_call(
        kernel,
        out_shape=(jax.ShapeDtypeStruct((N, H, W, Cout), jnp.bfloat16),
                   jax.ShapeDtypeStruct((N, 2, Cout), jnp.float32)),
        grid=(N,),
        in_specs=[pl.BlockSpec((1, H, 2, W, 2 * Cin), lambda n: (n, 0, 0, 0, 0)),
                  pl.BlockSpec((3, 3, Cin, Cout), lambda n: (0, 0, 0, 0)),
                  pl.BlockSpec((1, Cout), lambda n: (0, 0))],
        out_specs=(pl.BlockSpec((1, H, W, Cout), lambda n: (n, 0, 0, 0)),
                   pl.BlockSpec((1, 2, Cout), lambda n: (n, 0, 0))),
        scratch_shapes=[pltpu.VMEM((H + 2, W + 2, Cin), jnp.float32)],
        compiler_params=pltpu.CompilerParams(
            dimension_semantics=("parallel",), vmem_limit_bytes=_VMEM_LIMIT),
    )(x6, wb, b2)


def bnrelu_conv_bn_stats(y_prev, scale, shift, w, b):
    """BN-apply + ReLU (fused into the input path) + Conv3x3(pad=1, bias) +
    per-image BN partial stats. y_prev: raw conv-1 output, (N,H,W,Cin) bf16."""
    N, H, W, Cin = y_prev.shape
    Cout = w.shape[-1]
    wb = w.astype(jnp.bfloat16)
    b2 = b.reshape(1, Cout).astype(jnp.float32)
    sc = scale.reshape(1, 1, Cin).astype(jnp.float32)
    sh = shift.reshape(1, 1, Cin).astype(jnp.float32)
    kernel = functools.partial(_bnrelu_conv_kernel, H=H, W=W, Cin=Cin, Cout=Cout)
    return pl.pallas_call(
        kernel,
        out_shape=(jax.ShapeDtypeStruct((N, H, W, Cout), jnp.bfloat16),
                   jax.ShapeDtypeStruct((N, 2, Cout), jnp.float32)),
        grid=(N,),
        in_specs=[pl.BlockSpec((1, H, W, Cin), lambda n: (n, 0, 0, 0)),
                  pl.BlockSpec((1, 1, Cin), lambda n: (0, 0, 0)),
                  pl.BlockSpec((1, 1, Cin), lambda n: (0, 0, 0)),
                  pl.BlockSpec((3, 3, Cin, Cout), lambda n: (0, 0, 0, 0)),
                  pl.BlockSpec((1, Cout), lambda n: (0, 0))],
        out_specs=(pl.BlockSpec((1, H, W, Cout), lambda n: (n, 0, 0, 0)),
                   pl.BlockSpec((1, 2, Cout), lambda n: (n, 0, 0))),
        scratch_shapes=[pltpu.VMEM((H + 2, W + 2, Cin), jnp.float32)],
        compiler_params=pltpu.CompilerParams(
            dimension_semantics=("parallel",), vmem_limit_bytes=_VMEM_LIMIT),
    )(y_prev, sc, sh, wb, b2)


def _bn_scale_shift(stats, count_per_tile, gamma, beta, eps=BN_EPS):
    """Merge per-image (mean, M2) partials (equal counts) -> BN scale / shift."""
    t = stats.shape[0]
    means = stats[:, 0, :]
    m2 = stats[:, 1, :]
    mean = jnp.mean(means, axis=0)
    ss = jnp.sum(m2, axis=0) + count_per_tile * jnp.sum((means - mean) ** 2, axis=0)
    var = jnp.maximum(ss / (t * count_per_tile), 0.0)      # biased batch variance
    scale = gamma * jax.lax.rsqrt(var + eps)
    shift = beta - mean * scale
    return scale, shift


# ----------------------------------------------------------------------------
# Final BatchNorm-apply + ReLU (lane-dense when channels tile 128 lanes).
# ----------------------------------------------------------------------------
def _affine_relu_kernel(y_ref, s_ref, t_ref, o_ref):
    y = y_ref[...].astype(jnp.float32)
    o_ref[...] = jnp.maximum(y * s_ref[...] + t_ref[...], 0.0).astype(o_ref.dtype)


def bn_relu_apply(y_nhwc, scale, shift, out_dtype):
    N, H, W, C = y_nhwc.shape
    M = N * H * W
    y2 = y_nhwc.reshape(M, C)
    cp = pltpu.CompilerParams(dimension_semantics=("parallel",),
                              vmem_limit_bytes=_VMEM_LIMIT)

    if C <= 128 and 128 % C == 0 and (M * C) % 128 == 0:
        # lane-dense: last dim is a full 128-lane vector, channel pattern tiles
        R = (M * C) // 128
        rep = 128 // C
        yl = y2.reshape(R, 128)
        sl = jnp.tile(scale, rep).reshape(1, 128).astype(jnp.float32)
        tl = jnp.tile(shift, rep).reshape(1, 128).astype(jnp.float32)
        tr = _pick_rows(R, 2048)
        out = pl.pallas_call(
            _affine_relu_kernel,
            out_shape=jax.ShapeDtypeStruct((R, 128), out_dtype),
            grid=(R // tr,),
            in_specs=[pl.BlockSpec((tr, 128), lambda i: (i, 0)),
                      pl.BlockSpec((1, 128), lambda i: (0, 0)),
                      pl.BlockSpec((1, 128), lambda i: (0, 0))],
            out_specs=pl.BlockSpec((tr, 128), lambda i: (i, 0)),
            compiler_params=cp,
        )(yl, sl, tl)
        return out.reshape(N, H, W, C)

    # fallback: channels on lanes directly
    tm = _pick_rows(M, 2048)
    out = pl.pallas_call(
        _affine_relu_kernel,
        out_shape=jax.ShapeDtypeStruct((M, C), out_dtype),
        grid=(M // tm,),
        in_specs=[pl.BlockSpec((tm, C), lambda i: (i, 0)),
                  pl.BlockSpec((1, C), lambda i: (0, 0)),
                  pl.BlockSpec((1, C), lambda i: (0, 0))],
        out_specs=pl.BlockSpec((tm, C), lambda i: (i, 0)),
        compiler_params=cp,
    )(y2, scale.reshape(1, C).astype(jnp.float32),
      shift.reshape(1, C).astype(jnp.float32))
    return out.reshape(N, H, W, C)


# ----------------------------------------------------------------------------
# UNetDown forward (public interface is NCHW, like PyTorch).
# ----------------------------------------------------------------------------
def unet_down_forward(x_nchw, params):
    # TODO(synk): fuse these two transposes into the adjacent kernels.
    x = jnp.transpose(x_nchw, (0, 2, 3, 1))                  # NCHW -> NHWC
    y1, st1 = pool_conv_bn_stats(x, params["w1"], params["b1"])
    _, H, W, _ = y1.shape
    sc1, sh1 = _bn_scale_shift(st1, H * W, params["g1"], params["beta1"])
    y2, st2 = bnrelu_conv_bn_stats(y1, sc1, sh1, params["w2"], params["b2"])
    sc2, sh2 = _bn_scale_shift(st2, H * W, params["g2"], params["beta2"])
    out = bn_relu_apply(y2, sc2, sh2, out_dtype=x_nchw.dtype)
    return jnp.transpose(out, (0, 3, 1, 2))                  # NHWC -> NCHW


def init_params(key, cin, cout):
    ks = jax.random.split(key, 6)
    return dict(
        w1=0.2 * jax.random.normal(ks[0], (3, 3, cin, cout), jnp.float32),
        b1=0.1 * jax.random.normal(ks[1], (cout,), jnp.float32),
        w2=0.2 * jax.random.normal(ks[2], (3, 3, cout, cout), jnp.float32),
        b2=0.1 * jax.random.normal(ks[3], (cout,), jnp.float32),
        g1=1.0 + 0.1 * jax.random.normal(ks[4], (cout,), jnp.float32),
        g2=1.0 + 0.1 * jax.random.normal(ks[5], (cout,), jnp.float32),
        beta1=jnp.linspace(-0.1, 0.1, cout).astype(jnp.float32),
        beta2=jnp.linspace(0.1, -0.1, cout).astype(jnp.float32),
    )


# ----------------------------------------------------------------------------
# Pure-JAX reference (correctness check only; full f32 precision).
# ----------------------------------------------------------------------------
def reference_forward(x_nchw, params):
    def conv(x, w, b):
        y = jax.lax.conv_general_dilated(
            x, w, (1, 1), "SAME",
            dimension_numbers=("NHWC", "HWIO", "NHWC"),
            precision=jax.lax.Precision.HIGHEST)
        return y + b

    def bnr(x, g, beta):
        mean = jnp.mean(x, axis=(0, 1, 2), keepdims=True)
        var = jnp.mean((x - mean) ** 2, axis=(0, 1, 2), keepdims=True)
        return jnp.maximum((x - mean) * jax.lax.rsqrt(var + BN_EPS) * g + beta, 0.0)

    x = jnp.transpose(x_nchw, (0, 2, 3, 1))
    N, H, W, C = x.shape
    x = jnp.max(x.reshape(N, H // 2, 2, W // 2, 2, C), axis=(2, 4))
    x = bnr(conv(x, params["w1"], params["b1"]), params["g1"], params["beta1"])
    x = bnr(conv(x, params["w2"], params["b2"]), params["g2"], params["beta2"])
    return jnp.transpose(x, (0, 3, 1, 2))


if __name__ == "__main__":
    key = jax.random.PRNGKey(0)
    kx, kp = jax.random.split(key)

    in_channels, out_channels = 4, 8
    x = jax.random.normal(kx, (2, in_channels, 16, 16), jnp.float32)
    params = init_params(kp, in_channels, out_channels)

    fwd = jax.jit(unet_down_forward)
    out = jax.block_until_ready(fwd(x, params))
    ref = reference_forward(x, params)

    assert out.shape == (2, out_channels, 8, 8), out.shape
    max_err = float(jnp.max(jnp.abs(out - ref)))
    # kernel uses MXU-native bf16 operands with f32 accumulation and bf16
    # intermediates; reference is full-f32 HIGHEST precision -> loose tolerance.
    assert jnp.allclose(out, ref, atol=5e-2, rtol=5e-2), f"max abs err = {max_err}"
    print("KERNEL_OK")
</pallas_src>

<mosaic_0001>
module attributes {stable_mosaic.version = 11 : i64} {
  func.func @_pool_conv_kernel(%arg0: i32, %arg1: memref<1x8x2x8x8xf32, #tpu.memory_space<vmem>>, %arg2: memref<3x3x4x8xbf16, #tpu.memory_space<vmem>>, %arg3: memref<1x8xf32, #tpu.memory_space<vmem>>, %arg4: memref<1x8x8x8xbf16, #tpu.memory_space<vmem>>, %arg5: memref<1x2x8xf32, #tpu.memory_space<vmem>>, %arg6: memref<10x10x4xf32, #tpu.memory_space<vmem>>) attributes {dimension_semantics = [#tpu.dimension_semantics<parallel>], iteration_bounds = array<i64: 2>, scalar_prefetch = 0 : i64, scratch_operands = 1 : i64, tpu.core_type = #tpu.core_type<tc>, window_params = [{transform_indices = @transform_0, window_bounds = array<i64: 1, 8, 2, 8, 8>}, {pipeline_mode = #tpu.pipeline_mode<synchronous>, transform_indices = @transform_1, window_bounds = array<i64: 3, 3, 4, 8>}, {pipeline_mode = #tpu.pipeline_mode<synchronous>, transform_indices = @transform_2, window_bounds = array<i64: 1, 8>}, {transform_indices = @transform_3, window_bounds = array<i64: 1, 8, 8, 8>}, {transform_indices = @transform_4, window_bounds = array<i64: 1, 2, 8>}]} {
    %c0 = arith.constant 0 : index
    %c0_0 = arith.constant 0 : index
    %c0_1 = arith.constant 0 : index
    %c0_2 = arith.constant 0 : index
    %c0_3 = arith.constant 0 : index
    %0 = vector.load %arg1[%c0, %c0_0, %c0_1, %c0_2, %c0_3] : memref<1x8x2x8x8xf32, #tpu.memory_space<vmem>>, vector<1x8x2x8x8xf32>
    %1 = vector.shape_cast %0 : vector<1x8x2x8x8xf32> to vector<8x2x8x8xf32>
    %2 = vector.extract_strided_slice %1 {offsets = [0, 0, 0, 0], sizes = [8, 1, 8, 8], strides = [1, 1, 1, 1]} : vector<8x2x8x8xf32> to vector<8x1x8x8xf32>
    %3 = vector.shape_cast %2 : vector<8x1x8x8xf32> to vector<8x8x8xf32>
    %4 = vector.extract_strided_slice %1 {offsets = [0, 1, 0, 0], sizes = [8, 1, 8, 8], strides = [1, 1, 1, 1]} : vector<8x2x8x8xf32> to vector<8x1x8x8xf32>
    %5 = vector.shape_cast %4 : vector<8x1x8x8xf32> to vector<8x8x8xf32>
    %6 = arith.maximumf %3, %5 : vector<8x8x8xf32>
    %7 = vector.extract_strided_slice %6 {offsets = [0, 0, 0], sizes = [8, 8, 4], strides = [1, 1, 1]} : vector<8x8x8xf32> to vector<8x8x4xf32>
    %8 = vector.extract_strided_slice %6 {offsets = [0, 0, 4], sizes = [8, 8, 4], strides = [1, 1, 1]} : vector<8x8x8xf32> to vector<8x8x4xf32>
    %9 = arith.maximumf %7, %8 : vector<8x8x4xf32>
    %cst = arith.constant 0.000000e+00 : f32
    %10 = vector.broadcast %cst : f32 to vector<10x10x4xf32>
    %c0_4 = arith.constant 0 : index
    %c0_5 = arith.constant 0 : index
    %c0_6 = arith.constant 0 : index
    %11 = vector.load %arg6[%c0_4, %c0_5, %c0_6] : memref<10x10x4xf32, #tpu.memory_space<vmem>>, vector<10x10x4xf32>
    tpu.vector_store %arg6[%c0_4, %c0_5, %c0_6], %10 {strides = array<i32>} : memref<10x10x4xf32, #tpu.memory_space<vmem>>, vector<10x10x4xf32>,
    %c1 = arith.constant 1 : index
    %c1_7 = arith.constant 1 : index
    %c0_8 = arith.constant 0 : index
    %12 = vector.load %arg6[%c1, %c1_7, %c0_8] : memref<10x10x4xf32, #tpu.memory_space<vmem>>, vector<8x8x4xf32>
    tpu.vector_store %arg6[%c1, %c1_7, %c0_8], %9 {strides = array<i32>} : memref<10x10x4xf32, #tpu.memory_space<vmem>>, vector<8x8x4xf32>,
    %c0_9 = arith.constant 0 : index
    %c0_10 = arith.constant 0 : index
    %c0_11 = arith.constant 0 : index
    %c0_12 = arith.constant 0 : index
    %13 = vector.load %arg2[%c0_9, %c0_10, %c0_11, %c0_12] : memref<3x3x4x8xbf16, #tpu.memory_space<vmem>>, vector<3x3x4x8xbf16>
    %c0_13 = arith.constant 0 : index
    %c0_14 = arith.constant 0 : index
    %14 = vector.load %arg3[%c0_13, %c0_14] : memref<1x8xf32, #tpu.memory_space<vmem>>, vector<1x8xf32>
    %15 = vector.shape_cast %14 : vector<1x8xf32> to vector<1x8xf32>
    %16 = vector.broadcast %15 : vector<1x8xf32> to vector<64x8xf32>
    %c0_15 = arith.constant 0 : index
    %c0_16 = arith.constant 0 : index
    %c0_17 = arith.constant 0 : index
    %17 = vector.load %arg6[%c0_15, %c0_16, %c0_17] : memref<10x10x4xf32, #tpu.memory_space<vmem>>, vector<8x8x4xf32>
    %18 = vector.shape_cast %17 : vector<8x8x4xf32> to vector<64x4xf32>
    %19 = arith.truncf %18 : vector<64x4xf32> to vector<64x4xbf16>
    %20 = vector.extract_strided_slice %13 {offsets = [0, 0, 0, 0], sizes = [1, 1, 4, 8], strides = [1, 1, 1, 1]} : vector<3x3x4x8xbf16> to vector<1x1x4x8xbf16>
    %21 = vector.shape_cast %20 : vector<1x1x4x8xbf16> to vector<4x8xbf16>
    %cst_18 = arith.constant dense<0.000000e+00> : vector<64x8xf32>
    %22 = tpu.matmul %19, %21, %cst_18 {dimension_numbers = #tpu.dot_dimension_numbers<[1], [0], [0], [1], [0, 0, 1, 1], [], []>} : vector<64x4xbf16>, vector<4x8xbf16>, vector<64x8xf32> -> vector<64x8xf32>
    %23 = arith.addf %16, %22 : vector<64x8xf32>
    %c0_19 = arith.constant 0 : index
    %c1_20 = arith.constant 1 : index
    %c0_21 = arith.constant 0 : index
    %24 = vector.load %arg6[%c0_19, %c1_20, %c0_21] : memref<10x10x4xf32, #tpu.memory_space<vmem>>, vector<8x8x4xf32>
    %25 = vector.shape_cast %24 : vector<8x8x4xf32> to vector<64x4xf32>
    %26 = arith.truncf %25 : vector<64x4xf32> to vector<64x4xbf16>
    %27 = vector.extract_strided_slice %13 {offsets = [0, 1, 0, 0], sizes = [1, 1, 4, 8], strides = [1, 1, 1, 1]} : vector<3x3x4x8xbf16> to vector<1x1x4x8xbf16>
    %28 = vector.shape_cast %27 : vector<1x1x4x8xbf16> to vector<4x8xbf16>
    %cst_22 = arith.constant dense<0.000000e+00> : vector<64x8xf32>
    %29 = tpu.matmul %26, %28, %cst_22 {dimension_numbers = #tpu.dot_dimension_numbers<[1], [0], [0], [1], [0, 0, 1, 1], [], []>} : vector<64x4xbf16>, vector<4x8xbf16>, vector<64x8xf32> -> vector<64x8xf32>
    %30 = arith.addf %23, %29 : vector<64x8xf32>
    %c0_23 = arith.constant 0 : index
    %c2 = arith.constant 2 : index
    %c0_24 = arith.constant 0 : index
    %31 = vector.load %arg6[%c0_23, %c2, %c0_24] : memref<10x10x4xf32, #tpu.memory_space<vmem>>, vector<8x8x4xf32>
    %32 = vector.shape_cast %31 : vector<8x8x4xf32> to vector<64x4xf32>
    %33 = arith.truncf %32 : vector<64x4xf32> to vector<64x4xbf16>
    %34 = vector.extract_strided_slice %13 {offsets = [0, 2, 0, 0], sizes = [1, 1, 4, 8], strides = [1, 1, 1, 1]} : vector<3x3x4x8xbf16> to vector<1x1x4x8xbf16>
    %35 = vector.shape_cast %34 : vector<1x1x4x8xbf16> to vector<4x8xbf16>
    %cst_25 = arith.constant dense<0.000000e+00> : vector<64x8xf32>
    %36 = tpu.matmul %33, %35, %cst_25 {dimension_numbers = #tpu.dot_dimension_numbers<[1], [0], [0], [1], [0, 0, 1, 1], [], []>} : vector<64x4xbf16>, vector<4x8xbf16>, vector<64x8xf32> -> vector<64x8xf32>
    %37 = arith.addf %30, %36 : vector<64x8xf32>
    %c1_26 = arith.constant 1 : index
    %c0_27 = arith.constant 0 : index
    %c0_28 = arith.constant 0 : index
    %38 = vector.load %arg6[%c1_26, %c0_27, %c0_28] : memref<10x10x4xf32, #tpu.memory_space<vmem>>, vector<8x8x4xf32>
    %39 = vector.shape_cast %38 : vector<8x8x4xf32> to vector<64x4xf32>
    %40 = arith.truncf %39 : vector<64x4xf32> to vector<64x4xbf16>
    %41 = vector.extract_strided_slice %13 {offsets = [1, 0, 0, 0], sizes = [1, 1, 4, 8], strides = [1, 1, 1, 1]} : vector<3x3x4x8xbf16> to vector<1x1x4x8xbf16>
    %42 = vector.shape_cast %41 : vector<1x1x4x8xbf16> to vector<4x8xbf16>
    %cst_29 = arith.constant dense<0.000000e+00> : vector<64x8xf32>
    %43 = tpu.matmul %40, %42, %cst_29 {dimension_numbers = #tpu.dot_dimension_numbers<[1], [0], [0], [1], [0, 0, 1, 1], [], []>} : vector<64x4xbf16>, vector<4x8xbf16>, vector<64x8xf32> -> vector<64x8xf32>
    %44 = arith.addf %37, %43 : vector<64x8xf32>
    %c1_30 = arith.constant 1 : index
    %c1_31 = arith.constant 1 : index
    %c0_32 = arith.constant 0 : index
    %45 = vector.load %arg6[%c1_30, %c1_31, %c0_32] : memref<10x10x4xf32, #tpu.memory_space<vmem>>, vector<8x8x4xf32>
    %46 = vector.shape_cast %45 : vector<8x8x4xf32> to vector<64x4xf32>
    %47 = arith.truncf %46 : vector<64x4xf32> to vector<64x4xbf16>
    %48 = vector.extract_strided_slice %13 {offsets = [1, 1, 0, 0], sizes = [1, 1, 4, 8], strides = [1, 1, 1, 1]} : vector<3x3x4x8xbf16> to vector<1x1x4x8xbf16>
    %49 = vector.shape_cast %48 : vector<1x1x4x8xbf16> to vector<4x8xbf16>
    %cst_33 = arith.constant dense<0.000000e+00> : vector<64x8xf32>
    %50 = tpu.matmul %47, %49, %cst_33 {dimension_numbers = #tpu.dot_dimension_numbers<[1], [0], [0], [1], [0, 0, 1, 1], [], []>} : vector<64x4xbf16>, vector<4x8xbf16>, vector<64x8xf32> -> vector<64x8xf32>
    %51 = arith.addf %44, %50 : vector<64x8xf32>
    %c1_34 = arith.constant 1 : index
    %c2_35 = arith.constant 2 : index
    %c0_36 = arith.constant 0 : index
    %52 = vector.load %arg6[%c1_34, %c2_35, %c0_36] : memref<10x10x4xf32, #tpu.memory_space<vmem>>, vector<8x8x4xf32>
    %53 = vector.shape_cast %52 : vector<8x8x4xf32> to vector<64x4xf32>
    %54 = arith.truncf %53 : vector<64x4xf32> to vector<64x4xbf16>
    %55 = vector.extract_strided_slice %13 {offsets = [1, 2, 0, 0], sizes = [1, 1, 4, 8], strides = [1, 1, 1, 1]} : vector<3x3x4x8xbf16> to vector<1x1x4x8xbf16>
    %56 = vector.shape_cast %55 : vector<1x1x4x8xbf16> to vector<4x8xbf16>
    %cst_37 = arith.constant dense<0.000000e+00> : vector<64x8xf32>
    %57 = tpu.matmul %54, %56, %cst_37 {dimension_numbers = #tpu.dot_dimension_numbers<[1], [0], [0], [1], [0, 0, 1, 1], [], []>} : vector<64x4xbf16>, vector<4x8xbf16>, vector<64x8xf32> -> vector<64x8xf32>
    %58 = arith.addf %51, %57 : vector<64x8xf32>
    %c2_38 = arith.constant 2 : index
    %c0_39 = arith.constant 0 : index
    %c0_40 = arith.constant 0 : index
    %59 = vector.load %arg6[%c2_38, %c0_39, %c0_40] : memref<10x10x4xf32, #tpu.memory_space<vmem>>, vector<8x8x4xf32>
    %60 = vector.shape_cast %59 : vector<8x8x4xf32> to vector<64x4xf32>
    %61 = arith.truncf %60 : vector<64x4xf32> to vector<64x4xbf16>
    %62 = vector.extract_strided_slice %13 {offsets = [2, 0, 0, 0], sizes = [1, 1, 4, 8], strides = [1, 1, 1, 1]} : vector<3x3x4x8xbf16> to vector<1x1x4x8xbf16>
    %63 = vector.shape_cast %62 : vector<1x1x4x8xbf16> to vector<4x8xbf16>
    %cst_41 = arith.constant dense<0.000000e+00> : vector<64x8xf32>
    %64 = tpu.matmul %61, %63, %cst_41 {dimension_numbers = #tpu.dot_dimension_numbers<[1], [0], [0], [1], [0, 0, 1, 1], [], []>} : vector<64x4xbf16>, vector<4x8xbf16>, vector<64x8xf32> -> vector<64x8xf32>
    %65 = arith.addf %58, %64 : vector<64x8xf32>
    %c2_42 = arith.constant 2 : index
    %c1_43 = arith.constant 1 : index
    %c0_44 = arith.constant 0 : index
    %66 = vector.load %arg6[%c2_42, %c1_43, %c0_44] : memref<10x10x4xf32, #tpu.memory_space<vmem>>, vector<8x8x4xf32>
    %67 = vector.shape_cast %66 : vector<8x8x4xf32> to vector<64x4xf32>
    %68 = arith.truncf %67 : vector<64x4xf32> to vector<64x4xbf16>
    %69 = vector.extract_strided_slice %13 {offsets = [2, 1, 0, 0], sizes = [1, 1, 4, 8], strides = [1, 1, 1, 1]} : vector<3x3x4x8xbf16> to vector<1x1x4x8xbf16>
    %70 = vector.shape_cast %69 : vector<1x1x4x8xbf16> to vector<4x8xbf16>
    %cst_45 = arith.constant dense<0.000000e+00> : vector<64x8xf32>
    %71 = tpu.matmul %68, %70, %cst_45 {dimension_numbers = #tpu.dot_dimension_numbers<[1], [0], [0], [1], [0, 0, 1, 1], [], []>} : vector<64x4xbf16>, vector<4x8xbf16>, vector<64x8xf32> -> vector<64x8xf32>
    %72 = arith.addf %65, %71 : vector<64x8xf32>
    %c2_46 = arith.constant 2 : index
    %c2_47 = arith.constant 2 : index
    %c0_48 = arith.constant 0 : index
    %73 = vector.load %arg6[%c2_46, %c2_47, %c0_48] : memref<10x10x4xf32, #tpu.memory_space<vmem>>, vector<8x8x4xf32>
    %74 = vector.shape_cast %73 : vector<8x8x4xf32> to vector<64x4xf32>
    %75 = arith.truncf %74 : vector<64x4xf32> to vector<64x4xbf16>
    %76 = vector.extract_strided_slice %13 {offsets = [2, 2, 0, 0], sizes = [1, 1, 4, 8], strides = [1, 1, 1, 1]} : vector<3x3x4x8xbf16> to vector<1x1x4x8xbf16>
    %77 = vector.shape_cast %76 : vector<1x1x4x8xbf16> to vector<4x8xbf16>
    %cst_49 = arith.constant dense<0.000000e+00> : vector<64x8xf32>
    %78 = tpu.matmul %75, %77, %cst_49 {dimension_numbers = #tpu.dot_dimension_numbers<[1], [0], [0], [1], [0, 0, 1, 1], [], []>} : vector<64x4xbf16>, vector<4x8xbf16>, vector<64x8xf32> -> vector<64x8xf32>
    %79 = arith.addf %72, %78 : vector<64x8xf32>
    %80 = vector.shape_cast %79 : vector<64x8xf32> to vector<8x8x8xf32>
    %81 = arith.truncf %80 : vector<8x8x8xf32> to vector<8x8x8xbf16>
    %c0_50 = arith.constant 0 : index
    %c0_51 = arith.constant 0 : index
    %c0_52 = arith.constant 0 : index
    %c0_53 = arith.constant 0 : index
    %82 = vector.load %arg4[%c0_50, %c0_51, %c0_52, %c0_53] : memref<1x8x8x8xbf16, #tpu.memory_space<vmem>>, vector<1x8x8x8xbf16>
    %83 = vector.shape_cast %82 : vector<1x8x8x8xbf16> to vector<8x8x8xbf16>
    %84 = vector.shape_cast %81 : vector<8x8x8xbf16> to vector<1x8x8x8xbf16>
    tpu.vector_store %arg4[%c0_50, %c0_51, %c0_52, %c0_53], %84 {strides = array<i32>} : memref<1x8x8x8xbf16, #tpu.memory_space<vmem>>, vector<1x8x8x8xbf16>,
    %cst_54 = arith.constant dense<0.000000e+00> : vector<8xf32>
    %85 = vector.multi_reduction <add>, %79, %cst_54 [0] : vector<64x8xf32> to vector<8xf32>
    %86 = vector.shape_cast %85 : vector<8xf32> to vector<1x8xf32>
    %cst_55 = arith.constant 1.562500e-02 : f32
    %87 = vector.broadcast %cst_55 : f32 to vector<1x8xf32>
    %88 = arith.mulf %86, %87 : vector<1x8xf32>
    %89 = vector.broadcast %88 : vector<1x8xf32> to vector<64x8xf32>
    %90 = arith.subf %79, %89 : vector<64x8xf32>
    %91 = arith.mulf %90, %90 : vector<64x8xf32>
    %cst_56 = arith.constant dense<0.000000e+00> : vector<8xf32>
    %92 = vector.multi_reduction <add>, %91, %cst_56 [0] : vector<64x8xf32> to vector<8xf32>
    %93 = vector.shape_cast %92 : vector<8xf32> to vector<1x8xf32>
    %c0_57 = arith.constant 0 : index
    %c0_58 = arith.constant 0 : index
    %c0_59 = arith.constant 0 : index
    %94 = vector.load %arg5[%c0_57, %c0_58, %c0_59] : memref<1x2x8xf32, #tpu.memory_space<vmem>>, vector<1x1x8xf32>
    %95 = vector.shape_cast %94 : vector<1x1x8xf32> to vector<1x8xf32>
    %96 = vector.shape_cast %88 : vector<1x8xf32> to vector<1x1x8xf32>
    tpu.vector_store %arg5[%c0_57, %c0_58, %c0_59], %96 {strides = array<i32>} : memref<1x2x8xf32, #tpu.memory_space<vmem>>, vector<1x1x8xf32>,
    %c0_60 = arith.constant 0 : index
    %c1_61 = arith.constant 1 : index
    %c0_62 = arith.constant 0 : index
    %97 = vector.load %arg5[%c0_60, %c1_61, %c0_62] : memref<1x2x8xf32, #tpu.memory_space<vmem>>, vector<1x1x8xf32>
    %98 = vector.shape_cast %97 : vector<1x1x8xf32> to vector<1x8xf32>
    %99 = vector.shape_cast %93 : vector<1x8xf32> to vector<1x1x8xf32>
    tpu.vector_store %arg5[%c0_60, %c1_61, %c0_62], %99 {strides = array<i32>} : memref<1x2x8xf32, #tpu.memory_space<vmem>>, vector<1x1x8xf32>,
    return
  }
  func.func @transform_0(%arg0: i32) -> (i32, i32, i32, i32, i32) {
    %c0_i32 = arith.constant 0 : i32
    %c0_i32_0 = arith.constant 0 : i32
    %c0_i32_1 = arith.constant 0 : i32
    %c0_i32_2 = arith.constant 0 : i32
    %c0_i32_3 = arith.constant 0 : i32
    return %arg0, %c0_i32, %c0_i32_0, %c0_i32_1, %c0_i32_2 : i32, i32, i32, i32, i32
  }
  func.func @transform_1(%arg0: i32) -> (i32, i32, i32, i32) {
    %c0_i32 = arith.constant 0 : i32
    %c0_i32_0 = arith.constant 0 : i32
    %c0_i32_1 = arith.constant 0 : i32
    %c0_i32_2 = arith.constant 0 : i32
    %c0_i32_3 = arith.constant 0 : i32
    return %c0_i32, %c0_i32_0, %c0_i32_1, %c0_i32_2 : i32, i32, i32, i32
  }
  func.func @transform_2(%arg0: i32) -> (i32, i32) {
    %c0_i32 = arith.constant 0 : i32
    %c0_i32_0 = arith.constant 0 : i32
    %c0_i32_1 = arith.constant 0 : i32
    return %c0_i32, %c0_i32_0 : i32, i32
  }
  func.func @transform_3(%arg0: i32) -> (i32, i32, i32, i32) {
    %c0_i32 = arith.constant 0 : i32
    %c0_i32_0 = arith.constant 0 : i32
    %c0_i32_1 = arith.constant 0 : i32
    %c0_i32_2 = arith.constant 0 : i32
    return %arg0, %c0_i32, %c0_i32_0, %c0_i32_1 : i32, i32, i32, i32
  }
  func.func @transform_4(%arg0: i32) -> (i32, i32, i32) {
    %c0_i32 = arith.constant 0 : i32
    %c0_i32_0 = arith.constant 0 : i32
    %c0_i32_1 = arith.constant 0 : i32
    return %arg0, %c0_i32, %c0_i32_0 : i32, i32, i32
  }
}

module attributes {stable_mosaic.version = 11 : i64} {
  func.func @_bnrelu_conv_kernel(%arg0: i32, %arg1: memref<1x8x8x8xbf16, #tpu.memory_space<vmem>>, %arg2: memref<1x1x8xf32, #tpu.memory_space<vmem>>, %arg3: memref<1x1x8xf32, #tpu.memory_space<vmem>>, %arg4: memref<3x3x8x8xbf16, #tpu.memory_space<vmem>>, %arg5: memref<1x8xf32, #tpu.memory_space<vmem>>, %arg6: memref<1x8x8x8xbf16, #tpu.memory_space<vmem>>, %arg7: memref<1x2x8xf32, #tpu.memory_space<vmem>>, %arg8: memref<10x10x8xf32, #tpu.memory_space<vmem>>) attributes {dimension_semantics = [#tpu.dimension_semantics<parallel>], iteration_bounds = array<i64: 2>, scalar_prefetch = 0 : i64, scratch_operands = 1 : i64, tpu.core_type = #tpu.core_type<tc>, window_params = [{transform_indices = @transform_0, window_bounds = array<i64: 1, 8, 8, 8>}, {pipeline_mode = #tpu.pipeline_mode<synchronous>, transform_indices = @transform_1, window_bounds = array<i64: 1, 1, 8>}, {pipeline_mode = #tpu.pipeline_mode<synchronous>, transform_indices = @transform_2, window_bounds = array<i64: 1, 1, 8>}, {pipeline_mode = #tpu.pipeline_mode<synchronous>, transform_indices = @transform_3, window_bounds = array<i64: 3, 3, 8, 8>}, {pipeline_mode = #tpu.pipeline_mode<synchronous>, transform_indices = @transform_4, window_bounds = array<i64: 1, 8>}, {transform_indices = @transform_5, window_bounds = array<i64: 1, 8, 8, 8>}, {transform_indices = @transform_6, window_bounds = array<i64: 1, 2, 8>}]} {
    %c0 = arith.constant 0 : index
    %c0_0 = arith.constant 0 : index
    %c0_1 = arith.constant 0 : index
    %c0_2 = arith.constant 0 : index
    %0 = vector.load %arg1[%c0, %c0_0, %c0_1, %c0_2] : memref<1x8x8x8xbf16, #tpu.memory_space<vmem>>, vector<1x8x8x8xbf16>
    %1 = vector.shape_cast %0 : vector<1x8x8x8xbf16> to vector<8x8x8xbf16>
    %2 = arith.extf %1 : vector<8x8x8xbf16> to vector<8x8x8xf32>
    %c0_3 = arith.constant 0 : index
    %c0_4 = arith.constant 0 : index
    %c0_5 = arith.constant 0 : index
    %3 = vector.load %arg2[%c0_3, %c0_4, %c0_5] : memref<1x1x8xf32, #tpu.memory_space<vmem>>, vector<1x1x8xf32>
    %4 = vector.broadcast %3 : vector<1x1x8xf32> to vector<8x8x8xf32>
    %5 = arith.mulf %2, %4 : vector<8x8x8xf32>
    %c0_6 = arith.constant 0 : index
    %c0_7 = arith.constant 0 : index
    %c0_8 = arith.constant 0 : index
    %6 = vector.load %arg3[%c0_6, %c0_7, %c0_8] : memref<1x1x8xf32, #tpu.memory_space<vmem>>, vector<1x1x8xf32>
    %7 = vector.broadcast %6 : vector<1x1x8xf32> to vector<8x8x8xf32>
    %8 = arith.addf %5, %7 : vector<8x8x8xf32>
    %cst = arith.constant 0.000000e+00 : f32
    %9 = vector.broadcast %cst : f32 to vector<8x8x8xf32>
    %10 = arith.maximumf %8, %9 : vector<8x8x8xf32>
    %cst_9 = arith.constant 0.000000e+00 : f32
    %11 = vector.broadcast %cst_9 : f32 to vector<10x10x8xf32>
    %c0_10 = arith.constant 0 : index
    %c0_11 = arith.constant 0 : index
    %c0_12 = arith.constant 0 : index
    %12 = vector.load %arg8[%c0_10, %c0_11, %c0_12] : memref<10x10x8xf32, #tpu.memory_space<vmem>>, vector<10x10x8xf32>
    tpu.vector_store %arg8[%c0_10, %c0_11, %c0_12], %11 {strides = array<i32>} : memref<10x10x8xf32, #tpu.memory_space<vmem>>, vector<10x10x8xf32>,
    %c1 = arith.constant 1 : index
    %c1_13 = arith.constant 1 : index
    %c0_14 = arith.constant 0 : index
    %13 = vector.load %arg8[%c1, %c1_13, %c0_14] : memref<10x10x8xf32, #tpu.memory_space<vmem>>, vector<8x8x8xf32>
    tpu.vector_store %arg8[%c1, %c1_13, %c0_14], %10 {strides = array<i32>} : memref<10x10x8xf32, #tpu.memory_space<vmem>>, vector<8x8x8xf32>,
    %c0_15 = arith.constant 0 : index
    %c0_16 = arith.constant 0 : index
    %c0_17 = arith.constant 0 : index
    %c0_18 = arith.constant 0 : index
    %14 = vector.load %arg4[%c0_15, %c0_16, %c0_17, %c0_18] : memref<3x3x8x8xbf16, #tpu.memory_space<vmem>>, vector<3x3x8x8xbf16>
    %c0_19 = arith.constant 0 : index
    %c0_20 = arith.constant 0 : index
    %15 = vector.load %arg5[%c0_19, %c0_20] : memref<1x8xf32, #tpu.memory_space<vmem>>, vector<1x8xf32>
    %16 = vector.shape_cast %15 : vector<1x8xf32> to vector<1x8xf32>
    %17 = vector.broadcast %16 : vector<1x8xf32> to vector<64x8xf32>
    %c0_21 = arith.constant 0 : index
    %c0_22 = arith.constant 0 : index
    %c0_23 = arith.constant 0 : index
    %18 = vector.load %arg8[%c0_21, %c0_22, %c0_23] : memref<10x10x8xf32, #tpu.memory_space<vmem>>, vector<8x8x8xf32>
    %19 = vector.shape_cast %18 : vector<8x8x8xf32> to vector<64x8xf32>
    %20 = arith.truncf %19 : vector<64x8xf32> to vector<64x8xbf16>
    %21 = vector.extract_strided_slice %14 {offsets = [0, 0, 0, 0], sizes = [1, 1, 8, 8], strides = [1, 1, 1, 1]} : vector<3x3x8x8xbf16> to vector<1x1x8x8xbf16>
    %22 = vector.shape_cast %21 : vector<1x1x8x8xbf16> to vector<8x8xbf16>
    %cst_24 = arith.constant dense<0.000000e+00> : vector<64x8xf32>
    %23 = tpu.matmul %20, %22, %cst_24 {dimension_numbers = #tpu.dot_dimension_numbers<[1], [0], [0], [1], [0, 0, 1, 1], [], []>} : vector<64x8xbf16>, vector<8x8xbf16>, vector<64x8xf32> -> vector<64x8xf32>
    %24 = arith.addf %17, %23 : vector<64x8xf32>
    %c0_25 = arith.constant 0 : index
    %c1_26 = arith.constant 1 : index
    %c0_27 = arith.constant 0 : index
    %25 = vector.load %arg8[%c0_25, %c1_26, %c0_27] : memref<10x10x8xf32, #tpu.memory_space<vmem>>, vector<8x8x8xf32>
    %26 = vector.shape_cast %25 : vector<8x8x8xf32> to vector<64x8xf32>
    %27 = arith.truncf %26 : vector<64x8xf32> to vector<64x8xbf16>
    %28 = vector.extract_strided_slice %14 {offsets = [0, 1, 0, 0], sizes = [1, 1, 8, 8], strides = [1, 1, 1, 1]} : vector<3x3x8x8xbf16> to vector<1x1x8x8xbf16>
    %29 = vector.shape_cast %28 : vector<1x1x8x8xbf16> to vector<8x8xbf16>
    %cst_28 = arith.constant dense<0.000000e+00> : vector<64x8xf32>
    %30 = tpu.matmul %27, %29, %cst_28 {dimension_numbers = #tpu.dot_dimension_numbers<[1], [0], [0], [1], [0, 0, 1, 1], [], []>} : vector<64x8xbf16>, vector<8x8xbf16>, vector<64x8xf32> -> vector<64x8xf32>
    %31 = arith.addf %24, %30 : vector<64x8xf32>
    %c0_29 = arith.constant 0 : index
    %c2 = arith.constant 2 : index
    %c0_30 = arith.constant 0 : index
    %32 = vector.load %arg8[%c0_29, %c2, %c0_30] : memref<10x10x8xf32, #tpu.memory_space<vmem>>, vector<8x8x8xf32>
    %33 = vector.shape_cast %32 : vector<8x8x8xf32> to vector<64x8xf32>
    %34 = arith.truncf %33 : vector<64x8xf32> to vector<64x8xbf16>
    %35 = vector.extract_strided_slice %14 {offsets = [0, 2, 0, 0], sizes = [1, 1, 8, 8], strides = [1, 1, 1, 1]} : vector<3x3x8x8xbf16> to vector<1x1x8x8xbf16>
    %36 = vector.shape_cast %35 : vector<1x1x8x8xbf16> to vector<8x8xbf16>
    %cst_31 = arith.constant dense<0.000000e+00> : vector<64x8xf32>
    %37 = tpu.matmul %34, %36, %cst_31 {dimension_numbers = #tpu.dot_dimension_numbers<[1], [0], [0], [1], [0, 0, 1, 1], [], []>} : vector<64x8xbf16>, vector<8x8xbf16>, vector<64x8xf32> -> vector<64x8xf32>
    %38 = arith.addf %31, %37 : vector<64x8xf32>
    %c1_32 = arith.constant 1 : index
    %c0_33 = arith.constant 0 : index
    %c0_34 = arith.constant 0 : index
    %39 = vector.load %arg8[%c1_32, %c0_33, %c0_34] : memref<10x10x8xf32, #tpu.memory_space<vmem>>, vector<8x8x8xf32>
    %40 = vector.shape_cast %39 : vector<8x8x8xf32> to vector<64x8xf32>
    %41 = arith.truncf %40 : vector<64x8xf32> to vector<64x8xbf16>
    %42 = vector.extract_strided_slice %14 {offsets = [1, 0, 0, 0], sizes = [1, 1, 8, 8], strides = [1, 1, 1, 1]} : vector<3x3x8x8xbf16> to vector<1x1x8x8xbf16>
    %43 = vector.shape_cast %42 : vector<1x1x8x8xbf16> to vector<8x8xbf16>
    %cst_35 = arith.constant dense<0.000000e+00> : vector<64x8xf32>
    %44 = tpu.matmul %41, %43, %cst_35 {dimension_numbers = #tpu.dot_dimension_numbers<[1], [0], [0], [1], [0, 0, 1, 1], [], []>} : vector<64x8xbf16>, vector<8x8xbf16>, vector<64x8xf32> -> vector<64x8xf32>
    %45 = arith.addf %38, %44 : vector<64x8xf32>
    %c1_36 = arith.constant 1 : index
    %c1_37 = arith.constant 1 : index
    %c0_38 = arith.constant 0 : index
    %46 = vector.load %arg8[%c1_36, %c1_37, %c0_38] : memref<10x10x8xf32, #tpu.memory_space<vmem>>, vector<8x8x8xf32>
    %47 = vector.shape_cast %46 : vector<8x8x8xf32> to vector<64x8xf32>
    %48 = arith.truncf %47 : vector<64x8xf32> to vector<64x8xbf16>
    %49 = vector.extract_strided_slice %14 {offsets = [1, 1, 0, 0], sizes = [1, 1, 8, 8], strides = [1, 1, 1, 1]} : vector<3x3x8x8xbf16> to vector<1x1x8x8xbf16>
    %50 = vector.shape_cast %49 : vector<1x1x8x8xbf16> to vector<8x8xbf16>
    %cst_39 = arith.constant dense<0.000000e+00> : vector<64x8xf32>
    %51 = tpu.matmul %48, %50, %cst_39 {dimension_numbers = #tpu.dot_dimension_numbers<[1], [0], [0], [1], [0, 0, 1, 1], [], []>} : vector<64x8xbf16>, vector<8x8xbf16>, vector<64x8xf32> -> vector<64x8xf32>
    %52 = arith.addf %45, %51 : vector<64x8xf32>
    %c1_40 = arith.constant 1 : index
    %c2_41 = arith.constant 2 : index
    %c0_42 = arith.constant 0 : index
    %53 = vector.load %arg8[%c1_40, %c2_41, %c0_42] : memref<10x10x8xf32, #tpu.memory_space<vmem>>, vector<8x8x8xf32>
    %54 = vector.shape_cast %53 : vector<8x8x8xf32> to vector<64x8xf32>
    %55 = arith.truncf %54 : vector<64x8xf32> to vector<64x8xbf16>
    %56 = vector.extract_strided_slice %14 {offsets = [1, 2, 0, 0], sizes = [1, 1, 8, 8], strides = [1, 1, 1, 1]} : vector<3x3x8x8xbf16> to vector<1x1x8x8xbf16>
    %57 = vector.shape_cast %56 : vector<1x1x8x8xbf16> to vector<8x8xbf16>
    %cst_43 = arith.constant dense<0.000000e+00> : vector<64x8xf32>
    %58 = tpu.matmul %55, %57, %cst_43 {dimension_numbers = #tpu.dot_dimension_numbers<[1], [0], [0], [1], [0, 0, 1, 1], [], []>} : vector<64x8xbf16>, vector<8x8xbf16>, vector<64x8xf32> -> vector<64x8xf32>
    %59 = arith.addf %52, %58 : vector<64x8xf32>
    %c2_44 = arith.constant 2 : index
    %c0_45 = arith.constant 0 : index
    %c0_46 = arith.constant 0 : index
    %60 = vector.load %arg8[%c2_44, %c0_45, %c0_46] : memref<10x10x8xf32, #tpu.memory_space<vmem>>, vector<8x8x8xf32>
    %61 = vector.shape_cast %60 : vector<8x8x8xf32> to vector<64x8xf32>
    %62 = arith.truncf %61 : vector<64x8xf32> to vector<64x8xbf16>
    %63 = vector.extract_strided_slice %14 {offsets = [2, 0, 0, 0], sizes = [1, 1, 8, 8], strides = [1, 1, 1, 1]} : vector<3x3x8x8xbf16> to vector<1x1x8x8xbf16>
    %64 = vector.shape_cast %63 : vector<1x1x8x8xbf16> to vector<8x8xbf16>
    %cst_47 = arith.constant dense<0.000000e+00> : vector<64x8xf32>
    %65 = tpu.matmul %62, %64, %cst_47 {dimension_numbers = #tpu.dot_dimension_numbers<[1], [0], [0], [1], [0, 0, 1, 1], [], []>} : vector<64x8xbf16>, vector<8x8xbf16>, vector<64x8xf32> -> vector<64x8xf32>
    %66 = arith.addf %59, %65 : vector<64x8xf32>
    %c2_48 = arith.constant 2 : index
    %c1_49 = arith.constant 1 : index
    %c0_50 = arith.constant 0 : index
    %67 = vector.load %arg8[%c2_48, %c1_49, %c0_50] : memref<10x10x8xf32, #tpu.memory_space<vmem>>, vector<8x8x8xf32>
    %68 = vector.shape_cast %67 : vector<8x8x8xf32> to vector<64x8xf32>
    %69 = arith.truncf %68 : vector<64x8xf32> to vector<64x8xbf16>
    %70 = vector.extract_strided_slice %14 {offsets = [2, 1, 0, 0], sizes = [1, 1, 8, 8], strides = [1, 1, 1, 1]} : vector<3x3x8x8xbf16> to vector<1x1x8x8xbf16>
    %71 = vector.shape_cast %70 : vector<1x1x8x8xbf16> to vector<8x8xbf16>
    %cst_51 = arith.constant dense<0.000000e+00> : vector<64x8xf32>
    %72 = tpu.matmul %69, %71, %cst_51 {dimension_numbers = #tpu.dot_dimension_numbers<[1], [0], [0], [1], [0, 0, 1, 1], [], []>} : vector<64x8xbf16>, vector<8x8xbf16>, vector<64x8xf32> -> vector<64x8xf32>
    %73 = arith.addf %66, %72 : vector<64x8xf32>
    %c2_52 = arith.constant 2 : index
    %c2_53 = arith.constant 2 : index
    %c0_54 = arith.constant 0 : index
    %74 = vector.load %arg8[%c2_52, %c2_53, %c0_54] : memref<10x10x8xf32, #tpu.memory_space<vmem>>, vector<8x8x8xf32>
    %75 = vector.shape_cast %74 : vector<8x8x8xf32> to vector<64x8xf32>
    %76 = arith.truncf %75 : vector<64x8xf32> to vector<64x8xbf16>
    %77 = vector.extract_strided_slice %14 {offsets = [2, 2, 0, 0], sizes = [1, 1, 8, 8], strides = [1, 1, 1, 1]} : vector<3x3x8x8xbf16> to vector<1x1x8x8xbf16>
    %78 = vector.shape_cast %77 : vector<1x1x8x8xbf16> to vector<8x8xbf16>
    %cst_55 = arith.constant dense<0.000000e+00> : vector<64x8xf32>
    %79 = tpu.matmul %76, %78, %cst_55 {dimension_numbers = #tpu.dot_dimension_numbers<[1], [0], [0], [1], [0, 0, 1, 1], [], []>} : vector<64x8xbf16>, vector<8x8xbf16>, vector<64x8xf32> -> vector<64x8xf32>
    %80 = arith.addf %73, %79 : vector<64x8xf32>
    %81 = vector.shape_cast %80 : vector<64x8xf32> to vector<8x8x8xf32>
    %82 = arith.truncf %81 : vector<8x8x8xf32> to vector<8x8x8xbf16>
    %c0_56 = arith.constant 0 : index
    %c0_57 = arith.constant 0 : index
    %c0_58 = arith.constant 0 : index
    %c0_59 = arith.constant 0 : index
    %83 = vector.load %arg6[%c0_56, %c0_57, %c0_58, %c0_59] : memref<1x8x8x8xbf16, #tpu.memory_space<vmem>>, vector<1x8x8x8xbf16>
    %84 = vector.shape_cast %83 : vector<1x8x8x8xbf16> to vector<8x8x8xbf16>
    %85 = vector.shape_cast %82 : vector<8x8x8xbf16> to vector<1x8x8x8xbf16>
    tpu.vector_store %arg6[%c0_56, %c0_57, %c0_58, %c0_59], %85 {strides = array<i32>} : memref<1x8x8x8xbf16, #tpu.memory_space<vmem>>, vector<1x8x8x8xbf16>,
    %cst_60 = arith.constant dense<0.000000e+00> : vector<8xf32>
    %86 = vector.multi_reduction <add>, %80, %cst_60 [0] : vector<64x8xf32> to vector<8xf32>
    %87 = vector.shape_cast %86 : vector<8xf32> to vector<1x8xf32>
    %cst_61 = arith.constant 1.562500e-02 : f32
    %88 = vector.broadcast %cst_61 : f32 to vector<1x8xf32>
    %89 = arith.mulf %87, %88 : vector<1x8xf32>
    %90 = vector.broadcast %89 : vector<1x8xf32> to vector<64x8xf32>
    %91 = arith.subf %80, %90 : vector<64x8xf32>
    %92 = arith.mulf %91, %91 : vector<64x8xf32>
    %cst_62 = arith.constant dense<0.000000e+00> : vector<8xf32>
    %93 = vector.multi_reduction <add>, %92, %cst_62 [0] : vector<64x8xf32> to vector<8xf32>
    %94 = vector.shape_cast %93 : vector<8xf32> to vector<1x8xf32>
    %c0_63 = arith.constant 0 : index
    %c0_64 = arith.constant 0 : index
    %c0_65 = arith.constant 0 : index
    %95 = vector.load %arg7[%c0_63, %c0_64, %c0_65] : memref<1x2x8xf32, #tpu.memory_space<vmem>>, vector<1x1x8xf32>
    %96 = vector.shape_cast %95 : vector<1x1x8xf32> to vector<1x8xf32>
    %97 = vector.shape_cast %89 : vector<1x8xf32> to vector<1x1x8xf32>
    tpu.vector_store %arg7[%c0_63, %c0_64, %c0_65], %97 {strides = array<i32>} : memref<1x2x8xf32, #tpu.memory_space<vmem>>, vector<1x1x8xf32>,
    %c0_66 = arith.constant 0 : index
    %c1_67 = arith.constant 1 : index
    %c0_68 = arith.constant 0 : index
    %98 = vector.load %arg7[%c0_66, %c1_67, %c0_68] : memref<1x2x8xf32, #tpu.memory_space<vmem>>, vector<1x1x8xf32>
    %99 = vector.shape_cast %98 : vector<1x1x8xf32> to vector<1x8xf32>
    %100 = vector.shape_cast %94 : vector<1x8xf32> to vector<1x1x8xf32>
    tpu.vector_store %arg7[%c0_66, %c1_67, %c0_68], %100 {strides = array<i32>} : memref<1x2x8xf32, #tpu.memory_space<vmem>>, vector<1x1x8xf32>,
    return
  }
  func.func @transform_0(%arg0: i32) -> (i32, i32, i32, i32) {
    %c0_i32 = arith.constant 0 : i32
    %c0_i32_0 = arith.constant 0 : i32
    %c0_i32_1 = arith.constant 0 : i32
    %c0_i32_2 = arith.constant 0 : i32
    return %arg0, %c0_i32, %c0_i32_0, %c0_i32_1 : i32, i32, i32, i32
  }
  func.func @transform_1(%arg0: i32) -> (i32, i32, i32) {
    %c0_i32 = arith.constant 0 : i32
    %c0_i32_0 = arith.constant 0 : i32
    %c0_i32_1 = arith.constant 0 : i32
    %c0_i32_2 = arith.constant 0 : i32
    return %c0_i32, %c0_i32_0, %c0_i32_1 : i32, i32, i32
  }
  func.func @transform_2(%arg0: i32) -> (i32, i32, i32) {
    %c0_i32 = arith.constant 0 : i32
    %c0_i32_0 = arith.constant 0 : i32
    %c0_i32_1 = arith.constant 0 : i32
    %c0_i32_2 = arith.constant 0 : i32
    return %c0_i32, %c0_i32_0, %c0_i32_1 : i32, i32, i32
  }
  func.func @transform_3(%arg0: i32) -> (i32, i32, i32, i32) {
    %c0_i32 = arith.constant 0 : i32
    %c0_i32_0 = arith.constant 0 : i32
    %c0_i32_1 = arith.constant 0 : i32
    %c0_i32_2 = arith.constant 0 : i32
    %c0_i32_3 = arith.constant 0 : i32
    return %c0_i32, %c0_i32_0, %c0_i32_1, %c0_i32_2 : i32, i32, i32, i32
  }
  func.func @transform_4(%arg0: i32) -> (i32, i32) {
    %c0_i32 = arith.constant 0 : i32
    %c0_i32_0 = arith.constant 0 : i32
    %c0_i32_1 = arith.constant 0 : i32
    return %c0_i32, %c0_i32_0 : i32, i32
  }
  func.func @transform_5(%arg0: i32) -> (i32, i32, i32, i32) {
    %c0_i32 = arith.constant 0 : i32
    %c0_i32_0 = arith.constant 0 : i32
    %c0_i32_1 = arith.constant 0 : i32
    %c0_i32_2 = arith.constant 0 : i32
    return %arg0, %c0_i32, %c0_i32_0, %c0_i32_1 : i32, i32, i32, i32
  }
  func.func @transform_6(%arg0: i32) -> (i32, i32, i32) {
    %c0_i32 = arith.constant 0 : i32
    %c0_i32_0 = arith.constant 0 : i32
    %c0_i32_1 = arith.constant 0 : i32
    return %arg0, %c0_i32, %c0_i32_0 : i32, i32, i32
  }
}

module attributes {stable_mosaic.version = 11 : i64} {
  func.func @_affine_relu_kernel(%arg0: i32, %arg1: memref<8x128xbf16, #tpu.memory_space<vmem>>, %arg2: memref<1x128xf32, #tpu.memory_space<vmem>>, %arg3: memref<1x128xf32, #tpu.memory_space<vmem>>, %arg4: memref<8x128xf32, #tpu.memory_space<vmem>>) attributes {dimension_semantics = [#tpu.dimension_semantics<parallel>], iteration_bounds = array<i64: 1>, scalar_prefetch = 0 : i64, scratch_operands = 0 : i64, tpu.core_type = #tpu.core_type<tc>, window_params = [{transform_indices = @transform_0, window_bounds = array<i64: 8, 128>}, {pipeline_mode = #tpu.pipeline_mode<synchronous>, transform_indices = @transform_1, window_bounds = array<i64: 1, 128>}, {pipeline_mode = #tpu.pipeline_mode<synchronous>, transform_indices = @transform_2, window_bounds = array<i64: 1, 128>}, {transform_indices = @transform_3, window_bounds = array<i64: 8, 128>}]} {
    %c0 = arith.constant 0 : index
    %c0_0 = arith.constant 0 : index
    %0 = vector.load %arg1[%c0, %c0_0] : memref<8x128xbf16, #tpu.memory_space<vmem>>, vector<8x128xbf16>
    %1 = arith.extf %0 : vector<8x128xbf16> to vector<8x128xf32>
    %c0_1 = arith.constant 0 : index
    %c0_2 = arith.constant 0 : index
    %2 = vector.load %arg2[%c0_1, %c0_2] : memref<1x128xf32, #tpu.memory_space<vmem>>, vector<1x128xf32>
    %3 = vector.broadcast %2 : vector<1x128xf32> to vector<8x128xf32>
    %4 = arith.mulf %1, %3 : vector<8x128xf32>
    %c0_3 = arith.constant 0 : index
    %c0_4 = arith.constant 0 : index
    %5 = vector.load %arg3[%c0_3, %c0_4] : memref<1x128xf32, #tpu.memory_space<vmem>>, vector<1x128xf32>
    %6 = vector.broadcast %5 : vector<1x128xf32> to vector<8x128xf32>
    %7 = arith.addf %4, %6 : vector<8x128xf32>
    %cst = arith.constant 0.000000e+00 : f32
    %8 = vector.broadcast %cst : f32 to vector<8x128xf32>
    %9 = arith.maximumf %7, %8 : vector<8x128xf32>
    %c0_5 = arith.constant 0 : index
    %c0_6 = arith.constant 0 : index
    %10 = vector.load %arg4[%c0_5, %c0_6] : memref<8x128xf32, #tpu.memory_space<vmem>>, vector<8x128xf32>
    tpu.vector_store %arg4[%c0_5, %c0_6], %9 {strides = array<i32>} : memref<8x128xf32, #tpu.memory_space<vmem>>, vector<8x128xf32>,
    return
  }
  func.func @transform_0(%arg0: i32) -> (i32, i32) {
    %c0_i32 = arith.constant 0 : i32
    %c0_i32_0 = arith.constant 0 : i32
    return %arg0, %c0_i32 : i32, i32
  }
  func.func @transform_1(%arg0: i32) -> (i32, i32) {
    %c0_i32 = arith.constant 0 : i32
    %c0_i32_0 = arith.constant 0 : i32
    %c0_i32_1 = arith.constant 0 : i32
    return %c0_i32, %c0_i32_0 : i32, i32
  }
  func.func @transform_2(%arg0: i32) -> (i32, i32) {
    %c0_i32 = arith.constant 0 : i32
    %c0_i32_0 = arith.constant 0 : i32
    %c0_i32_1 = arith.constant 0 : i32
    return %c0_i32, %c0_i32_0 : i32, i32
  }
  func.func @transform_3(%arg0: i32) -> (i32, i32) {
    %c0_i32 = arith.constant 0 : i32
    %c0_i32_0 = arith.constant 0 : i32
    return %arg0, %c0_i32 : i32, i32
  }
}

</mosaic_0001>

<llo_original>
// kernel: tile.13
$region0: #{tile.13}
  #allocation0 [shape = 's32[1]{0}', space=sflag, size = 0x4, scoped, tag = 'scoped memory for tile.13']
  %s0 = inlined_call_operand.vmem [shape: f32[8], index: 0, kind: input, shape index: {}]
  %s1 = inlined_call_operand.vmem [shape: f32[16,8], index: 1, kind: output, shape index: {}]
  // Predicated region
  $region2: #{tile.13} parent=0 // pred_check
    _
  $region3: #{tile.13} parent=0 // pred_check_branch
    %3 = sbr.rel (0) target = $region5
  $region4: #{tile.13} parent=0 // pred_region
    _
  $region5: #{tile.13} parent=0 // pred_fallthru
    _
  %v4 = vld [vmem:[%s0] ss:$0 sm:$0xff]
  %5 = vst [vmem:[%s1] sm:$0xff] %v4
  %s6 = scalar_lea.vmem %s1, 8
  %7 = vst [vmem:[%s6] sm:$0xff] %v4

// kernel: tile.14
$region0: #{tile.14}
  %s0 = inlined_call_operand.vmem [shape: f32[16,8], index: 0, kind: input, shape index: {}]
  %s1 = inlined_call_operand.vmem [shape: f32[1,128], index: 1, kind: output, shape index: {}]
  $region1: #{tile.14} parent=0
    #allocation0 [shape = 'u8[4096]{0}', space=vmem, size = 0x1000, scoped, tag = 'scoped mem for output reshape']
    %v2 = vld [vmem:[%s0] sm:$0x1]
    %vm3 = vcmask 64512
    %4 = vst.msk [vmem:[#allocation0] sm:$0x1] %vm3, %v2
    %s5 = scalar_lea.vmem %s0, 15
    %v6 = vld [vmem:[%s5] sm:$0x1]
    %7 = vrot.lane.b32.xlu0 %v6, 120
    %v8 = vpop.permute.xlu0 %7
    %vm9 = vcmask 1048512
    %10 = vst.msk [vmem:[#allocation0] sm:$0x1] %vm9, %v8
    %s11 = scalar_lea.vmem %s0, 14
    %v12 = vld [vmem:[%s11] sm:$0x1]
    %13 = vrot.lane.b32.xlu0 %v12, 112
    %v14 = vpop.permute.xlu0 %13
    %vm15 = vcmask 982912
    %16 = vst.msk [vmem:[#allocation0] sm:$0x1] %vm15, %v14
    %s17 = scalar_lea.vmem %s0, 13
    %v18 = vld [vmem:[%s17] sm:$0x1]
    %19 = vrot.lane.b32.xlu0 %v18, 104
    %v20 = vpop.permute.xlu0 %19
    %vm21 = vcmask 917312
    %22 = vst.msk [vmem:[#allocation0] sm:$0x1] %vm21, %v20
    %s23 = scalar_lea.vmem %s0, 12
    %v24 = vld [vmem:[%s23] sm:$0x1]
    %25 = vrot.lane.b32.xlu0 %v24, 96
    %v26 = vpop.permute.xlu0 %25
    %vm27 = vcmask 851712
    %28 = vst.msk [vmem:[#allocation0] sm:$0x1] %vm27, %v26
    %s29 = scalar_lea.vmem %s0, 11
    %v30 = vld [vmem:[%s29] sm:$0x1]
    %31 = vrot.lane.b32.xlu0 %v30, 88
    %v32 = vpop.permute.xlu0 %31
    %vm33 = vcmask 786112
    %34 = vst.msk [vmem:[#allocation0] sm:$0x1] %vm33, %v32
    %s35 = scalar_lea.vmem %s0, 10
    %v36 = vld [vmem:[%s35] sm:$0x1]
    %37 = vrot.lane.b32.xlu0 %v36, 80
    %v38 = vpop.permute.xlu0 %37
    %vm39 = vcmask 720512
    %40 = vst.msk [vmem:[#allocation0] sm:$0x1] %vm39, %v38
    %s41 = scalar_lea.vmem %s0, 9
    %v42 = vld [vmem:[%s41] sm:$0x1]
    %43 = vrot.lane.b32.xlu0 %v42, 72
    %v44 = vpop.permute.xlu0 %43
    %vm45 = vcmask 654912
    %46 = vst.msk [vmem:[#allocation0] sm:$0x1] %vm45, %v44
    %s47 = scalar_lea.vmem %s0, 8
    %v48 = vld [vmem:[%s47] sm:$0x1]
    %49 = vrot.lane.b32.xlu0 %v48, 64
    %v50 = vpop.permute.xlu0 %49
    %vm51 = vcmask 589312
    %52 = vst.msk [vmem:[#allocation0] sm:$0x1] %vm51, %v50
    %s53 = scalar_lea.vmem %s0, 7
    %v54 = vld [vmem:[%s53] sm:$0x1]
    %55 = vrot.lane.b32.xlu0 %v54, 56
    %v56 = vpop.permute.xlu0 %55
    %vm57 = vcmask 523712
    %58 = vst.msk [vmem:[#allocation0] sm:$0x1] %vm57, %v56
    %s59 = scalar_lea.vmem %s0, 6
    %v60 = vld [vmem:[%s59] sm:$0x1]
    %61 = vrot.lane.b32.xlu0 %v60, 48
    %v62 = vpop.permute.xlu0 %61
    %vm63 = vcmask 458112
    %64 = vst.msk [vmem:[#allocation0] sm:$0x1] %vm63, %v62
    %s65 = scalar_lea.vmem %s0, 5
    %v66 = vld [vmem:[%s65] sm:$0x1]
    %67 = vrot.lane.b32.xlu0 %v66, 40
    %v68 = vpop.permute.xlu0 %67
    %vm69 = vcmask 392512
    %70 = vst.msk [vmem:[#allocation0] sm:$0x1] %vm69, %v68
    %s71 = scalar_lea.vmem %s0, 4
    %v72 = vld [vmem:[%s71] sm:$0x1]
    %73 = vrot.lane.b32.xlu0 %v72, 32
    %v74 = vpop.permute.xlu0 %73
    %vm75 = vcmask 326912
    %76 = vst.msk [vmem:[#allocation0] sm:$0x1] %vm75, %v74
    %s77 = scalar_lea.vmem %s0, 3
    %v78 = vld [vmem:[%s77] sm:$0x1]
    %79 = vrot.lane.b32.xlu0 %v78, 24
    %v80 = vpop.permute.xlu0 %79
    %vm81 = vcmask 261312
    %82 = vst.msk [vmem:[#allocation0] sm:$0x1] %vm81, %v80
    %s83 = scalar_lea.vmem %s0, 2
    %v84 = vld [vmem:[%s83] sm:$0x1]
    %85 = vrot.lane.b32.xlu0 %v84, 16
    %v86 = vpop.permute.xlu0 %85
    %vm87 = vcmask 195712
    %88 = vst.msk [vmem:[#allocation0] sm:$0x1] %vm87, %v86
    %s89 = scalar_lea.vmem %s0, 1
    %v90 = vld [vmem:[%s89] sm:$0x1]
    %91 = vrot.lane.b32.xlu0 %v90, 8
    %v92 = vpop.permute.xlu0 %91
    %vm93 = vcmask 130112
    %94 = vst.msk [vmem:[#allocation0] sm:$0x1] %vm93, %v92
    %s96 = sshllo.u32 0, 1
    %v98 = vld [vmem:[#allocation0] sm:%s96]
    %s99 = sshllo.u32 0, 1
    %100 = vst [vmem:[%s1] sm:%s99] %v98

// kernel: unet_down_forward.5
$region0: #{unet_down_forward.5}
  #allocation0 [shape = 'u32[]', space=smem, size = 0x4, offset = 0x4, fixed_abs, tag = 'smem constant byte address 0x4 - core index']
  #allocation1 [shape = 'u32[144,128]{1,0:T(1,128)}', space=vmem, size = 0x12000, scoped, tag = 'internal scratch']
  %s0 = inlined_call_operand.vmem [shape: bf16[8,128], index: 0, kind: input, shape index: {}]
  %s1 = inlined_call_operand.vmem [shape: f32[1,128], index: 1, kind: input, shape index: {}]
  %s2 = inlined_call_operand.vmem [shape: f32[1,128], index: 2, kind: input, shape index: {}]
  %s3 = inlined_call_operand.vmem [shape: f32[8,128], index: 3, kind: output, shape index: {}]
  %s4 = sld [smem:[#allocation0]]
  $region22: #{unet_down_forward.5} parent=0
    _
  %s6 = ssub.s32 1, %s4
  %s7 = scalar_select 0, %s6, %s4
  // Predicated region
  $region2: #{unet_down_forward.5} parent=0 // pred_check
    _
  $region3: #{unet_down_forward.5} parent=0 // pred_check_branch
    %9 = sbr.rel (0) target = $region5
  $region4: #{unet_down_forward.5} parent=0 // pred_region
    _
  $region5: #{unet_down_forward.5} parent=0 // pred_fallthru
    _
  // Predicated region
  $region6: #{unet_down_forward.5} parent=0 // pred_check
    _
  $region7: #{unet_down_forward.5} parent=0 // pred_check_branch
    %11 = sbr.rel (0) target = $region9
  $region8: #{unet_down_forward.5} parent=0 // pred_region
    _
  $region9: #{unet_down_forward.5} parent=0 // pred_fallthru
    _
  // Predicated region
  $region10: #{unet_down_forward.5} parent=0 // pred_check
    _
  $region11: #{unet_down_forward.5} parent=0 // pred_check_branch
    %13 = sbr.rel (0) target = $region13
  $region12: #{unet_down_forward.5} parent=0 // pred_region
    _
  $region13: #{unet_down_forward.5} parent=0 // pred_fallthru
    _
  %v14 = vld [vmem:[%s0] sm:$0xf]
  %v15 = vunpack.c.l.bf16 %v14
  %v16 = vld [vmem:[%s1] sm:$0x1]
  %v18 = vlaneseq
  %v19 = vshrl.u32 %v18, 7
  %v20 = vsub.s32 0, %v19
  %v21 = vrot.slane %v16, %v20
  %v23 = vmul.f32 %v15, %v21
  %v24 = vld [vmem:[%s2] sm:$0x1]
  %v26 = vlaneseq
  %v27 = vshrl.u32 %v26, 7
  %v28 = vsub.s32 0, %v27
  %v29 = vrot.slane %v24, %v28
  %v31 = vadd.f32 %v23, %v29
  %v32 = vmax.f32 %v31, 0.0
  %33 = vst [vmem:[%s3] sm:$0xff] %v32
  // Predicated region
  $region14: #{unet_down_forward.5} parent=0 // pred_check
    _
  $region15: #{unet_down_forward.5} parent=0 // pred_check_branch
    %35 = sbr.rel (0) target = $region17
  $region16: #{unet_down_forward.5} parent=0 // pred_region
    _
  $region17: #{unet_down_forward.5} parent=0 // pred_fallthru
    _
  // Predicated region
  $region18: #{unet_down_forward.5} parent=0 // pred_check
    _
  $region19: #{unet_down_forward.5} parent=0 // pred_check_branch
    %37 = sbr.rel (0) target = $region21
  $region20: #{unet_down_forward.5} parent=0 // pred_region
    _
  $region21: #{unet_down_forward.5} parent=0 // pred_fallthru
    _

// kernel: unet_down_forward.3
$region0: #{unet_down_forward.3}
  #allocation0 [shape = 'u32[]', space=smem, size = 0x4, offset = 0x4, fixed_abs, tag = 'smem constant byte address 0x4 - core index']
  #allocation1 [shape = 'u32[144,128]{1,0:T(1,128)}', space=vmem, size = 0x12000, scoped, tag = 'internal scratch']
  #allocation2 [shape = 'f32[10,10,4]{2,1,0:T(8,128)}', space=vmem, size = 0x14000, scoped, tag = 'scratch operand']
  %s0 = inlined_call_operand.vmem [shape: f32[2,8,2,8,8], index: 0, kind: input, shape index: {}]
  %s1 = inlined_call_operand.vmem [shape: bf16[3,3,4,8], index: 1, kind: input, shape index: {}]
  %s2 = inlined_call_operand.vmem [shape: f32[1,8], index: 2, kind: input, shape index: {}]
  %s3 = inlined_call_operand.vmem [shape: bf16[2,8,8,8], index: 3, kind: output, shape index: {0}]
  %s4 = inlined_call_operand.vmem [shape: f32[2,2,8], index: 4, kind: output, shape index: {1}]
  %5 = xla_tuple %s3, %s4
  %s6 = sld [smem:[#allocation0]]
  $region53: #{unet_down_forward.3} parent=0
    _
  %s8 = ssub.s32 1, %s6
  %s9 = scalar_select 0, %s8, %s6
  loop: start=0, step=1, limit=4
  $region2: #{unet_down_forward.3} parent=0 // loop_pre_header
    _
  $region3: #{unet_down_forward.3} parent=0 // loop_header
    %s11 = sphi 0, %s15
    %p12 = scmp.ge.s32.totalorder %s11, 4
    %s21 = sphi 0, %s23
    %s24 = sphi 0, %s21
    %s25 = sphi 0, %s24
    %s41 = sphi 0, %s25
    %s45 = sphi 0, %s45
    %s47 = sphi 0, %s45
    %s48 = sphi 0, %s47
    %s62 = sphi 0, %s48
    %s66 = sphi 0, %s66
    %s68 = sphi 0, %s66
    %s69 = sphi 0, %s68
    %s83 = sphi 0, %s69
    %s89 = sphi 0, %s91
    %s92 = sphi 0, %s89
    %s93 = sphi 0, %s92
    %s109 = sphi 0, %s93
    %s115 = sphi 0, %s117
    %s118 = sphi 0, %s115
    %s119 = sphi 0, %s118
    %s135 = sphi 0, %s119
  $region4: #{unet_down_forward.3} parent=0 // loop_header_branch
    %14 = sbr.rel (%p12) target = $region8
  $region5: #{unet_down_forward.3} parent=0 // loop_body
    %s16 = ssub.s32 %s11, 1
    %s17 = ssub.s32 %s11, 2
    %s18 = sadd.s32 %s11, 1
    %s19 = ssub.s32 %s11, %s18
    %p20 = scmp.eq.s32.totalorder %s19, 0
    %s22 = sadd.s32 %s21, 1
    %s23 = scalar_select %p20, %s21, %s22
    %p26 = pneg %p20
    %p27 = scmp.eq.s32.totalorder %s11, 1
    %p28 = por %p26, %p27
    %p29 = scmp.ne.s32.totalorder %s21, %s24
    %p30 = scmp.eq.s32.totalorder %s11, 0
    %p31 = por %p29, %p30
    %p32 = scmp.ne.s32.totalorder %s21, %s24
    %p33 = scmp.eq.s32.totalorder %s16, 1
    %p34 = por %p32, %p33
    %p35 = scmp.ne.s32.totalorder %s24, %s25
    %p36 = scmp.eq.s32.totalorder %s16, 0
    %p37 = por %p35, %p36
    %p38 = scmp.ne.s32.totalorder %s24, %s25
    %p39 = scmp.eq.s32.totalorder %s17, 1
    %p40 = por %p38, %p39
    %p42 = scmp.ne.s32.totalorder %s25, %s41
    %p43 = scmp.eq.s32.totalorder %s17, 0
    %p44 = por %p42, %p43
    %s46 = sadd.s32 %s45, 1
    %p49 = scmp.eq.s32.totalorder %s11, 1
    %p50 = scmp.ne.s32.totalorder %s45, %s47
    %p51 = scmp.eq.s32.totalorder %s11, 0
    %p52 = por %p50, %p51
    %p53 = scmp.ne.s32.totalorder %s45, %s47
    %p54 = scmp.eq.s32.totalorder %s16, 1
    %p55 = por %p53, %p54
    %p56 = scmp.ne.s32.totalorder %s47, %s48
    %p57 = scmp.eq.s32.totalorder %s16, 0
    %p58 = por %p56, %p57
    %p59 = scmp.ne.s32.totalorder %s47, %s48
    %p60 = scmp.eq.s32.totalorder %s17, 1
    %p61 = por %p59, %p60
    %p63 = scmp.ne.s32.totalorder %s48, %s62
    %p64 = scmp.eq.s32.totalorder %s17, 0
    %p65 = por %p63, %p64
    %s67 = sadd.s32 %s66, 1
    %p70 = scmp.eq.s32.totalorder %s11, 1
    %p71 = scmp.ne.s32.totalorder %s66, %s68
    %p72 = scmp.eq.s32.totalorder %s11, 0
    %p73 = por %p71, %p72
    %p74 = scmp.ne.s32.totalorder %s66, %s68
    %p75 = scmp.eq.s32.totalorder %s16, 1
    %p76 = por %p74, %p75
    %p77 = scmp.ne.s32.totalorder %s68, %s69
    %p78 = scmp.eq.s32.totalorder %s16, 0
    %p79 = por %p77, %p78
    %p80 = scmp.ne.s32.totalorder %s68, %s69
    %p81 = scmp.eq.s32.totalorder %s17, 1
    %p82 = por %p80, %p81
    %p84 = scmp.ne.s32.totalorder %s69, %s83
    %p85 = scmp.eq.s32.totalorder %s17, 0
    %p86 = por %p84, %p85
    %s87 = ssub.s32 %s11, %s18
    %p88 = scmp.eq.s32.totalorder %s87, 0
    %s90 = sadd.s32 %s89, 1
    %s91 = scalar_select %p88, %s89, %s90
    %p94 = pneg %p88
    %p95 = scmp.eq.s32.totalorder %s11, 1
    %p96 = por %p94, %p95
    %p97 = scmp.ne.s32.totalorder %s89, %s92
    %p98 = scmp.eq.s32.totalorder %s11, 0
    %p99 = por %p97, %p98
    %p100 = scmp.ne.s32.totalorder %s89, %s92
    %p101 = scmp.eq.s32.totalorder %s16, 1
    %p102 = por %p100, %p101
    %p103 = scmp.ne.s32.totalorder %s92, %s93
    %p104 = scmp.eq.s32.totalorder %s16, 0
    %p105 = por %p103, %p104
    %p106 = scmp.ne.s32.totalorder %s92, %s93
    %p107 = scmp.eq.s32.totalorder %s17, 1
    %p108 = por %p106, %p107
    %p110 = scmp.ne.s32.totalorder %s93, %s109
    %p111 = scmp.eq.s32.totalorder %s17, 0
    %p112 = por %p110, %p111
    %s113 = ssub.s32 %s11, %s18
    %p114 = scmp.eq.s32.totalorder %s113, 0
    %s116 = sadd.s32 %s115, 1
    %s117 = scalar_select %p114, %s115, %s116
    %p120 = pneg %p114
    %p121 = scmp.eq.s32.totalorder %s11, 1
    %p122 = por %p120, %p121
    %p123 = scmp.ne.s32.totalorder %s115, %s118
    %p124 = scmp.eq.s32.totalorder %s11, 0
    %p125 = por %p123, %p124
    %p126 = scmp.ne.s32.totalorder %s115, %s118
    %p127 = scmp.eq.s32.totalorder %s16, 1
    %p128 = por %p126, %p127
    %p129 = scmp.ne.s32.totalorder %s118, %s119
    %p130 = scmp.eq.s32.totalorder %s16, 0
    %p131 = por %p129, %p130
    %p132 = scmp.ne.s32.totalorder %s118, %s119
    %p133 = scmp.eq.s32.totalorder %s17, 1
    %p134 = por %p132, %p133
    %p136 = scmp.ne.s32.totalorder %s119, %s135
    %p137 = scmp.eq.s32.totalorder %s17, 0
    %p138 = por %p136, %p137
    %p139 = scmp.le.s32.totalorder 1, %s11
    %p140 = scmp.lt.s32.totalorder %s11, 3
    %p141 = pnand %p139, %p140
    %p142 = pneg %p141
    // Predicated region
    $region9: #{unet_down_forward.3} parent=5 // pred_check
      _
    $region10: #{unet_down_forward.3} parent=5 // pred_check_branch
      %144 = sbr.rel (%p141) target = $region12
    $region11: #{unet_down_forward.3} parent=5 // pred_region
      %s145 = ssub.s32 %s11, 1
      // Predicated region
      $region13: #{unet_down_forward.3} parent=11 // pred_check
        %p146 = pneg %p58
      $region14: #{unet_down_forward.3} parent=11 // pred_check_branch
        %148 = sbr.rel (%p146) target = $region16
      $region15: #{unet_down_forward.3} parent=11 // pred_region
        _
      $region16: #{unet_down_forward.3} parent=11 // pred_fallthru
        _
      // Predicated region
      $region17: #{unet_down_forward.3} parent=11 // pred_check
        %p149 = pneg %p79
      $region18: #{unet_down_forward.3} parent=11 // pred_check_branch
        %151 = sbr.rel (%p149) target = $region20
      $region19: #{unet_down_forward.3} parent=11 // pred_region
        _
      $region20: #{unet_down_forward.3} parent=11 // pred_fallthru
        _
    $region12: #{unet_down_forward.3} parent=5 // pred_fallthru
      _
    %p152 = scmp.lt.s32.totalorder %s11, 2
    // Predicated region
    $region21: #{unet_down_forward.3} parent=5 // pred_check
      %p153 = pneg %p152
    $region22: #{unet_down_forward.3} parent=5 // pred_check_branch
      %155 = sbr.rel (%p153) target = $region24
    $region23: #{unet_down_forward.3} parent=5 // pred_region
      // Predicated region
      $region25: #{unet_down_forward.3} parent=23 // pred_check
        %p156 = pneg %p31
      $region26: #{unet_down_forward.3} parent=23 // pred_check_branch
        %158 = sbr.rel (%p156) target = $region28
      $region27: #{unet_down_forward.3} parent=23 // pred_region
        %p159 = scmp.lt.s32.totalorder %s11, 1
        %s160 = scalar_select %p159, %s11, 1
        %s161 = smul.addr %s160, 16
        %s162 = smul.addr %s161, 8
        %s163 = scalar_lea.vmem %s0, %s162
      $region28: #{unet_down_forward.3} parent=23 // pred_fallthru
        _
    $region24: #{unet_down_forward.3} parent=5 // pred_fallthru
      _
    %p164 = scmp.le.s32.totalorder 1, %s11
    %p165 = scmp.lt.s32.totalorder %s11, 3
    %p166 = pnand %p164, %p165
    %p167 = pneg %p166
    // Predicated region
    $region29: #{unet_down_forward.3} parent=5 // pred_check
      _
    $region30: #{unet_down_forward.3} parent=5 // pred_check_branch
      %169 = sbr.rel (%p166) target = $region32
    $region31: #{unet_down_forward.3} parent=5 // pred_region
      %s170 = ssub.s32 %s11, 1
      %p171 = scmp.lt.s32.totalorder %s16, 1
      %s172 = scalar_select %p171, %s16, 1
      %s173 = smul.addr %s172, 16
      %s174 = smul.addr %s173, 8
      %s175 = scalar_lea.vmem %s0, %s174
      %p176 = pneg %p37
      %p177 = pneg %p34
      %p178 = pneg %p58
      %p179 = pneg %p55
      %p180 = pneg %p79
      %p181 = pneg %p76
      %p182 = pneg %p105
      %p183 = pneg %p102
      %p184 = scmp.lt.s32.totalorder %s16, 1
      %s185 = scalar_select %p184, %s16, 1
      %s186 = smul.addr %s185, 8
      %s187 = smul.addr %s186, 4
      %s188 = scalar_lea.vmem %s3, %s187
      %p189 = pneg %p131
      %p190 = pneg %p128
      %p191 = scmp.lt.s32.totalorder %s16, 1
      %s192 = scalar_select %p191, %s16, 1
      %s193 = smul.addr %s192, 2
      %s194 = scalar_lea.vmem %s4, %s193
      %p195 = scmp.lt.s32.totalorder %s16, 1
      %s196 = scalar_select %p195, %s16, 1
      %s197 = smul.addr %s196, 16
      %s198 = smul.addr %s197, 8
      %s199 = scalar_lea.vmem %s0, %s198
      %p200 = scmp.lt.s32.totalorder %s16, 1
      %s201 = scalar_select %p200, %s16, 1
      %s202 = smul.addr %s201, 8
      %s203 = smul.addr %s202, 4
      %s204 = scalar_lea.vmem %s3, %s203
      %p205 = scmp.lt.s32.totalorder %s16, 1
      %s206 = scalar_select %p205, %s16, 1
      %s207 = smul.addr %s206, 2
      %s208 = scalar_lea.vmem %s4, %s207
      %v210 = vld [vmem:[%s199] sm:$0xff]
      %v211 = vld [vmem:[%s199 + $0x8] sm:$0xff]
      %v212 = vld [vmem:[%s199 + $0x10] sm:$0xff]
      %v213 = vld [vmem:[%s199 + $0x18] sm:$0xff]
      %v214 = vld [vmem:[%s199 + $0x20] sm:$0xff]
      %v215 = vld [vmem:[%s199 + $0x28] sm:$0xff]
      %v216 = vld [vmem:[%s199 + $0x30] sm:$0xff]
      %v217 = vld [vmem:[%s199 + $0x38] sm:$0xff]
      %v218 = vld [vmem:[%s199 + $0x40] sm:$0xff]
      %v219 = vld [vmem:[%s199 + $0x48] sm:$0xff]
      %v220 = vld [vmem:[%s199 + $0x50] sm:$0xff]
      %v221 = vld [vmem:[%s199 + $0x58] sm:$0xff]
      %v222 = vld [vmem:[%s199 + $0x60] sm:$0xff]
      %v223 = vld [vmem:[%s199 + $0x68] sm:$0xff]
      %v224 = vld [vmem:[%s199 + $0x70] sm:$0xff]
      %v225 = vld [vmem:[%s199 + $0x78] sm:$0xff]
      %v226 = vmax.f32 %v210, %v211
      %v227 = vmax.f32 %v212, %v213
      %v228 = vmax.f32 %v214, %v215
      %v229 = vmax.f32 %v216, %v217
      %v230 = vmax.f32 %v218, %v219
      %v231 = vmax.f32 %v220, %v221
      %v232 = vmax.f32 %v222, %v223
      %v233 = vmax.f32 %v224, %v225
      %242 = vrot.lane.b32.xlu0 %v226, 124
      %v243 = vpop.permute.xlu0 %242
      %244 = vrot.lane.b32.xlu0 %v227, 124
      %v245 = vpop.permute.xlu0 %244
      %246 = vrot.lane.b32.xlu0 %v228, 124
      %v247 = vpop.permute.xlu0 %246
      %248 = vrot.lane.b32.xlu0 %v229, 124
      %v249 = vpop.permute.xlu0 %248
      %250 = vrot.lane.b32.xlu0 %v230, 124
      %v251 = vpop.permute.xlu0 %250
      %252 = vrot.lane.b32.xlu0 %v231, 124
      %v253 = vpop.permute.xlu0 %252
      %254 = vrot.lane.b32.xlu0 %v232, 124
      %v255 = vpop.permute.xlu0 %254
      %256 = vrot.lane.b32.xlu0 %v233, 124
      %v257 = vpop.permute.xlu0 %256
      %v266 = vmax.f32 %v226, %v243
      %v267 = vmax.f32 %v227, %v245
      %v268 = vmax.f32 %v228, %v247
      %v269 = vmax.f32 %v229, %v249
      %v270 = vmax.f32 %v230, %v251
      %v271 = vmax.f32 %v231, %v253
      %v272 = vmax.f32 %v232, %v255
      %v273 = vmax.f32 %v233, %v257
      %vm274 = vcmask 31744
      %275 = vst.msk [vmem:[#allocation2] sm:$0xff] %vm274, 0.0
      %vm276 = vcmask 25600
      %277 = vst.msk [vmem:[#allocation2 + $0x8] sm:$0x3] %vm276, 0.0
      %278 = vst.msk [vmem:[#allocation2 + $0x10] sm:$0xff] %vm274, 0.0
      %279 = vst.msk [vmem:[#allocation2 + $0x18] sm:$0x3] %vm276, 0.0
      %280 = vst.msk [vmem:[#allocation2 + $0x20] sm:$0xff] %vm274, 0.0
      %281 = vst.msk [vmem:[#allocation2 + $0x28] sm:$0x3] %vm276, 0.0
      %282 = vst.msk [vmem:[#allocation2 + $0x30] sm:$0xff] %vm274, 0.0
      %283 = vst.msk [vmem:[#allocation2 + $0x38] sm:$0x3] %vm276, 0.0
      %284 = vst.msk [vmem:[#allocation2 + $0x40] sm:$0xff] %vm274, 0.0
      %285 = vst.msk [vmem:[#allocation2 + $0x48] sm:$0x3] %vm276, 0.0
      %286 = vst.msk [vmem:[#allocation2 + $0x50] sm:$0xff] %vm274, 0.0
      %287 = vst.msk [vmem:[#allocation2 + $0x58] sm:$0x3] %vm276, 0.0
      %288 = vst.msk [vmem:[#allocation2 + $0x60] sm:$0xff] %vm274, 0.0
      %289 = vst.msk [vmem:[#allocation2 + $0x68] sm:$0x3] %vm276, 0.0
      %290 = vst.msk [vmem:[#allocation2 + $0x70] sm:$0xff] %vm274, 0.0
      %291 = vst.msk [vmem:[#allocation2 + $0x78] sm:$0x3] %vm276, 0.0
      %292 = vst.msk [vmem:[#allocation2 + $0x80] sm:$0xff] %vm274, 0.0
      %293 = vst.msk [vmem:[#allocation2 + $0x88] sm:$0x3] %vm276, 0.0
      %294 = vst.msk [vmem:[#allocation2 + $0x90] sm:$0xff] %vm274, 0.0
      %295 = vst.msk [vmem:[#allocation2 + $0x98] sm:$0x3] %vm276, 0.0
      %s296 = scalar_lea.vmem [#allocation2], 16
      %297 = vst.msk [vmem:[%s296 + $0x1] sm:$0xff] %vm274, %v266
      %298 = vst.msk [vmem:[%s296 + $0x11] sm:$0xff] %vm274, %v267
      %299 = vst.msk [vmem:[%s296 + $0x21] sm:$0xff] %vm274, %v268
      %300 = vst.msk [vmem:[%s296 + $0x31] sm:$0xff] %vm274, %v269
      %301 = vst.msk [vmem:[%s296 + $0x41] sm:$0xff] %vm274, %v270
      %302 = vst.msk [vmem:[%s296 + $0x51] sm:$0xff] %vm274, %v271
      %303 = vst.msk [vmem:[%s296 + $0x61] sm:$0xff] %vm274, %v272
      %304 = vst.msk [vmem:[%s296 + $0x71] sm:$0xff] %vm274, %v273
      %v305 = vld [vmem:[%s1] sm:$0x3]
      %v306 = vld [vmem:[%s1 + $0x2] sm:$0x3]
      %v307 = vld [vmem:[%s1 + $0x4] sm:$0x3]
      %v308 = vld [vmem:[%s1 + $0x6] sm:$0x3]
      %v309 = vld [vmem:[%s1 + $0x8] sm:$0x3]
      %v310 = vld [vmem:[%s1 + $0xa] sm:$0x3]
      %v311 = vld [vmem:[%s1 + $0xc] sm:$0x3]
      %v312 = vld [vmem:[%s1 + $0xe] sm:$0x3]
      %v313 = vld [vmem:[%s1 + $0x10] sm:$0x3]
      %v314 = vld [vmem:[%s2] sm:$0x1]
      %v316 = vlaneseq
      %v317 = vshrl.u32 %v316, 7
      %v318 = vsub.s32 0, %v317
      %v319 = vrot.slane %v314, %v318
      %v321 = vld [vmem:[#allocation2] sm:$0xff]
      %v322 = vld [vmem:[#allocation2 + $0x10] sm:$0xff]
      %v323 = vld [vmem:[#allocation2 + $0x20] sm:$0xff]
      %v324 = vld [vmem:[#allocation2 + $0x30] sm:$0xff]
      %v325 = vld [vmem:[#allocation2 + $0x40] sm:$0xff]
      %v326 = vld [vmem:[#allocation2 + $0x50] sm:$0xff]
      %v327 = vld [vmem:[#allocation2 + $0x60] sm:$0xff]
      %v328 = vld [vmem:[#allocation2 + $0x70] sm:$0xff]
      %v329 = vpack.c.bf16 %v322, %v321
      %v330 = vpack.c.bf16 %v324, %v323
      %v331 = vpack.c.bf16 %v326, %v325
      %v332 = vpack.c.bf16 %v328, %v327
      %v334 = vsel %vm274, %v329, 0
      %v337 = vsel %vm274, %v330, 0
      %v340 = vsel %vm274, %v331, 0
      %v343 = vsel %vm274, %v332, 0
      %vm345 = vcmask 1041408
      %v347 = vsel %vm345, %v305, 0
      %349 = vmatprep.subr.bf16.mxu0 0
      %350 = vmatpush1.bf16.msra.mxu0 %v347
      %351 = vmatprep.subr.bf16.mxu0 0
      %352 = vmatpush1.bf16.msra.mxu0 0
      %353 = vmatprep.subr.bf16.mxu0 0
      %354 = vmatpush1.bf16.msra.mxu0 0
      %355 = vmatprep.subr.bf16.mxu0 0
      %356 = vmatpush1.bf16.msra.mxu0 0
      %357 = vmatprep.subr.bf16.mxu0 0
      %358 = vmatpush1.bf16.msra.mxu0 0
      %359 = vmatprep.subr.bf16.mxu0 0
      %360 = vmatpush1.bf16.msra.mxu0 0
      %361 = vmatprep.subr.bf16.mxu0 0
      %362 = vmatpush1.bf16.msra.mxu0 0
      %363 = vmatprep.subr.bf16.mxu0 0
      %364 = vmatpush1.bf16.msra.mxu0 0
      %365 = vmatprep.subr.bf16.mxu0 0
      %366 = vmatpush1.bf16.msra.mxu0 0
      %367 = vmatprep.subr.bf16.mxu0 0
      %368 = vmatpush1.bf16.msra.mxu0 0
      %369 = vmatprep.subr.bf16.mxu0 0
      %370 = vmatpush1.bf16.msra.mxu0 0
      %371 = vmatprep.subr.bf16.mxu0 0
      %372 = vmatpush1.bf16.msra.mxu0 0
      %373 = vmatprep.subr.bf16.mxu0 0
      %374 = vmatpush1.bf16.msra.mxu0 0
      %375 = vmatprep.subr.bf16.mxu0 0
      %376 = vmatpush1.bf16.msra.mxu0 0
      %377 = vmatprep.subr.bf16.mxu0 0
      %378 = vmatpush1.bf16.msra.mxu0 0
      %379 = vmatprep.subr.bf16.mxu0 0
      %380 = vmatpush1.bf16.msra.mxu0 0
      %381 = vmatprep.mubr.bf16.mxu0 0
      %382 = vmatmul.mubr.bf16.gmra.mrb[0].mxu0 %v334
      %v383 = vpop.f32.mrb[0].mxu0
      %v384 = vadd.f32 0.0, %v383
      %v385 = vpop.f32.mrb[0].mxu0
      %v386 = vpop.f32.mrb[0].mxu0
      %v387 = vadd.f32 0.0, %v386
      %v388 = vpop.f32.mrb[0].mxu0
      %389 = vmatprep.mubr.bf16.mxu0 0
      %390 = vmatmul.mubr.bf16.gmra.mrb[0].mxu0 %v337
      %v391 = vpop.f32.mrb[0].mxu0
      %v392 = vadd.f32 0.0, %v391
      %v393 = vpop.f32.mrb[0].mxu0
      %v394 = vpop.f32.mrb[0].mxu0
      %v395 = vadd.f32 0.0, %v394
      %v396 = vpop.f32.mrb[0].mxu0
      %397 = vmatprep.mubr.bf16.mxu0 0
      %398 = vmatmul.mubr.bf16.gmra.mrb[0].mxu0 %v340
      %v399 = vpop.f32.mrb[0].mxu0
      %v400 = vadd.f32 0.0, %v399
      %v401 = vpop.f32.mrb[0].mxu0
      %v402 = vpop.f32.mrb[0].mxu0
      %v403 = vadd.f32 0.0, %v402
      %v404 = vpop.f32.mrb[0].mxu0
      %405 = vmatprep.mubr.bf16.mxu0 0
      %406 = vmatmul.mubr.bf16.gmra.mrb[0].mxu0 %v343
      %v407 = vpop.f32.mrb[0].mxu0
      %v408 = vadd.f32 0.0, %v407
      %v409 = vpop.f32.mrb[0].mxu0
      %v410 = vpop.f32.mrb[0].mxu0
      %v411 = vadd.f32 0.0, %v410
      %v412 = vpop.f32.mrb[0].mxu0
      %413 = vdwg.mxu0
      %v414 = vadd.f32 %v319, %v384
      %v415 = vadd.f32 %v319, %v387
      %v416 = vadd.f32 %v319, %v392
      %v417 = vadd.f32 %v319, %v395
      %v418 = vadd.f32 %v319, %v400
      %v419 = vadd.f32 %v319, %v403
      %v420 = vadd.f32 %v319, %v408
      %v421 = vadd.f32 %v319, %v411
      %v422 = vld [vmem:[#allocation2 + $0x1] sm:$0xff]
      %v423 = vld [vmem:[#allocation2 + $0x11] sm:$0xff]
      %v424 = vld [vmem:[#allocation2 + $0x21] sm:$0xff]
      %v425 = vld [vmem:[#allocation2 + $0x31] sm:$0xff]
      %v426 = vld [vmem:[#allocation2 + $0x41] sm:$0xff]
      %v427 = vld [vmem:[#allocation2 + $0x51] sm:$0xff]
      %v428 = vld [vmem:[#allocation2 + $0x61] sm:$0xff]
      %v429 = vld [vmem:[#allocation2 + $0x71] sm:$0xff]
      %v430 = vpack.c.bf16 %v423, %v422
      %v431 = vpack.c.bf16 %v425, %v424
      %v432 = vpack.c.bf16 %v427, %v426
      %v433 = vpack.c.bf16 %v429, %v428
      %v435 = vsel %vm274, %v430, 0
      %v438 = vsel %vm274, %v431, 0
      %v441 = vsel %vm274, %v432, 0
      %v444 = vsel %vm274, %v433, 0
      %v447 = vsel %vm345, %v306, 0
      %449 = vmatprep.subr.bf16.mxu0 0
      %450 = vmatpush1.bf16.msra.mxu0 %v447
      %451 = vmatprep.subr.bf16.mxu0 0
      %452 = vmatpush1.bf16.msra.mxu0 0
      %453 = vmatprep.subr.bf16.mxu0 0
      %454 = vmatpush1.bf16.msra.mxu0 0
      %455 = vmatprep.subr.bf16.mxu0 0
      %456 = vmatpush1.bf16.msra.mxu0 0
      %457 = vmatprep.subr.bf16.mxu0 0
      %458 = vmatpush1.bf16.msra.mxu0 0
      %459 = vmatprep.subr.bf16.mxu0 0
      %460 = vmatpush1.bf16.msra.mxu0 0
      %461 = vmatprep.subr.bf16.mxu0 0
      %462 = vmatpush1.bf16.msra.mxu0 0
      %463 = vmatprep.subr.bf16.mxu0 0
      %464 = vmatpush1.bf16.msra.mxu0 0
      %465 = vmatprep.subr.bf16.mxu0 0
      %466 = vmatpush1.bf16.msra.mxu0 0
      %467 = vmatprep.subr.bf16.mxu0 0
      %468 = vmatpush1.bf16.msra.mxu0 0
      %469 = vmatprep.subr.bf16.mxu0 0
      %470 = vmatpush1.bf16.msra.mxu0 0
      %471 = vmatprep.subr.bf16.mxu0 0
      %472 = vmatpush1.bf16.msra.mxu0 0
      %473 = vmatprep.subr.bf16.mxu0 0
      %474 = vmatpush1.bf16.msra.mxu0 0
      %475 = vmatprep.subr.bf16.mxu0 0
      %476 = vmatpush1.bf16.msra.mxu0 0
      %477 = vmatprep.subr.bf16.mxu0 0
      %478 = vmatpush1.bf16.msra.mxu0 0
      %479 = vmatprep.subr.bf16.mxu0 0
      %480 = vmatpush1.bf16.msra.mxu0 0
      %481 = vmatprep.mubr.bf16.mxu0 0
      %482 = vmatmul.mubr.bf16.gmra.mrb[0].mxu0 %v435
      %v483 = vpop.f32.mrb[0].mxu0
      %v484 = vadd.f32 0.0, %v483
      %v485 = vpop.f32.mrb[0].mxu0
      %v486 = vpop.f32.mrb[0].mxu0
      %v487 = vadd.f32 0.0, %v486
      %v488 = vpop.f32.mrb[0].mxu0
      %489 = vmatprep.mubr.bf16.mxu0 0
      %490 = vmatmul.mubr.bf16.gmra.mrb[0].mxu0 %v438
      %v491 = vpop.f32.mrb[0].mxu0
      %v492 = vadd.f32 0.0, %v491
      %v493 = vpop.f32.mrb[0].mxu0
      %v494 = vpop.f32.mrb[0].mxu0
      %v495 = vadd.f32 0.0, %v494
      %v496 = vpop.f32.mrb[0].mxu0
      %497 = vmatprep.mubr.bf16.mxu0 0
      %498 = vmatmul.mubr.bf16.gmra.mrb[0].mxu0 %v441
      %v499 = vpop.f32.mrb[0].mxu0
      %v500 = vadd.f32 0.0, %v499
      %v501 = vpop.f32.mrb[0].mxu0
      %v502 = vpop.f32.mrb[0].mxu0
      %v503 = vadd.f32 0.0, %v502
      %v504 = vpop.f32.mrb[0].mxu0
      %505 = vmatprep.mubr.bf16.mxu0 0
      %506 = vmatmul.mubr.bf16.gmra.mrb[0].mxu0 %v444
      %v507 = vpop.f32.mrb[0].mxu0
      %v508 = vadd.f32 0.0, %v507
      %v509 = vpop.f32.mrb[0].mxu0
      %v510 = vpop.f32.mrb[0].mxu0
      %v511 = vadd.f32 0.0, %v510
      %v512 = vpop.f32.mrb[0].mxu0
      %513 = vdwg.mxu0
      %v514 = vadd.f32 %v414, %v484
      %v515 = vadd.f32 %v415, %v487
      %v516 = vadd.f32 %v416, %v492
      %v517 = vadd.f32 %v417, %v495
      %v518 = vadd.f32 %v418, %v500
      %v519 = vadd.f32 %v419, %v503
      %v520 = vadd.f32 %v420, %v508
      %v521 = vadd.f32 %v421, %v511
      %v522 = vld [vmem:[#allocation2 + $0x2] sm:$0xff]
      %v523 = vld [vmem:[#allocation2 + $0x12] sm:$0xff]
      %v524 = vld [vmem:[#allocation2 + $0x22] sm:$0xff]
      %v525 = vld [vmem:[#allocation2 + $0x32] sm:$0xff]
      %v526 = vld [vmem:[#allocation2 + $0x42] sm:$0xff]
      %v527 = vld [vmem:[#allocation2 + $0x52] sm:$0xff]
      %v528 = vld [vmem:[#allocation2 + $0x62] sm:$0xff]
      %v529 = vld [vmem:[#allocation2 + $0x72] sm:$0xff]
      %v530 = vpack.c.bf16 %v523, %v522
      %v531 = vpack.c.bf16 %v525, %v524
      %v532 = vpack.c.bf16 %v527, %v526
      %v533 = vpack.c.bf16 %v529, %v528
      %v535 = vsel %vm274, %v530, 0
      %v538 = vsel %vm274, %v531, 0
      %v541 = vsel %vm274, %v532, 0
      %v544 = vsel %vm274, %v533, 0
      %v547 = vsel %vm345, %v307, 0
      %549 = vmatprep.subr.bf16.mxu0 0
      %550 = vmatpush1.bf16.msra.mxu0 %v547
      %551 = vmatprep.subr.bf16.mxu0 0
      %552 = vmatpush1.bf16.msra.mxu0 0
      %553 = vmatprep.subr.bf16.mxu0 0
      %554 = vmatpush1.bf16.msra.mxu0 0
      %555 = vmatprep.subr.bf16.mxu0 0
      %556 = vmatpush1.bf16.msra.mxu0 0
      %557 = vmatprep.subr.bf16.mxu0 0
      %558 = vmatpush1.bf16.msra.mxu0 0
      %559 = vmatprep.subr.bf16.mxu0 0
      %560 = vmatpush1.bf16.msra.mxu0 0
      %561 = vmatprep.subr.bf16.mxu0 0
      %562 = vmatpush1.bf16.msra.mxu0 0
      %563 = vmatprep.subr.bf16.mxu0 0
      %564 = vmatpush1.bf16.msra.mxu0 0
      %565 = vmatprep.subr.bf16.mxu0 0
      %566 = vmatpush1.bf16.msra.mxu0 0
      %567 = vmatprep.subr.bf16.mxu0 0
      %568 = vmatpush1.bf16.msra.mxu0 0
      %569 = vmatprep.subr.bf16.mxu0 0
      %570 = vmatpush1.bf16.msra.mxu0 0
      %571 = vmatprep.subr.bf16.mxu0 0
      %572 = vmatpush1.bf16.msra.mxu0 0
      %573 = vmatprep.subr.bf16.mxu0 0
      %574 = vmatpush1.bf16.msra.mxu0 0
      %575 = vmatprep.subr.bf16.mxu0 0
      %576 = vmatpush1.bf16.msra.mxu0 0
      %577 = vmatprep.subr.bf16.mxu0 0
      %578 = vmatpush1.bf16.msra.mxu0 0
      %579 = vmatprep.subr.bf16.mxu0 0
      %580 = vmatpush1.bf16.msra.mxu0 0
      %581 = vmatprep.mubr.bf16.mxu0 0
      %582 = vmatmul.mubr.bf16.gmra.mrb[0].mxu0 %v535
      %v583 = vpop.f32.mrb[0].mxu0
      %v584 = vadd.f32 0.0, %v583
      %v585 = vpop.f32.mrb[0].mxu0
      %v586 = vpop.f32.mrb[0].mxu0
      %v587 = vadd.f32 0.0, %v586
      %v588 = vpop.f32.mrb[0].mxu0
      %589 = vmatprep.mubr.bf16.mxu0 0
      %590 = vmatmul.mubr.bf16.gmra.mrb[0].mxu0 %v538
      %v591 = vpop.f32.mrb[0].mxu0
      %v592 = vadd.f32 0.0, %v591
      %v593 = vpop.f32.mrb[0].mxu0
      %v594 = vpop.f32.mrb[0].mxu0
      %v595 = vadd.f32 0.0, %v594
      %v596 = vpop.f32.mrb[0].mxu0
      %597 = vmatprep.mubr.bf16.mxu0 0
      %598 = vmatmul.mubr.bf16.gmra.mrb[0].mxu0 %v541
      %v599 = vpop.f32.mrb[0].mxu0
      %v600 = vadd.f32 0.0, %v599
      %v601 = vpop.f32.mrb[0].mxu0
      %v602 = vpop.f32.mrb[0].mxu0
      %v603 = vadd.f32 0.0, %v602
      %v604 = vpop.f32.mrb[0].mxu0
      %605 = vmatprep.mubr.bf16.mxu0 0
      %606 = vmatmul.mubr.bf16.gmra.mrb[0].mxu0 %v544
      %v607 = vpop.f32.mrb[0].mxu0
      %v608 = vadd.f32 0.0, %v607
      %v609 = vpop.f32.mrb[0].mxu0
      %v610 = vpop.f32.mrb[0].mxu0
      %v611 = vadd.f32 0.0, %v610
      %v612 = vpop.f32.mrb[0].mxu0
      %613 = vdwg.mxu0
      %v614 = vadd.f32 %v514, %v584
      %v615 = vadd.f32 %v515, %v587
      %v616 = vadd.f32 %v516, %v592
      %v617 = vadd.f32 %v517, %v595
      %v618 = vadd.f32 %v518, %v600
      %v619 = vadd.f32 %v519, %v603
      %v620 = vadd.f32 %v520, %v608
      %v621 = vadd.f32 %v521, %v611
      %v622 = vld [vmem:[%s296] sm:$0xff]
      %v623 = vld [vmem:[%s296 + $0x10] sm:$0xff]
      %v624 = vld [vmem:[%s296 + $0x20] sm:$0xff]
      %v625 = vld [vmem:[%s296 + $0x30] sm:$0xff]
      %v626 = vld [vmem:[%s296 + $0x40] sm:$0xff]
      %v627 = vld [vmem:[%s296 + $0x50] sm:$0xff]
      %v628 = vld [vmem:[%s296 + $0x60] sm:$0xff]
      %v629 = vld [vmem:[%s296 + $0x70] sm:$0xff]
      %v630 = vpack.c.bf16 %v623, %v622
      %v631 = vpack.c.bf16 %v625, %v624
      %v632 = vpack.c.bf16 %v627, %v626
      %v633 = vpack.c.bf16 %v629, %v628
      %v635 = vsel %vm274, %v630, 0
      %v638 = vsel %vm274, %v631, 0
      %v641 = vsel %vm274, %v632, 0
      %v644 = vsel %vm274, %v633, 0
      %v647 = vsel %vm345, %v308, 0
      %649 = vmatprep.subr.bf16.mxu0 0
      %650 = vmatpush1.bf16.msra.mxu0 %v647
      %651 = vmatprep.subr.bf16.mxu0 0
      %652 = vmatpush1.bf16.msra.mxu0 0
      %653 = vmatprep.subr.bf16.mxu0 0
      %654 = vmatpush1.bf16.msra.mxu0 0
      %655 = vmatprep.subr.bf16.mxu0 0
      %656 = vmatpush1.bf16.msra.mxu0 0
      %657 = vmatprep.subr.bf16.mxu0 0
      %658 = vmatpush1.bf16.msra.mxu0 0
      %659 = vmatprep.subr.bf16.mxu0 0
      %660 = vmatpush1.bf16.msra.mxu0 0
      %661 = vmatprep.subr.bf16.mxu0 0
      %662 = vmatpush1.bf16.msra.mxu0 0
      %663 = vmatprep.subr.bf16.mxu0 0
      %664 = vmatpush1.bf16.msra.mxu0 0
      %665 = vmatprep.subr.bf16.mxu0 0
      %666 = vmatpush1.bf16.msra.mxu0 0
      %667 = vmatprep.subr.bf16.mxu0 0
      %668 = vmatpush1.bf16.msra.mxu0 0
      %669 = vmatprep.subr.bf16.mxu0 0
      %670 = vmatpush1.bf16.msra.mxu0 0
      %671 = vmatprep.subr.bf16.mxu0 0
      %672 = vmatpush1.bf16.msra.mxu0 0
      %673 = vmatprep.subr.bf16.mxu0 0
      %674 = vmatpush1.bf16.msra.mxu0 0
      %675 = vmatprep.subr.bf16.mxu0 0
      %676 = vmatpush1.bf16.msra.mxu0 0
      %677 = vmatprep.subr.bf16.mxu0 0
      %678 = vmatpush1.bf16.msra.mxu0 0
      %679 = vmatprep.subr.bf16.mxu0 0
      %680 = vmatpush1.bf16.msra.mxu0 0
      %681 = vmatprep.mubr.bf16.mxu0 0
      %682 = vmatmul.mubr.bf16.gmra.mrb[0].mxu0 %v635
      %v683 = vpop.f32.mrb[0].mxu0
      %v684 = vadd.f32 0.0, %v683
      %v685 = vpop.f32.mrb[0].mxu0
      %v686 = vpop.f32.mrb[0].mxu0
      %v687 = vadd.f32 0.0, %v686
      %v688 = vpop.f32.mrb[0].mxu0
      %689 = vmatprep.mubr.bf16.mxu0 0
      %690 = vmatmul.mubr.bf16.gmra.mrb[0].mxu0 %v638
      %v691 = vpop.f32.mrb[0].mxu0
      %v692 = vadd.f32 0.0, %v691
      %v693 = vpop.f32.mrb[0].mxu0
      %v694 = vpop.f32.mrb[0].mxu0
      %v695 = vadd.f32 0.0, %v694
      %v696 = vpop.f32.mrb[0].mxu0
      %697 = vmatprep.mubr.bf16.mxu0 0
      %698 = vmatmul.mubr.bf16.gmra.mrb[0].mxu0 %v641
      %v699 = vpop.f32.mrb[0].mxu0
      %v700 = vadd.f32 0.0, %v699
      %v701 = vpop.f32.mrb[0].mxu0
      %v702 = vpop.f32.mrb[0].mxu0
      %v703 = vadd.f32 0.0, %v702
      %v704 = vpop.f32.mrb[0].mxu0
      %705 = vmatprep.mubr.bf16.mxu0 0
      %706 = vmatmul.mubr.bf16.gmra.mrb[0].mxu0 %v644
      %v707 = vpop.f32.mrb[0].mxu0
      %v708 = vadd.f32 0.0, %v707
      %v709 = vpop.f32.mrb[0].mxu0
      %v710 = vpop.f32.mrb[0].mxu0
      %v711 = vadd.f32 0.0, %v710
      %v712 = vpop.f32.mrb[0].mxu0
      %713 = vdwg.mxu0
      %v714 = vadd.f32 %v614, %v684
      %v715 = vadd.f32 %v615, %v687
      %v716 = vadd.f32 %v616, %v692
      %v717 = vadd.f32 %v617, %v695
      %v718 = vadd.f32 %v618, %v700
      %v719 = vadd.f32 %v619, %v703
      %v720 = vadd.f32 %v620, %v708
      %v721 = vadd.f32 %v621, %v711
      %v722 = vld [vmem:[%s296 + $0x1] sm:$0xff]
      %v723 = vld [vmem:[%s296 + $0x11] sm:$0xff]
      %v724 = vld [vmem:[%s296 + $0x21] sm:$0xff]
      %v725 = vld [vmem:[%s296 + $0x31] sm:$0xff]
      %v726 = vld [vmem:[%s296 + $0x41] sm:$0xff]
      %v727 = vld [vmem:[%s296 + $0x51] sm:$0xff]
      %v728 = vld [vmem:[%s296 + $0x61] sm:$0xff]
      %v729 = vld [vmem:[%s296 + $0x71] sm:$0xff]
      %v730 = vpack.c.bf16 %v723, %v722
      %v731 = vpack.c.bf16 %v725, %v724
      %v732 = vpack.c.bf16 %v727, %v726
      %v733 = vpack.c.bf16 %v729, %v728
      %v735 = vsel %vm274, %v730, 0
      %v738 = vsel %vm274, %v731, 0
      %v741 = vsel %vm274, %v732, 0
      %v744 = vsel %vm274, %v733, 0
      %v747 = vsel %vm345, %v309, 0
      %749 = vmatprep.subr.bf16.mxu0 0
      %750 = vmatpush1.bf16.msra.mxu0 %v747
      %751 = vmatprep.subr.bf16.mxu0 0
      %752 = vmatpush1.bf16.msra.mxu0 0
      %753 = vmatprep.subr.bf16.mxu0 0
      %754 = vmatpush1.bf16.msra.mxu0 0
      %755 = vmatprep.subr.bf16.mxu0 0
      %756 = vmatpush1.bf16.msra.mxu0 0
      %757 = vmatprep.subr.bf16.mxu0 0
      %758 = vmatpush1.bf16.msra.mxu0 0
      %759 = vmatprep.subr.bf16.mxu0 0
      %760 = vmatpush1.bf16.msra.mxu0 0
      %761 = vmatprep.subr.bf16.mxu0 0
      %762 = vmatpush1.bf16.msra.mxu0 0
      %763 = vmatprep.subr.bf16.mxu0 0
      %764 = vmatpush1.bf16.msra.mxu0 0
      %765 = vmatprep.subr.bf16.mxu0 0
      %766 = vmatpush1.bf16.msra.mxu0 0
      %767 = vmatprep.subr.bf16.mxu0 0
      %768 = vmatpush1.bf16.msra.mxu0 0
      %769 = vmatprep.subr.bf16.mxu0 0
      %770 = vmatpush1.bf16.msra.mxu0 0
      %771 = vmatprep.subr.bf16.mxu0 0
      %772 = vmatpush1.bf16.msra.mxu0 0
      %773 = vmatprep.subr.bf16.mxu0 0
      %774 = vmatpush1.bf16.msra.mxu0 0
      %775 = vmatprep.subr.bf16.mxu0 0
      %776 = vmatpush1.bf16.msra.mxu0 0
      %777 = vmatprep.subr.bf16.mxu0 0
      %778 = vmatpush1.bf16.msra.mxu0 0
      %779 = vmatprep.subr.bf16.mxu0 0
      %780 = vmatpush1.bf16.msra.mxu0 0
      %781 = vmatprep.mubr.bf16.mxu0 0
      %782 = vmatmul.mubr.bf16.gmra.mrb[0].mxu0 %v735
      %v783 = vpop.f32.mrb[0].mxu0
      %v784 = vadd.f32 0.0, %v783
      %v785 = vpop.f32.mrb[0].mxu0
      %v786 = vpop.f32.mrb[0].mxu0
      %v787 = vadd.f32 0.0, %v786
      %v788 = vpop.f32.mrb[0].mxu0
      %789 = vmatprep.mubr.bf16.mxu0 0
      %790 = vmatmul.mubr.bf16.gmra.mrb[0].mxu0 %v738
      %v791 = vpop.f32.mrb[0].mxu0
      %v792 = vadd.f32 0.0, %v791
      %v793 = vpop.f32.mrb[0].mxu0
      %v794 = vpop.f32.mrb[0].mxu0
      %v795 = vadd.f32 0.0, %v794
      %v796 = vpop.f32.mrb[0].mxu0
      %797 = vmatprep.mubr.bf16.mxu0 0
      %798 = vmatmul.mubr.bf16.gmra.mrb[0].mxu0 %v741
      %v799 = vpop.f32.mrb[0].mxu0
      %v800 = vadd.f32 0.0, %v799
      %v801 = vpop.f32.mrb[0].mxu0
      %v802 = vpop.f32.mrb[0].mxu0
      %v803 = vadd.f32 0.0, %v802
      %v804 = vpop.f32.mrb[0].mxu0
      %805 = vmatprep.mubr.bf16.mxu0 0
      %806 = vmatmul.mubr.bf16.gmra.mrb[0].mxu0 %v744
      %v807 = vpop.f32.mrb[0].mxu0
      %v808 = vadd.f32 0.0, %v807
      %v809 = vpop.f32.mrb[0].mxu0
      %v810 = vpop.f32.mrb[0].mxu0
      %v811 = vadd.f32 0.0, %v810
      %v812 = vpop.f32.mrb[0].mxu0
      %813 = vdwg.mxu0
      %v814 = vadd.f32 %v714, %v784
      %v815 = vadd.f32 %v715, %v787
      %v816 = vadd.f32 %v716, %v792
      %v817 = vadd.f32 %v717, %v795
      %v818 = vadd.f32 %v718, %v800
      %v819 = vadd.f32 %v719, %v803
      %v820 = vadd.f32 %v720, %v808
      %v821 = vadd.f32 %v721, %v811
      %v822 = vld [vmem:[%s296 + $0x2] sm:$0xff]
      %v823 = vld [vmem:[%s296 + $0x12] sm:$0xff]
      %v824 = vld [vmem:[%s296 + $0x22] sm:$0xff]
      %v825 = vld [vmem:[%s296 + $0x32] sm:$0xff]
      %v826 = vld [vmem:[%s296 + $0x42] sm:$0xff]
      %v827 = vld [vmem:[%s296 + $0x52] sm:$0xff]
      %v828 = vld [vmem:[%s296 + $0x62] sm:$0xff]
      %v829 = vld [vmem:[%s296 + $0x72] sm:$0xff]
      %v830 = vpack.c.bf16 %v823, %v822
      %v831 = vpack.c.bf16 %v825, %v824
      %v832 = vpack.c.bf16 %v827, %v826
      %v833 = vpack.c.bf16 %v829, %v828
      %v835 = vsel %vm274, %v830, 0
      %v838 = vsel %vm274, %v831, 0
      %v841 = vsel %vm274, %v832, 0
      %v844 = vsel %vm274, %v833, 0
      %v847 = vsel %vm345, %v310, 0
      %849 = vmatprep.subr.bf16.mxu0 0
      %850 = vmatpush1.bf16.msra.mxu0 %v847
      %851 = vmatprep.subr.bf16.mxu0 0
      %852 = vmatpush1.bf16.msra.mxu0 0
      %853 = vmatprep.subr.bf16.mxu0 0
      %854 = vmatpush1.bf16.msra.mxu0 0
      %855 = vmatprep.subr.bf16.mxu0 0
      %856 = vmatpush1.bf16.msra.mxu0 0
      %857 = vmatprep.subr.bf16.mxu0 0
      %858 = vmatpush1.bf16.msra.mxu0 0
      %859 = vmatprep.subr.bf16.mxu0 0
      %860 = vmatpush1.bf16.msra.mxu0 0
      %861 = vmatprep.subr.bf16.mxu0 0
      %862 = vmatpush1.bf16.msra.mxu0 0
      %863 = vmatprep.subr.bf16.mxu0 0
      %864 = vmatpush1.bf16.msra.mxu0 0
      %865 = vmatprep.subr.bf16.mxu0 0
      %866 = vmatpush1.bf16.msra.mxu0 0
      %867 = vmatprep.subr.bf16.mxu0 0
      %868 = vmatpush1.bf16.msra.mxu0 0
      %869 = vmatprep.subr.bf16.mxu0 0
      %870 = vmatpush1.bf16.msra.mxu0 0
      %871 = vmatprep.subr.bf16.mxu0 0
      %872 = vmatpush1.bf16.msra.mxu0 0
      %873 = vmatprep.subr.bf16.mxu0 0
      %874 = vmatpush1.bf16.msra.mxu0 0
      %875 = vmatprep.subr.bf16.mxu0 0
      %876 = vmatpush1.bf16.msra.mxu0 0
      %877 = vmatprep.subr.bf16.mxu0 0
      %878 = vmatpush1.bf16.msra.mxu0 0
      %879 = vmatprep.subr.bf16.mxu0 0
      %880 = vmatpush1.bf16.msra.mxu0 0
      %881 = vmatprep.mubr.bf16.mxu0 0
      %882 = vmatmul.mubr.bf16.gmra.mrb[0].mxu0 %v835
      %v883 = vpop.f32.mrb[0].mxu0
      %v884 = vadd.f32 0.0, %v883
      %v885 = vpop.f32.mrb[0].mxu0
      %v886 = vpop.f32.mrb[0].mxu0
      %v887 = vadd.f32 0.0, %v886
      %v888 = vpop.f32.mrb[0].mxu0
      %889 = vmatprep.mubr.bf16.mxu0 0
      %890 = vmatmul.mubr.bf16.gmra.mrb[0].mxu0 %v838
      %v891 = vpop.f32.mrb[0].mxu0
      %v892 = vadd.f32 0.0, %v891
      %v893 = vpop.f32.mrb[0].mxu0
      %v894 = vpop.f32.mrb[0].mxu0
      %v895 = vadd.f32 0.0, %v894
      %v896 = vpop.f32.mrb[0].mxu0
      %897 = vmatprep.mubr.bf16.mxu0 0
      %898 = vmatmul.mubr.bf16.gmra.mrb[0].mxu0 %v841
      %v899 = vpop.f32.mrb[0].mxu0
      %v900 = vadd.f32 0.0, %v899
      %v901 = vpop.f32.mrb[0].mxu0
      %v902 = vpop.f32.mrb[0].mxu0
      %v903 = vadd.f32 0.0, %v902
      %v904 = vpop.f32.mrb[0].mxu0
      %905 = vmatprep.mubr.bf16.mxu0 0
      %906 = vmatmul.mubr.bf16.gmra.mrb[0].mxu0 %v844
      %v907 = vpop.f32.mrb[0].mxu0
      %v908 = vadd.f32 0.0, %v907
      %v909 = vpop.f32.mrb[0].mxu0
      %v910 = vpop.f32.mrb[0].mxu0
      %v911 = vadd.f32 0.0, %v910
      %v912 = vpop.f32.mrb[0].mxu0
      %913 = vdwg.mxu0
      %v914 = vadd.f32 %v814, %v884
      %v915 = vadd.f32 %v815, %v887
      %v916 = vadd.f32 %v816, %v892
      %v917 = vadd.f32 %v817, %v895
      %v918 = vadd.f32 %v818, %v900
      %v919 = vadd.f32 %v819, %v903
      %v920 = vadd.f32 %v820, %v908
      %v921 = vadd.f32 %v821, %v911
      %s922 = scalar_lea.vmem [#allocation2], 32
      %v923 = vld [vmem:[%s922] sm:$0xff]
      %v924 = vld [vmem:[%s922 + $0x10] sm:$0xff]
      %v925 = vld [vmem:[%s922 + $0x20] sm:$0xff]
      %v926 = vld [vmem:[%s922 + $0x30] sm:$0xff]
      %v927 = vld [vmem:[%s922 + $0x40] sm:$0xff]
      %v928 = vld [vmem:[%s922 + $0x50] sm:$0xff]
      %v929 = vld [vmem:[%s922 + $0x60] sm:$0xff]
      %v930 = vld [vmem:[%s922 + $0x70] sm:$0xff]
      %v931 = vpack.c.bf16 %v924, %v923
      %v932 = vpack.c.bf16 %v926, %v925
      %v933 = vpack.c.bf16 %v928, %v927
      %v934 = vpack.c.bf16 %v930, %v929
      %v936 = vsel %vm274, %v931, 0
      %v939 = vsel %vm274, %v932, 0
      %v942 = vsel %vm274, %v933, 0
      %v945 = vsel %vm274, %v934, 0
      %v948 = vsel %vm345, %v311, 0
      %950 = vmatprep.subr.bf16.mxu0 0
      %951 = vmatpush1.bf16.msra.mxu0 %v948
      %952 = vmatprep.subr.bf16.mxu0 0
      %953 = vmatpush1.bf16.msra.mxu0 0
      %954 = vmatprep.subr.bf16.mxu0 0
      %955 = vmatpush1.bf16.msra.mxu0 0
      %956 = vmatprep.subr.bf16.mxu0 0
      %957 = vmatpush1.bf16.msra.mxu0 0
      %958 = vmatprep.subr.bf16.mxu0 0
      %959 = vmatpush1.bf16.msra.mxu0 0
      %960 = vmatprep.subr.bf16.mxu0 0
      %961 = vmatpush1.bf16.msra.mxu0 0
      %962 = vmatprep.subr.bf16.mxu0 0
      %963 = vmatpush1.bf16.msra.mxu0 0
      %964 = vmatprep.subr.bf16.mxu0 0
      %965 = vmatpush1.bf16.msra.mxu0 0
      %966 = vmatprep.subr.bf16.mxu0 0
      %967 = vmatpush1.bf16.msra.mxu0 0
      %968 = vmatprep.subr.bf16.mxu0 0
      %969 = vmatpush1.bf16.msra.mxu0 0
      %970 = vmatprep.subr.bf16.mxu0 0
      %971 = vmatpush1.bf16.msra.mxu0 0
      %972 = vmatprep.subr.bf16.mxu0 0
      %973 = vmatpush1.bf16.msra.mxu0 0
      %974 = vmatprep.subr.bf16.mxu0 0
      %975 = vmatpush1.bf16.msra.mxu0 0
      %976 = vmatprep.subr.bf16.mxu0 0
      %977 = vmatpush1.bf16.msra.mxu0 0
      %978 = vmatprep.subr.bf16.mxu0 0
      %979 = vmatpush1.bf16.msra.mxu0 0
      %980 = vmatprep.subr.bf16.mxu0 0
      %981 = vmatpush1.bf16.msra.mxu0 0
      %982 = vmatprep.mubr.bf16.mxu0 0
      %983 = vmatmul.mubr.bf16.gmra.mrb[0].mxu0 %v936
      %v984 = vpop.f32.mrb[0].mxu0
      %v985 = vadd.f32 0.0, %v984
      %v986 = vpop.f32.mrb[0].mxu0
      %v987 = vpop.f32.mrb[0].mxu0
      %v988 = vadd.f32 0.0, %v987
      %v989 = vpop.f32.mrb[0].mxu0
      %990 = vmatprep.mubr.bf16.mxu0 0
      %991 = vmatmul.mubr.bf16.gmra.mrb[0].mxu0 %v939
      %v992 = vpop.f32.mrb[0].mxu0
      %v993 = vadd.f32 0.0, %v992
      %v994 = vpop.f32.mrb[0].mxu0
      %v995 = vpop.f32.mrb[0].mxu0
      %v996 = vadd.f32 0.0, %v995
      %v997 = vpop.f32.mrb[0].mxu0
      %998 = vmatprep.mubr.bf16.mxu0 0
      %999 = vmatmul.mubr.bf16.gmra.mrb[0].mxu0 %v942
      %v1000 = vpop.f32.mrb[0].mxu0
      %v1001 = vadd.f32 0.0, %v1000
      %v1002 = vpop.f32.mrb[0].mxu0
      %v1003 = vpop.f32.mrb[0].mxu0
      %v1004 = vadd.f32 0.0, %v1003
      %v1005 = vpop.f32.mrb[0].mxu0
      %1006 = vmatprep.mubr.bf16.mxu0 0
      %1007 = vmatmul.mubr.bf16.gmra.mrb[0].mxu0 %v945
      %v1008 = vpop.f32.mrb[0].mxu0
      %v1009 = vadd.f32 0.0, %v1008
      %v1010 = vpop.f32.mrb[0].mxu0
      %v1011 = vpop.f32.mrb[0].mxu0
      %v1012 = vadd.f32 0.0, %v1011
      %v1013 = vpop.f32.mrb[0].mxu0
      %1014 = vdwg.mxu0
      %v1015 = vadd.f32 %v914, %v985
      %v1016 = vadd.f32 %v915, %v988
      %v1017 = vadd.f32 %v916, %v993
      %v1018 = vadd.f32 %v917, %v996
      %v1019 = vadd.f32 %v918, %v1001
      %v1020 = vadd.f32 %v919, %v1004
      %v1021 = vadd.f32 %v920, %v1009
      %v1022 = vadd.f32 %v921, %v1012
      %v1023 = vld [vmem:[%s922 + $0x1] sm:$0xff]
      %v1024 = vld [vmem:[%s922 + $0x11] sm:$0xff]
      %v1025 = vld [vmem:[%s922 + $0x21] sm:$0xff]
      %v1026 = vld [vmem:[%s922 + $0x31] sm:$0xff]
      %v1027 = vld [vmem:[%s922 + $0x41] sm:$0xff]
      %v1028 = vld [vmem:[%s922 + $0x51] sm:$0xff]
      %v1029 = vld [vmem:[%s922 + $0x61] sm:$0xff]
      %v1030 = vld [vmem:[%s922 + $0x71] sm:$0xff]
      %v1031 = vpack.c.bf16 %v1024, %v1023
      %v1032 = vpack.c.bf16 %v1026, %v1025
      %v1033 = vpack.c.bf16 %v1028, %v1027
      %v1034 = vpack.c.bf16 %v1030, %v1029
      %v1036 = vsel %vm274, %v1031, 0
      %v1039 = vsel %vm274, %v1032, 0
      %v1042 = vsel %vm274, %v1033, 0
      %v1045 = vsel %vm274, %v1034, 0
      %v1048 = vsel %vm345, %v312, 0
      %1050 = vmatprep.subr.bf16.mxu0 0
      %1051 = vmatpush1.bf16.msra.mxu0 %v1048
      %1052 = vmatprep.subr.bf16.mxu0 0
      %1053 = vmatpush1.bf16.msra.mxu0 0
      %1054 = vmatprep.subr.bf16.mxu0 0
      %1055 = vmatpush1.bf16.msra.mxu0 0
      %1056 = vmatprep.subr.bf16.mxu0 0
      %1057 = vmatpush1.bf16.msra.mxu0 0
      %1058 = vmatprep.subr.bf16.mxu0 0
      %1059 = vmatpush1.bf16.msra.mxu0 0
      %1060 = vmatprep.subr.bf16.mxu0 0
      %1061 = vmatpush1.bf16.msra.mxu0 0
      %1062 = vmatprep.subr.bf16.mxu0 0
      %1063 = vmatpush1.bf16.msra.mxu0 0
      %1064 = vmatprep.subr.bf16.mxu0 0
      %1065 = vmatpush1.bf16.msra.mxu0 0
      %1066 = vmatprep.subr.bf16.mxu0 0
      %1067 = vmatpush1.bf16.msra.mxu0 0
      %1068 = vmatprep.subr.bf16.mxu0 0
      %1069 = vmatpush1.bf16.msra.mxu0 0
      %1070 = vmatprep.subr.bf16.mxu0 0
      %1071 = vmatpush1.bf16.msra.mxu0 0
      %1072 = vmatprep.subr.bf16.mxu0 0
      %1073 = vmatpush1.bf16.msra.mxu0 0
      %1074 = vmatprep.subr.bf16.mxu0 0
      %1075 = vmatpush1.bf16.msra.mxu0 0
      %1076 = vmatprep.subr.bf16.mxu0 0
      %1077 = vmatpush1.bf16.msra.mxu0 0
      %1078 = vmatprep.subr.bf16.mxu0 0
      %1079 = vmatpush1.bf16.msra.mxu0 0
      %1080 = vmatprep.subr.bf16.mxu0 0
      %1081 = vmatpush1.bf16.msra.mxu0 0
      %1082 = vmatprep.mubr.bf16.mxu0 0
      %1083 = vmatmul.mubr.bf16.gmra.mrb[0].mxu0 %v1036
      %v1084 = vpop.f32.mrb[0].mxu0
      %v1085 = vadd.f32 0.0, %v1084
      %v1086 = vpop.f32.mrb[0].mxu0
      %v1087 = vpop.f32.mrb[0].mxu0
      %v1088 = vadd.f32 0.0, %v1087
      %v1089 = vpop.f32.mrb[0].mxu0
      %1090 = vmatprep.mubr.bf16.mxu0 0
      %1091 = vmatmul.mubr.bf16.gmra.mrb[0].mxu0 %v1039
      %v1092 = vpop.f32.mrb[0].mxu0
      %v1093 = vadd.f32 0.0, %v1092
      %v1094 = vpop.f32.mrb[0].mxu0
      %v1095 = vpop.f32.mrb[0].mxu0
      %v1096 = vadd.f32 0.0, %v1095
      %v1097 = vpop.f32.mrb[0].mxu0
      %1098 = vmatprep.mubr.bf16.mxu0 0
      %1099 = vmatmul.mubr.bf16.gmra.mrb[0].mxu0 %v1042
      %v1100 = vpop.f32.mrb[0].mxu0
      %v1101 = vadd.f32 0.0, %v1100
      %v1102 = vpop.f32.mrb[0].mxu0
      %v1103 = vpop.f32.mrb[0].mxu0
      %v1104 = vadd.f32 0.0, %v1103
      %v1105 = vpop.f32.mrb[0].mxu0
      %1106 = vmatprep.mubr.bf16.mxu0 0
      %1107 = vmatmul.mubr.bf16.gmra.mrb[0].mxu0 %v1045
      %v1108 = vpop.f32.mrb[0].mxu0
      %v1109 = vadd.f32 0.0, %v1108
      %v1110 = vpop.f32.mrb[0].mxu0
      %v1111 = vpop.f32.mrb[0].mxu0
      %v1112 = vadd.f32 0.0, %v1111
      %v1113 = vpop.f32.mrb[0].mxu0
      %1114 = vdwg.mxu0
      %v1115 = vadd.f32 %v1015, %v1085
      %v1116 = vadd.f32 %v1016, %v1088
      %v1117 = vadd.f32 %v1017, %v1093
      %v1118 = vadd.f32 %v1018, %v1096
      %v1119 = vadd.f32 %v1019, %v1101
      %v1120 = vadd.f32 %v1020, %v1104
      %v1121 = vadd.f32 %v1021, %v1109
      %v1122 = vadd.f32 %v1022, %v1112
      %v1123 = vld [vmem:[%s922 + $0x2] sm:$0xff]
      %v1124 = vld [vmem:[%s922 + $0x12] sm:$0xff]
      %v1125 = vld [vmem:[%s922 + $0x22] sm:$0xff]
      %v1126 = vld [vmem:[%s922 + $0x32] sm:$0xff]
      %v1127 = vld [vmem:[%s922 + $0x42] sm:$0xff]
      %v1128 = vld [vmem:[%s922 + $0x52] sm:$0xff]
      %v1129 = vld [vmem:[%s922 + $0x62] sm:$0xff]
      %v1130 = vld [vmem:[%s922 + $0x72] sm:$0xff]
      %v1131 = vpack.c.bf16 %v1124, %v1123
      %v1132 = vpack.c.bf16 %v1126, %v1125
      %v1133 = vpack.c.bf16 %v1128, %v1127
      %v1134 = vpack.c.bf16 %v1130, %v1129
      %v1136 = vsel %vm274, %v1131, 0
      %v1139 = vsel %vm274, %v1132, 0
      %v1142 = vsel %vm274, %v1133, 0
      %v1145 = vsel %vm274, %v1134, 0
      %v1148 = vsel %vm345, %v313, 0
      %1150 = vmatprep.subr.bf16.mxu0 0
      %1151 = vmatpush1.bf16.msra.mxu0 %v1148
      %1152 = vmatprep.subr.bf16.mxu0 0
      %1153 = vmatpush1.bf16.msra.mxu0 0
      %1154 = vmatprep.subr.bf16.mxu0 0
      %1155 = vmatpush1.bf16.msra.mxu0 0
      %1156 = vmatprep.subr.bf16.mxu0 0
      %1157 = vmatpush1.bf16.msra.mxu0 0
      %1158 = vmatprep.subr.bf16.mxu0 0
      %1159 = vmatpush1.bf16.msra.mxu0 0
      %1160 = vmatprep.subr.bf16.mxu0 0
      %1161 = vmatpush1.bf16.msra.mxu0 0
      %1162 = vmatprep.subr.bf16.mxu0 0
      %1163 = vmatpush1.bf16.msra.mxu0 0
      %1164 = vmatprep.subr.bf16.mxu0 0
      %1165 = vmatpush1.bf16.msra.mxu0 0
      %1166 = vmatprep.subr.bf16.mxu0 0
      %1167 = vmatpush1.bf16.msra.mxu0 0
      %1168 = vmatprep.subr.bf16.mxu0 0
      %1169 = vmatpush1.bf16.msra.mxu0 0
      %1170 = vmatprep.subr.bf16.mxu0 0
      %1171 = vmatpush1.bf16.msra.mxu0 0
      %1172 = vmatprep.subr.bf16.mxu0 0
      %1173 = vmatpush1.bf16.msra.mxu0 0
      %1174 = vmatprep.subr.bf16.mxu0 0
      %1175 = vmatpush1.bf16.msra.mxu0 0
      %1176 = vmatprep.subr.bf16.mxu0 0
      %1177 = vmatpush1.bf16.msra.mxu0 0
      %1178 = vmatprep.subr.bf16.mxu0 0
      %1179 = vmatpush1.bf16.msra.mxu0 0
      %1180 = vmatprep.subr.bf16.mxu0 0
      %1181 = vmatpush1.bf16.msra.mxu0 0
      %1182 = vmatprep.mubr.bf16.mxu0 0
      %1183 = vmatmul.mubr.bf16.gmra.mrb[0].mxu0 %v1136
      %v1184 = vpop.f32.mrb[0].mxu0
      %v1185 = vadd.f32 0.0, %v1184
      %v1186 = vpop.f32.mrb[0].mxu0
      %v1187 = vpop.f32.mrb[0].mxu0
      %v1188 = vadd.f32 0.0, %v1187
      %v1189 = vpop.f32.mrb[0].mxu0
      %1190 = vmatprep.mubr.bf16.mxu0 0
      %1191 = vmatmul.mubr.bf16.gmra.mrb[0].mxu0 %v1139
      %v1192 = vpop.f32.mrb[0].mxu0
      %v1193 = vadd.f32 0.0, %v1192
      %v1194 = vpop.f32.mrb[0].mxu0
      %v1195 = vpop.f32.mrb[0].mxu0
      %v1196 = vadd.f32 0.0, %v1195
      %v1197 = vpop.f32.mrb[0].mxu0
      %1198 = vmatprep.mubr.bf16.mxu0 0
      %1199 = vmatmul.mubr.bf16.gmra.mrb[0].mxu0 %v1142
      %v1200 = vpop.f32.mrb[0].mxu0
      %v1201 = vadd.f32 0.0, %v1200
      %v1202 = vpop.f32.mrb[0].mxu0
      %v1203 = vpop.f32.mrb[0].mxu0
      %v1204 = vadd.f32 0.0, %v1203
      %v1205 = vpop.f32.mrb[0].mxu0
      %1206 = vmatprep.mubr.bf16.mxu0 0
      %1207 = vmatmul.mubr.bf16.gmra.mrb[0].mxu0 %v1145
      %v1208 = vpop.f32.mrb[0].mxu0
      %v1209 = vadd.f32 0.0, %v1208
      %v1210 = vpop.f32.mrb[0].mxu0
      %v1211 = vpop.f32.mrb[0].mxu0
      %v1212 = vadd.f32 0.0, %v1211
      %v1213 = vpop.f32.mrb[0].mxu0
      %1214 = vdwg.mxu0
      %v1215 = vadd.f32 %v1115, %v1185
      %v1216 = vadd.f32 %v1116, %v1188
      %v1217 = vadd.f32 %v1117, %v1193
      %v1218 = vadd.f32 %v1118, %v1196
      %v1219 = vadd.f32 %v1119, %v1201
      %v1220 = vadd.f32 %v1120, %v1204
      %v1221 = vadd.f32 %v1121, %v1209
      %v1222 = vadd.f32 %v1122, %v1212
      %v1223 = vpack.c.bf16 %v1215, %v1215
      %v1224 = vpack.c.bf16 %v1216, %v1216
      %v1225 = vpack.c.bf16 %v1217, %v1217
      %v1226 = vpack.c.bf16 %v1218, %v1218
      %v1227 = vpack.c.bf16 %v1219, %v1219
      %v1228 = vpack.c.bf16 %v1220, %v1220
      %v1229 = vpack.c.bf16 %v1221, %v1221
      %v1230 = vpack.c.bf16 %v1222, %v1222
      %vm1231 = vcmask 60416
      %1232 = vst.msk [vmem:[%s204] sm:$0xf] %vm1231, %v1223
      %1233 = vst.msk [vmem:[%s204 + $0x4] sm:$0xf] %vm1231, %v1224
      %1234 = vst.msk [vmem:[%s204 + $0x8] sm:$0xf] %vm1231, %v1225
      %1235 = vst.msk [vmem:[%s204 + $0xc] sm:$0xf] %vm1231, %v1226
      %1236 = vst.msk [vmem:[%s204 + $0x10] sm:$0xf] %vm1231, %v1227
      %1237 = vst.msk [vmem:[%s204 + $0x14] sm:$0xf] %vm1231, %v1228
      %1238 = vst.msk [vmem:[%s204 + $0x18] sm:$0xf] %vm1231, %v1229
      %1239 = vst.msk [vmem:[%s204 + $0x1c] sm:$0xf] %vm1231, %v1230
      %vm1240 = vcmask 64512
      %v1241 = vsel %vm1240, %v1215, 0.0
      %v1242 = vsel %vm1240, %v1216, 0.0
      %v1243 = vadd.f32 %v1241, %v1242
      %v1244 = vsel %vm1240, %v1217, 0.0
      %v1245 = vadd.f32 %v1243, %v1244
      %v1246 = vsel %vm1240, %v1218, 0.0
      %v1247 = vadd.f32 %v1245, %v1246
      %v1248 = vsel %vm1240, %v1219, 0.0
      %v1249 = vadd.f32 %v1247, %v1248
      %v1250 = vsel %vm1240, %v1220, 0.0
      %v1251 = vadd.f32 %v1249, %v1250
      %v1252 = vsel %vm1240, %v1221, 0.0
      %v1253 = vadd.f32 %v1251, %v1252
      %v1254 = vsel %vm1240, %v1222, 0.0
      %v1255 = vadd.f32 %v1253, %v1254
      %v1256 = vrot.slane %v1255, 4
      %v1257 = vadd.f32 %v1255, %v1256
      %v1258 = vrot.slane %v1257, 2
      %v1259 = vadd.f32 %v1257, %v1258
      %v1260 = vrot.slane %v1259, 1
      %v1261 = vadd.f32 %v1259, %v1260
      %v1262 = vmul.f32 %v1261, 0.015625
      %v1263 = vsub.f32 %v1215, %v1262
      %v1264 = vsub.f32 %v1216, %v1262
      %v1265 = vsub.f32 %v1217, %v1262
      %v1266 = vsub.f32 %v1218, %v1262
      %v1267 = vsub.f32 %v1219, %v1262
      %v1268 = vsub.f32 %v1220, %v1262
      %v1269 = vsub.f32 %v1221, %v1262
      %v1270 = vsub.f32 %v1222, %v1262
      %v1271 = vmul.f32 %v1263, %v1263
      %v1272 = vmul.f32 %v1264, %v1264
      %v1273 = vmul.f32 %v1265, %v1265
      %v1274 = vmul.f32 %v1266, %v1266
      %v1275 = vmul.f32 %v1267, %v1267
      %v1276 = vmul.f32 %v1268, %v1268
      %v1277 = vmul.f32 %v1269, %v1269
      %v1278 = vmul.f32 %v1270, %v1270
      %v1279 = vsel %vm1240, %v1271, 0.0
      %v1280 = vsel %vm1240, %v1272, 0.0
      %v1281 = vadd.f32 %v1279, %v1280
      %v1282 = vsel %vm1240, %v1273, 0.0
      %v1283 = vadd.f32 %v1281, %v1282
      %v1284 = vsel %vm1240, %v1274, 0.0
      %v1285 = vadd.f32 %v1283, %v1284
      %v1286 = vsel %vm1240, %v1275, 0.0
      %v1287 = vadd.f32 %v1285, %v1286
      %v1288 = vsel %vm1240, %v1276, 0.0
      %v1289 = vadd.f32 %v1287, %v1288
      %v1290 = vsel %vm1240, %v1277, 0.0
      %v1291 = vadd.f32 %v1289, %v1290
      %v1292 = vsel %vm1240, %v1278, 0.0
      %v1293 = vadd.f32 %v1291, %v1292
      %v1294 = vrot.slane %v1293, 4
      %v1295 = vadd.f32 %v1293, %v1294
      %v1296 = vrot.slane %v1295, 2
      %v1297 = vadd.f32 %v1295, %v1296
      %v1298 = vrot.slane %v1297, 1
      %v1299 = vadd.f32 %v1297, %v1298
      %vm1300 = vcmask 57344
      %1301 = vst.msk [vmem:[%s208] sm:$0x1] %vm1300, %v1262
      %1302 = vst.msk [vmem:[%s208 + $0x1] sm:$0x1] %vm1300, %v1299
      %p1303 = scmp.lt.s32.totalorder %s16, 1
      %s1304 = scalar_select %p1303, %s16, 1
      %s1305 = smul.addr %s1304, 8
      %s1306 = smul.addr %s1305, 4
      %s1307 = scalar_lea.vmem %s3, %s1306
      %p1308 = scmp.lt.s32.totalorder %s16, 1
      %s1309 = scalar_select %p1308, %s16, 1
      %s1310 = smul.addr %s1309, 2
      %s1311 = scalar_lea.vmem %s4, %s1310
      // Predicated region
      $region33: #{unet_down_forward.3} parent=31 // pred_check
        %p1312 = pneg %p102
      $region34: #{unet_down_forward.3} parent=31 // pred_check_branch
        %1314 = sbr.rel (%p1312) target = $region36
      $region35: #{unet_down_forward.3} parent=31 // pred_region
        _
      $region36: #{unet_down_forward.3} parent=31 // pred_fallthru
        _
      // Predicated region
      $region37: #{unet_down_forward.3} parent=31 // pred_check
        %p1315 = pneg %p128
      $region38: #{unet_down_forward.3} parent=31 // pred_check_branch
        %1317 = sbr.rel (%p1315) target = $region40
      $region39: #{unet_down_forward.3} parent=31 // pred_region
        _
      $region40: #{unet_down_forward.3} parent=31 // pred_fallthru
        _
    $region32: #{unet_down_forward.3} parent=5 // pred_fallthru
      _
    %p1318 = scmp.le.s32.totalorder 2, %s11
    // Predicated region
    $region41: #{unet_down_forward.3} parent=5 // pred_check
      %p1319 = pneg %p1318
    $region42: #{unet_down_forward.3} parent=5 // pred_check_branch
      %1321 = sbr.rel (%p1319) target = $region44
    $region43: #{unet_down_forward.3} parent=5 // pred_region
      %s1322 = ssub.s32 %s11, 2
      // Predicated region
      $region45: #{unet_down_forward.3} parent=43 // pred_check
        %p1323 = pneg %p108
      $region46: #{unet_down_forward.3} parent=43 // pred_check_branch
        %1325 = sbr.rel (%p1323) target = $region48
      $region47: #{unet_down_forward.3} parent=43 // pred_region
        %p1326 = scmp.lt.s32.totalorder %s17, 1
        %s1327 = scalar_select %p1326, %s17, 1
        %s1328 = smul.addr %s1327, 8
        %s1329 = smul.addr %s1328, 4
        %s1330 = scalar_lea.vmem %s3, %s1329
      $region48: #{unet_down_forward.3} parent=43 // pred_fallthru
        _
      // Predicated region
      $region49: #{unet_down_forward.3} parent=43 // pred_check
        %p1331 = pneg %p134
      $region50: #{unet_down_forward.3} parent=43 // pred_check_branch
        %1333 = sbr.rel (%p1331) target = $region52
      $region51: #{unet_down_forward.3} parent=43 // pred_region
        %p1334 = scmp.lt.s32.totalorder %s17, 1
        %s1335 = scalar_select %p1334, %s17, 1
        %s1336 = smul.addr %s1335, 2
        %s1337 = scalar_lea.vmem %s4, %s1336
      $region52: #{unet_down_forward.3} parent=43 // pred_fallthru
        _
    $region44: #{unet_down_forward.3} parent=5 // pred_fallthru
      _
  $region6: #{unet_down_forward.3} parent=0 // loop_footer
    %s15 = sadd.s32 1, %s11
  $region7: #{unet_down_forward.3} parent=0 // loop_footer_branch
    %10 = sbr.rel target = $region3
  $region8: #{unet_down_forward.3} parent=0 // loop_exit
    _

// kernel: unet_down_forward.4
$region0: #{unet_down_forward.4}
  #allocation0 [shape = 'u32[]', space=smem, size = 0x4, offset = 0x4, fixed_abs, tag = 'smem constant byte address 0x4 - core index']
  #allocation1 [shape = 'u32[144,128]{1,0:T(1,128)}', space=vmem, size = 0x12000, scoped, tag = 'internal scratch']
  #allocation2 [shape = 'f32[10,10,8]{2,1,0:T(8,128)}', space=vmem, size = 0x14000, scoped, tag = 'scratch operand']
  %s0 = inlined_call_operand.vmem [shape: bf16[2,8,8,8], index: 0, kind: input, shape index: {}]
  %s1 = inlined_call_operand.vmem [shape: f32[1,1,8], index: 1, kind: input, shape index: {}]
  %s2 = inlined_call_operand.vmem [shape: f32[1,1,8], index: 2, kind: input, shape index: {}]
  %s3 = inlined_call_operand.vmem [shape: bf16[3,3,8,8], index: 3, kind: input, shape index: {}]
  %s4 = inlined_call_operand.vmem [shape: f32[1,8], index: 4, kind: input, shape index: {}]
  %s5 = inlined_call_operand.vmem [shape: bf16[2,8,8,8], index: 5, kind: output, shape index: {0}]
  %s6 = inlined_call_operand.vmem [shape: f32[2,2,8], index: 6, kind: output, shape index: {1}]
  %7 = xla_tuple %s5, %s6
  %s8 = sld [smem:[#allocation0]]
  $region61: #{unet_down_forward.4} parent=0
    _
  %s10 = ssub.s32 1, %s8
  %s11 = scalar_select 0, %s10, %s8
  loop: start=0, step=1, limit=4
  $region2: #{unet_down_forward.4} parent=0 // loop_pre_header
    _
  $region3: #{unet_down_forward.4} parent=0 // loop_header
    %s13 = sphi 0, %s17
    %p14 = scmp.ge.s32.totalorder %s13, 4
    %s23 = sphi 0, %s25
    %s26 = sphi 0, %s23
    %s27 = sphi 0, %s26
    %s43 = sphi 0, %s27
    %s47 = sphi 0, %s47
    %s49 = sphi 0, %s47
    %s50 = sphi 0, %s49
    %s64 = sphi 0, %s50
    %s68 = sphi 0, %s68
    %s70 = sphi 0, %s68
    %s71 = sphi 0, %s70
    %s85 = sphi 0, %s71
    %s89 = sphi 0, %s89
    %s91 = sphi 0, %s89
    %s92 = sphi 0, %s91
    %s106 = sphi 0, %s92
    %s110 = sphi 0, %s110
    %s112 = sphi 0, %s110
    %s113 = sphi 0, %s112
    %s127 = sphi 0, %s113
    %s133 = sphi 0, %s135
    %s136 = sphi 0, %s133
    %s137 = sphi 0, %s136
    %s153 = sphi 0, %s137
    %s159 = sphi 0, %s161
    %s162 = sphi 0, %s159
    %s163 = sphi 0, %s162
    %s179 = sphi 0, %s163
  $region4: #{unet_down_forward.4} parent=0 // loop_header_branch
    %16 = sbr.rel (%p14) target = $region8
  $region5: #{unet_down_forward.4} parent=0 // loop_body
    %s18 = ssub.s32 %s13, 1
    %s19 = ssub.s32 %s13, 2
    %s20 = sadd.s32 %s13, 1
    %s21 = ssub.s32 %s13, %s20
    %p22 = scmp.eq.s32.totalorder %s21, 0
    %s24 = sadd.s32 %s23, 1
    %s25 = scalar_select %p22, %s23, %s24
    %p28 = pneg %p22
    %p29 = scmp.eq.s32.totalorder %s13, 1
    %p30 = por %p28, %p29
    %p31 = scmp.ne.s32.totalorder %s23, %s26
    %p32 = scmp.eq.s32.totalorder %s13, 0
    %p33 = por %p31, %p32
    %p34 = scmp.ne.s32.totalorder %s23, %s26
    %p35 = scmp.eq.s32.totalorder %s18, 1
    %p36 = por %p34, %p35
    %p37 = scmp.ne.s32.totalorder %s26, %s27
    %p38 = scmp.eq.s32.totalorder %s18, 0
    %p39 = por %p37, %p38
    %p40 = scmp.ne.s32.totalorder %s26, %s27
    %p41 = scmp.eq.s32.totalorder %s19, 1
    %p42 = por %p40, %p41
    %p44 = scmp.ne.s32.totalorder %s27, %s43
    %p45 = scmp.eq.s32.totalorder %s19, 0
    %p46 = por %p44, %p45
    %s48 = sadd.s32 %s47, 1
    %p51 = scmp.eq.s32.totalorder %s13, 1
    %p52 = scmp.ne.s32.totalorder %s47, %s49
    %p53 = scmp.eq.s32.totalorder %s13, 0
    %p54 = por %p52, %p53
    %p55 = scmp.ne.s32.totalorder %s47, %s49
    %p56 = scmp.eq.s32.totalorder %s18, 1
    %p57 = por %p55, %p56
    %p58 = scmp.ne.s32.totalorder %s49, %s50
    %p59 = scmp.eq.s32.totalorder %s18, 0
    %p60 = por %p58, %p59
    %p61 = scmp.ne.s32.totalorder %s49, %s50
    %p62 = scmp.eq.s32.totalorder %s19, 1
    %p63 = por %p61, %p62
    %p65 = scmp.ne.s32.totalorder %s50, %s64
    %p66 = scmp.eq.s32.totalorder %s19, 0
    %p67 = por %p65, %p66
    %s69 = sadd.s32 %s68, 1
    %p72 = scmp.eq.s32.totalorder %s13, 1
    %p73 = scmp.ne.s32.totalorder %s68, %s70
    %p74 = scmp.eq.s32.totalorder %s13, 0
    %p75 = por %p73, %p74
    %p76 = scmp.ne.s32.totalorder %s68, %s70
    %p77 = scmp.eq.s32.totalorder %s18, 1
    %p78 = por %p76, %p77
    %p79 = scmp.ne.s32.totalorder %s70, %s71
    %p80 = scmp.eq.s32.totalorder %s18, 0
    %p81 = por %p79, %p80
    %p82 = scmp.ne.s32.totalorder %s70, %s71
    %p83 = scmp.eq.s32.totalorder %s19, 1
    %p84 = por %p82, %p83
    %p86 = scmp.ne.s32.totalorder %s71, %s85
    %p87 = scmp.eq.s32.totalorder %s19, 0
    %p88 = por %p86, %p87
    %s90 = sadd.s32 %s89, 1
    %p93 = scmp.eq.s32.totalorder %s13, 1
    %p94 = scmp.ne.s32.totalorder %s89, %s91
    %p95 = scmp.eq.s32.totalorder %s13, 0
    %p96 = por %p94, %p95
    %p97 = scmp.ne.s32.totalorder %s89, %s91
    %p98 = scmp.eq.s32.totalorder %s18, 1
    %p99 = por %p97, %p98
    %p100 = scmp.ne.s32.totalorder %s91, %s92
    %p101 = scmp.eq.s32.totalorder %s18, 0
    %p102 = por %p100, %p101
    %p103 = scmp.ne.s32.totalorder %s91, %s92
    %p104 = scmp.eq.s32.totalorder %s19, 1
    %p105 = por %p103, %p104
    %p107 = scmp.ne.s32.totalorder %s92, %s106
    %p108 = scmp.eq.s32.totalorder %s19, 0
    %p109 = por %p107, %p108
    %s111 = sadd.s32 %s110, 1
    %p114 = scmp.eq.s32.totalorder %s13, 1
    %p115 = scmp.ne.s32.totalorder %s110, %s112
    %p116 = scmp.eq.s32.totalorder %s13, 0
    %p117 = por %p115, %p116
    %p118 = scmp.ne.s32.totalorder %s110, %s112
    %p119 = scmp.eq.s32.totalorder %s18, 1
    %p120 = por %p118, %p119
    %p121 = scmp.ne.s32.totalorder %s112, %s113
    %p122 = scmp.eq.s32.totalorder %s18, 0
    %p123 = por %p121, %p122
    %p124 = scmp.ne.s32.totalorder %s112, %s113
    %p125 = scmp.eq.s32.totalorder %s19, 1
    %p126 = por %p124, %p125
    %p128 = scmp.ne.s32.totalorder %s113, %s127
    %p129 = scmp.eq.s32.totalorder %s19, 0
    %p130 = por %p128, %p129
    %s131 = ssub.s32 %s13, %s20
    %p132 = scmp.eq.s32.totalorder %s131, 0
    %s134 = sadd.s32 %s133, 1
    %s135 = scalar_select %p132, %s133, %s134
    %p138 = pneg %p132
    %p139 = scmp.eq.s32.totalorder %s13, 1
    %p140 = por %p138, %p139
    %p141 = scmp.ne.s32.totalorder %s133, %s136
    %p142 = scmp.eq.s32.totalorder %s13, 0
    %p143 = por %p141, %p142
    %p144 = scmp.ne.s32.totalorder %s133, %s136
    %p145 = scmp.eq.s32.totalorder %s18, 1
    %p146 = por %p144, %p145
    %p147 = scmp.ne.s32.totalorder %s136, %s137
    %p148 = scmp.eq.s32.totalorder %s18, 0
    %p149 = por %p147, %p148
    %p150 = scmp.ne.s32.totalorder %s136, %s137
    %p151 = scmp.eq.s32.totalorder %s19, 1
    %p152 = por %p150, %p151
    %p154 = scmp.ne.s32.totalorder %s137, %s153
    %p155 = scmp.eq.s32.totalorder %s19, 0
    %p156 = por %p154, %p155
    %s157 = ssub.s32 %s13, %s20
    %p158 = scmp.eq.s32.totalorder %s157, 0
    %s160 = sadd.s32 %s159, 1
    %s161 = scalar_select %p158, %s159, %s160
    %p164 = pneg %p158
    %p165 = scmp.eq.s32.totalorder %s13, 1
    %p166 = por %p164, %p165
    %p167 = scmp.ne.s32.totalorder %s159, %s162
    %p168 = scmp.eq.s32.totalorder %s13, 0
    %p169 = por %p167, %p168
    %p170 = scmp.ne.s32.totalorder %s159, %s162
    %p171 = scmp.eq.s32.totalorder %s18, 1
    %p172 = por %p170, %p171
    %p173 = scmp.ne.s32.totalorder %s162, %s163
    %p174 = scmp.eq.s32.totalorder %s18, 0
    %p175 = por %p173, %p174
    %p176 = scmp.ne.s32.totalorder %s162, %s163
    %p177 = scmp.eq.s32.totalorder %s19, 1
    %p178 = por %p176, %p177
    %p180 = scmp.ne.s32.totalorder %s163, %s179
    %p181 = scmp.eq.s32.totalorder %s19, 0
    %p182 = por %p180, %p181
    %p183 = scmp.le.s32.totalorder 1, %s13
    %p184 = scmp.lt.s32.totalorder %s13, 3
    %p185 = pnand %p183, %p184
    %p186 = pneg %p185
    // Predicated region
    $region9: #{unet_down_forward.4} parent=5 // pred_check
      _
    $region10: #{unet_down_forward.4} parent=5 // pred_check_branch
      %188 = sbr.rel (%p185) target = $region12
    $region11: #{unet_down_forward.4} parent=5 // pred_region
      %s189 = ssub.s32 %s13, 1
      // Predicated region
      $region13: #{unet_down_forward.4} parent=11 // pred_check
        %p190 = pneg %p60
      $region14: #{unet_down_forward.4} parent=11 // pred_check_branch
        %192 = sbr.rel (%p190) target = $region16
      $region15: #{unet_down_forward.4} parent=11 // pred_region
        _
      $region16: #{unet_down_forward.4} parent=11 // pred_fallthru
        _
      // Predicated region
      $region17: #{unet_down_forward.4} parent=11 // pred_check
        %p193 = pneg %p81
      $region18: #{unet_down_forward.4} parent=11 // pred_check_branch
        %195 = sbr.rel (%p193) target = $region20
      $region19: #{unet_down_forward.4} parent=11 // pred_region
        _
      $region20: #{unet_down_forward.4} parent=11 // pred_fallthru
        _
      // Predicated region
      $region21: #{unet_down_forward.4} parent=11 // pred_check
        %p196 = pneg %p102
      $region22: #{unet_down_forward.4} parent=11 // pred_check_branch
        %198 = sbr.rel (%p196) target = $region24
      $region23: #{unet_down_forward.4} parent=11 // pred_region
        _
      $region24: #{unet_down_forward.4} parent=11 // pred_fallthru
        _
      // Predicated region
      $region25: #{unet_down_forward.4} parent=11 // pred_check
        %p199 = pneg %p123
      $region26: #{unet_down_forward.4} parent=11 // pred_check_branch
        %201 = sbr.rel (%p199) target = $region28
      $region27: #{unet_down_forward.4} parent=11 // pred_region
        _
      $region28: #{unet_down_forward.4} parent=11 // pred_fallthru
        _
    $region12: #{unet_down_forward.4} parent=5 // pred_fallthru
      _
    %p202 = scmp.lt.s32.totalorder %s13, 2
    // Predicated region
    $region29: #{unet_down_forward.4} parent=5 // pred_check
      %p203 = pneg %p202
    $region30: #{unet_down_forward.4} parent=5 // pred_check_branch
      %205 = sbr.rel (%p203) target = $region32
    $region31: #{unet_down_forward.4} parent=5 // pred_region
      // Predicated region
      $region33: #{unet_down_forward.4} parent=31 // pred_check
        %p206 = pneg %p33
      $region34: #{unet_down_forward.4} parent=31 // pred_check_branch
        %208 = sbr.rel (%p206) target = $region36
      $region35: #{unet_down_forward.4} parent=31 // pred_region
        %p209 = scmp.lt.s32.totalorder %s13, 1
        %s210 = scalar_select %p209, %s13, 1
        %s211 = smul.addr %s210, 8
        %s212 = smul.addr %s211, 4
        %s213 = scalar_lea.vmem %s0, %s212
      $region36: #{unet_down_forward.4} parent=31 // pred_fallthru
        _
    $region32: #{unet_down_forward.4} parent=5 // pred_fallthru
      _
    %p214 = scmp.le.s32.totalorder 1, %s13
    %p215 = scmp.lt.s32.totalorder %s13, 3
    %p216 = pnand %p214, %p215
    %p217 = pneg %p216
    // Predicated region
    $region37: #{unet_down_forward.4} parent=5 // pred_check
      _
    $region38: #{unet_down_forward.4} parent=5 // pred_check_branch
      %219 = sbr.rel (%p216) target = $region40
    $region39: #{unet_down_forward.4} parent=5 // pred_region
      %s220 = ssub.s32 %s13, 1
      %p221 = scmp.lt.s32.totalorder %s18, 1
      %s222 = scalar_select %p221, %s18, 1
      %s223 = smul.addr %s222, 8
      %s224 = smul.addr %s223, 4
      %s225 = scalar_lea.vmem %s0, %s224
      %p226 = pneg %p39
      %p227 = pneg %p36
      %p228 = pneg %p60
      %p229 = pneg %p57
      %p230 = pneg %p81
      %p231 = pneg %p78
      %p232 = pneg %p102
      %p233 = pneg %p99
      %p234 = pneg %p123
      %p235 = pneg %p120
      %p236 = pneg %p149
      %p237 = pneg %p146
      %p238 = scmp.lt.s32.totalorder %s18, 1
      %s239 = scalar_select %p238, %s18, 1
      %s240 = smul.addr %s239, 8
      %s241 = smul.addr %s240, 4
      %s242 = scalar_lea.vmem %s5, %s241
      %p243 = pneg %p175
      %p244 = pneg %p172
      %p245 = scmp.lt.s32.totalorder %s18, 1
      %s246 = scalar_select %p245, %s18, 1
      %s247 = smul.addr %s246, 2
      %s248 = scalar_lea.vmem %s6, %s247
      %p249 = scmp.lt.s32.totalorder %s18, 1
      %s250 = scalar_select %p249, %s18, 1
      %s251 = smul.addr %s250, 8
      %s252 = smul.addr %s251, 4
      %s253 = scalar_lea.vmem %s0, %s252
      %p254 = scmp.lt.s32.totalorder %s18, 1
      %s255 = scalar_select %p254, %s18, 1
      %s256 = smul.addr %s255, 8
      %s257 = smul.addr %s256, 4
      %s258 = scalar_lea.vmem %s5, %s257
      %p259 = scmp.lt.s32.totalorder %s18, 1
      %s260 = scalar_select %p259, %s18, 1
      %s261 = smul.addr %s260, 2
      %s262 = scalar_lea.vmem %s6, %s261
      %v264 = vld [vmem:[%s253] sm:$0xf]
      %v265 = vld [vmem:[%s253 + $0x4] sm:$0xf]
      %v266 = vld [vmem:[%s253 + $0x8] sm:$0xf]
      %v267 = vld [vmem:[%s253 + $0xc] sm:$0xf]
      %v268 = vld [vmem:[%s253 + $0x10] sm:$0xf]
      %v269 = vld [vmem:[%s253 + $0x14] sm:$0xf]
      %v270 = vld [vmem:[%s253 + $0x18] sm:$0xf]
      %v271 = vld [vmem:[%s253 + $0x1c] sm:$0xf]
      %v272 = vunpack.c.l.bf16 %v264
      %v273 = vunpack.c.l.bf16 %v265
      %v274 = vunpack.c.l.bf16 %v266
      %v275 = vunpack.c.l.bf16 %v267
      %v276 = vunpack.c.l.bf16 %v268
      %v277 = vunpack.c.l.bf16 %v269
      %v278 = vunpack.c.l.bf16 %v270
      %v279 = vunpack.c.l.bf16 %v271
      %v280 = vld [vmem:[%s1] sm:$0x1]
      %v282 = vlaneseq
      %v283 = vshrl.u32 %v282, 7
      %v284 = vsub.s32 0, %v283
      %v285 = vrot.slane %v280, %v284
      %v287 = vmul.f32 %v272, %v285
      %v288 = vmul.f32 %v273, %v285
      %v289 = vmul.f32 %v274, %v285
      %v290 = vmul.f32 %v275, %v285
      %v291 = vmul.f32 %v276, %v285
      %v292 = vmul.f32 %v277, %v285
      %v293 = vmul.f32 %v278, %v285
      %v294 = vmul.f32 %v279, %v285
      %v295 = vld [vmem:[%s2] sm:$0x1]
      %v297 = vlaneseq
      %v298 = vshrl.u32 %v297, 7
      %v299 = vsub.s32 0, %v298
      %v300 = vrot.slane %v295, %v299
      %v302 = vadd.f32 %v287, %v300
      %v303 = vadd.f32 %v288, %v300
      %v304 = vadd.f32 %v289, %v300
      %v305 = vadd.f32 %v290, %v300
      %v306 = vadd.f32 %v291, %v300
      %v307 = vadd.f32 %v292, %v300
      %v308 = vadd.f32 %v293, %v300
      %v309 = vadd.f32 %v294, %v300
      %v310 = vmax.f32 %v302, 0.0
      %v311 = vmax.f32 %v303, 0.0
      %v312 = vmax.f32 %v304, 0.0
      %v313 = vmax.f32 %v305, 0.0
      %v314 = vmax.f32 %v306, 0.0
      %v315 = vmax.f32 %v307, 0.0
      %v316 = vmax.f32 %v308, 0.0
      %v317 = vmax.f32 %v309, 0.0
      %vm318 = vcmask 64512
      %319 = vst.msk [vmem:[#allocation2] sm:$0xff] %vm318, 0.0
      %vm320 = vcmask 58368
      %321 = vst.msk [vmem:[#allocation2 + $0x8] sm:$0x3] %vm320, 0.0
      %322 = vst.msk [vmem:[#allocation2 + $0x10] sm:$0xff] %vm318, 0.0
      %323 = vst.msk [vmem:[#allocation2 + $0x18] sm:$0x3] %vm320, 0.0
      %324 = vst.msk [vmem:[#allocation2 + $0x20] sm:$0xff] %vm318, 0.0
      %325 = vst.msk [vmem:[#allocation2 + $0x28] sm:$0x3] %vm320, 0.0
      %326 = vst.msk [vmem:[#allocation2 + $0x30] sm:$0xff] %vm318, 0.0
      %327 = vst.msk [vmem:[#allocation2 + $0x38] sm:$0x3] %vm320, 0.0
      %328 = vst.msk [vmem:[#allocation2 + $0x40] sm:$0xff] %vm318, 0.0
      %329 = vst.msk [vmem:[#allocation2 + $0x48] sm:$0x3] %vm320, 0.0
      %330 = vst.msk [vmem:[#allocation2 + $0x50] sm:$0xff] %vm318, 0.0
      %331 = vst.msk [vmem:[#allocation2 + $0x58] sm:$0x3] %vm320, 0.0
      %332 = vst.msk [vmem:[#allocation2 + $0x60] sm:$0xff] %vm318, 0.0
      %333 = vst.msk [vmem:[#allocation2 + $0x68] sm:$0x3] %vm320, 0.0
      %334 = vst.msk [vmem:[#allocation2 + $0x70] sm:$0xff] %vm318, 0.0
      %335 = vst.msk [vmem:[#allocation2 + $0x78] sm:$0x3] %vm320, 0.0
      %336 = vst.msk [vmem:[#allocation2 + $0x80] sm:$0xff] %vm318, 0.0
      %337 = vst.msk [vmem:[#allocation2 + $0x88] sm:$0x3] %vm320, 0.0
      %338 = vst.msk [vmem:[#allocation2 + $0x90] sm:$0xff] %vm318, 0.0
      %339 = vst.msk [vmem:[#allocation2 + $0x98] sm:$0x3] %vm320, 0.0
      %s340 = scalar_lea.vmem [#allocation2], 16
      %341 = vst.msk [vmem:[%s340 + $0x1] sm:$0xff] %vm318, %v310
      %342 = vst.msk [vmem:[%s340 + $0x11] sm:$0xff] %vm318, %v311
      %343 = vst.msk [vmem:[%s340 + $0x21] sm:$0xff] %vm318, %v312
      %344 = vst.msk [vmem:[%s340 + $0x31] sm:$0xff] %vm318, %v313
      %345 = vst.msk [vmem:[%s340 + $0x41] sm:$0xff] %vm318, %v314
      %346 = vst.msk [vmem:[%s340 + $0x51] sm:$0xff] %vm318, %v315
      %347 = vst.msk [vmem:[%s340 + $0x61] sm:$0xff] %vm318, %v316
      %348 = vst.msk [vmem:[%s340 + $0x71] sm:$0xff] %vm318, %v317
      %v349 = vld [vmem:[%s3] sm:$0xf]
      %v350 = vld [vmem:[%s3 + $0x4] sm:$0xf]
      %v351 = vld [vmem:[%s3 + $0x8] sm:$0xf]
      %v352 = vld [vmem:[%s3 + $0xc] sm:$0xf]
      %v353 = vld [vmem:[%s3 + $0x10] sm:$0xf]
      %v354 = vld [vmem:[%s3 + $0x14] sm:$0xf]
      %v355 = vld [vmem:[%s3 + $0x18] sm:$0xf]
      %v356 = vld [vmem:[%s3 + $0x1c] sm:$0xf]
      %v357 = vld [vmem:[%s3 + $0x20] sm:$0xf]
      %v358 = vld [vmem:[%s4] sm:$0x1]
      %v360 = vlaneseq
      %v361 = vshrl.u32 %v360, 7
      %v362 = vsub.s32 0, %v361
      %v363 = vrot.slane %v358, %v362
      %v365 = vld [vmem:[#allocation2] sm:$0xff]
      %v366 = vld [vmem:[#allocation2 + $0x10] sm:$0xff]
      %v367 = vld [vmem:[#allocation2 + $0x20] sm:$0xff]
      %v368 = vld [vmem:[#allocation2 + $0x30] sm:$0xff]
      %v369 = vld [vmem:[#allocation2 + $0x40] sm:$0xff]
      %v370 = vld [vmem:[#allocation2 + $0x50] sm:$0xff]
      %v371 = vld [vmem:[#allocation2 + $0x60] sm:$0xff]
      %v372 = vld [vmem:[#allocation2 + $0x70] sm:$0xff]
      %v373 = vpack.c.bf16 %v366, %v365
      %v374 = vpack.c.bf16 %v368, %v367
      %v375 = vpack.c.bf16 %v370, %v369
      %v376 = vpack.c.bf16 %v372, %v371
      %v378 = vsel %vm318, %v373, 0
      %v381 = vsel %vm318, %v374, 0
      %v384 = vsel %vm318, %v375, 0
      %v387 = vsel %vm318, %v376, 0
      %vm389 = vcmask 1043456
      %v391 = vsel %vm389, %v349, 0
      %393 = vmatprep.subr.bf16.mxu0 0
      %394 = vmatpush1.bf16.msra.mxu0 %v391
      %395 = vmatprep.subr.bf16.mxu0 0
      %396 = vmatpush1.bf16.msra.mxu0 0
      %397 = vmatprep.subr.bf16.mxu0 0
      %398 = vmatpush1.bf16.msra.mxu0 0
      %399 = vmatprep.subr.bf16.mxu0 0
      %400 = vmatpush1.bf16.msra.mxu0 0
      %401 = vmatprep.subr.bf16.mxu0 0
      %402 = vmatpush1.bf16.msra.mxu0 0
      %403 = vmatprep.subr.bf16.mxu0 0
      %404 = vmatpush1.bf16.msra.mxu0 0
      %405 = vmatprep.subr.bf16.mxu0 0
      %406 = vmatpush1.bf16.msra.mxu0 0
      %407 = vmatprep.subr.bf16.mxu0 0
      %408 = vmatpush1.bf16.msra.mxu0 0
      %409 = vmatprep.subr.bf16.mxu0 0
      %410 = vmatpush1.bf16.msra.mxu0 0
      %411 = vmatprep.subr.bf16.mxu0 0
      %412 = vmatpush1.bf16.msra.mxu0 0
      %413 = vmatprep.subr.bf16.mxu0 0
      %414 = vmatpush1.bf16.msra.mxu0 0
      %415 = vmatprep.subr.bf16.mxu0 0
      %416 = vmatpush1.bf16.msra.mxu0 0
      %417 = vmatprep.subr.bf16.mxu0 0
      %418 = vmatpush1.bf16.msra.mxu0 0
      %419 = vmatprep.subr.bf16.mxu0 0
      %420 = vmatpush1.bf16.msra.mxu0 0
      %421 = vmatprep.subr.bf16.mxu0 0
      %422 = vmatpush1.bf16.msra.mxu0 0
      %423 = vmatprep.subr.bf16.mxu0 0
      %424 = vmatpush1.bf16.msra.mxu0 0
      %425 = vmatprep.mubr.bf16.mxu0 0
      %426 = vmatmul.mubr.bf16.gmra.mrb[0].mxu0 %v378
      %v427 = vpop.f32.mrb[0].mxu0
      %v428 = vadd.f32 0.0, %v427
      %v429 = vpop.f32.mrb[0].mxu0
      %v430 = vpop.f32.mrb[0].mxu0
      %v431 = vadd.f32 0.0, %v430
      %v432 = vpop.f32.mrb[0].mxu0
      %433 = vmatprep.mubr.bf16.mxu0 0
      %434 = vmatmul.mubr.bf16.gmra.mrb[0].mxu0 %v381
      %v435 = vpop.f32.mrb[0].mxu0
      %v436 = vadd.f32 0.0, %v435
      %v437 = vpop.f32.mrb[0].mxu0
      %v438 = vpop.f32.mrb[0].mxu0
      %v439 = vadd.f32 0.0, %v438
      %v440 = vpop.f32.mrb[0].mxu0
      %441 = vmatprep.mubr.bf16.mxu0 0
      %442 = vmatmul.mubr.bf16.gmra.mrb[0].mxu0 %v384
      %v443 = vpop.f32.mrb[0].mxu0
      %v444 = vadd.f32 0.0, %v443
      %v445 = vpop.f32.mrb[0].mxu0
      %v446 = vpop.f32.mrb[0].mxu0
      %v447 = vadd.f32 0.0, %v446
      %v448 = vpop.f32.mrb[0].mxu0
      %449 = vmatprep.mubr.bf16.mxu0 0
      %450 = vmatmul.mubr.bf16.gmra.mrb[0].mxu0 %v387
      %v451 = vpop.f32.mrb[0].mxu0
      %v452 = vadd.f32 0.0, %v451
      %v453 = vpop.f32.mrb[0].mxu0
      %v454 = vpop.f32.mrb[0].mxu0
      %v455 = vadd.f32 0.0, %v454
      %v456 = vpop.f32.mrb[0].mxu0
      %457 = vdwg.mxu0
      %v458 = vadd.f32 %v363, %v428
      %v459 = vadd.f32 %v363, %v431
      %v460 = vadd.f32 %v363, %v436
      %v461 = vadd.f32 %v363, %v439
      %v462 = vadd.f32 %v363, %v444
      %v463 = vadd.f32 %v363, %v447
      %v464 = vadd.f32 %v363, %v452
      %v465 = vadd.f32 %v363, %v455
      %v466 = vld [vmem:[#allocation2 + $0x1] sm:$0xff]
      %v467 = vld [vmem:[#allocation2 + $0x11] sm:$0xff]
      %v468 = vld [vmem:[#allocation2 + $0x21] sm:$0xff]
      %v469 = vld [vmem:[#allocation2 + $0x31] sm:$0xff]
      %v470 = vld [vmem:[#allocation2 + $0x41] sm:$0xff]
      %v471 = vld [vmem:[#allocation2 + $0x51] sm:$0xff]
      %v472 = vld [vmem:[#allocation2 + $0x61] sm:$0xff]
      %v473 = vld [vmem:[#allocation2 + $0x71] sm:$0xff]
      %v474 = vpack.c.bf16 %v467, %v466
      %v475 = vpack.c.bf16 %v469, %v468
      %v476 = vpack.c.bf16 %v471, %v470
      %v477 = vpack.c.bf16 %v473, %v472
      %v479 = vsel %vm318, %v474, 0
      %v482 = vsel %vm318, %v475, 0
      %v485 = vsel %vm318, %v476, 0
      %v488 = vsel %vm318, %v477, 0
      %v491 = vsel %vm389, %v350, 0
      %493 = vmatprep.subr.bf16.mxu0 0
      %494 = vmatpush1.bf16.msra.mxu0 %v491
      %495 = vmatprep.subr.bf16.mxu0 0
      %496 = vmatpush1.bf16.msra.mxu0 0
      %497 = vmatprep.subr.bf16.mxu0 0
      %498 = vmatpush1.bf16.msra.mxu0 0
      %499 = vmatprep.subr.bf16.mxu0 0
      %500 = vmatpush1.bf16.msra.mxu0 0
      %501 = vmatprep.subr.bf16.mxu0 0
      %502 = vmatpush1.bf16.msra.mxu0 0
      %503 = vmatprep.subr.bf16.mxu0 0
      %504 = vmatpush1.bf16.msra.mxu0 0
      %505 = vmatprep.subr.bf16.mxu0 0
      %506 = vmatpush1.bf16.msra.mxu0 0
      %507 = vmatprep.subr.bf16.mxu0 0
      %508 = vmatpush1.bf16.msra.mxu0 0
      %509 = vmatprep.subr.bf16.mxu0 0
      %510 = vmatpush1.bf16.msra.mxu0 0
      %511 = vmatprep.subr.bf16.mxu0 0
      %512 = vmatpush1.bf16.msra.mxu0 0
      %513 = vmatprep.subr.bf16.mxu0 0
      %514 = vmatpush1.bf16.msra.mxu0 0
      %515 = vmatprep.subr.bf16.mxu0 0
      %516 = vmatpush1.bf16.msra.mxu0 0
      %517 = vmatprep.subr.bf16.mxu0 0
      %518 = vmatpush1.bf16.msra.mxu0 0
      %519 = vmatprep.subr.bf16.mxu0 0
      %520 = vmatpush1.bf16.msra.mxu0 0
      %521 = vmatprep.subr.bf16.mxu0 0
      %522 = vmatpush1.bf16.msra.mxu0 0
      %523 = vmatprep.subr.bf16.mxu0 0
      %524 = vmatpush1.bf16.msra.mxu0 0
      %525 = vmatprep.mubr.bf16.mxu0 0
      %526 = vmatmul.mubr.bf16.gmra.mrb[0].mxu0 %v479
      %v527 = vpop.f32.mrb[0].mxu0
      %v528 = vadd.f32 0.0, %v527
      %v529 = vpop.f32.mrb[0].mxu0
      %v530 = vpop.f32.mrb[0].mxu0
      %v531 = vadd.f32 0.0, %v530
      %v532 = vpop.f32.mrb[0].mxu0
      %533 = vmatprep.mubr.bf16.mxu0 0
      %534 = vmatmul.mubr.bf16.gmra.mrb[0].mxu0 %v482
      %v535 = vpop.f32.mrb[0].mxu0
      %v536 = vadd.f32 0.0, %v535
      %v537 = vpop.f32.mrb[0].mxu0
      %v538 = vpop.f32.mrb[0].mxu0
      %v539 = vadd.f32 0.0, %v538
      %v540 = vpop.f32.mrb[0].mxu0
      %541 = vmatprep.mubr.bf16.mxu0 0
      %542 = vmatmul.mubr.bf16.gmra.mrb[0].mxu0 %v485
      %v543 = vpop.f32.mrb[0].mxu0
      %v544 = vadd.f32 0.0, %v543
      %v545 = vpop.f32.mrb[0].mxu0
      %v546 = vpop.f32.mrb[0].mxu0
      %v547 = vadd.f32 0.0, %v546
      %v548 = vpop.f32.mrb[0].mxu0
      %549 = vmatprep.mubr.bf16.mxu0 0
      %550 = vmatmul.mubr.bf16.gmra.mrb[0].mxu0 %v488
      %v551 = vpop.f32.mrb[0].mxu0
      %v552 = vadd.f32 0.0, %v551
      %v553 = vpop.f32.mrb[0].mxu0
      %v554 = vpop.f32.mrb[0].mxu0
      %v555 = vadd.f32 0.0, %v554
      %v556 = vpop.f32.mrb[0].mxu0
      %557 = vdwg.mxu0
      %v558 = vadd.f32 %v458, %v528
      %v559 = vadd.f32 %v459, %v531
      %v560 = vadd.f32 %v460, %v536
      %v561 = vadd.f32 %v461, %v539
      %v562 = vadd.f32 %v462, %v544
      %v563 = vadd.f32 %v463, %v547
      %v564 = vadd.f32 %v464, %v552
      %v565 = vadd.f32 %v465, %v555
      %v566 = vld [vmem:[#allocation2 + $0x2] sm:$0xff]
      %v567 = vld [vmem:[#allocation2 + $0x12] sm:$0xff]
      %v568 = vld [vmem:[#allocation2 + $0x22] sm:$0xff]
      %v569 = vld [vmem:[#allocation2 + $0x32] sm:$0xff]
      %v570 = vld [vmem:[#allocation2 + $0x42] sm:$0xff]
      %v571 = vld [vmem:[#allocation2 + $0x52] sm:$0xff]
      %v572 = vld [vmem:[#allocation2 + $0x62] sm:$0xff]
      %v573 = vld [vmem:[#allocation2 + $0x72] sm:$0xff]
      %v574 = vpack.c.bf16 %v567, %v566
      %v575 = vpack.c.bf16 %v569, %v568
      %v576 = vpack.c.bf16 %v571, %v570
      %v577 = vpack.c.bf16 %v573, %v572
      %v579 = vsel %vm318, %v574, 0
      %v582 = vsel %vm318, %v575, 0
      %v585 = vsel %vm318, %v576, 0
      %v588 = vsel %vm318, %v577, 0
      %v591 = vsel %vm389, %v351, 0
      %593 = vmatprep.subr.bf16.mxu0 0
      %594 = vmatpush1.bf16.msra.mxu0 %v591
      %595 = vmatprep.subr.bf16.mxu0 0
      %596 = vmatpush1.bf16.msra.mxu0 0
      %597 = vmatprep.subr.bf16.mxu0 0
      %598 = vmatpush1.bf16.msra.mxu0 0
      %599 = vmatprep.subr.bf16.mxu0 0
      %600 = vmatpush1.bf16.msra.mxu0 0
      %601 = vmatprep.subr.bf16.mxu0 0
      %602 = vmatpush1.bf16.msra.mxu0 0
      %603 = vmatprep.subr.bf16.mxu0 0
      %604 = vmatpush1.bf16.msra.mxu0 0
      %605 = vmatprep.subr.bf16.mxu0 0
      %606 = vmatpush1.bf16.msra.mxu0 0
      %607 = vmatprep.subr.bf16.mxu0 0
      %608 = vmatpush1.bf16.msra.mxu0 0
      %609 = vmatprep.subr.bf16.mxu0 0
      %610 = vmatpush1.bf16.msra.mxu0 0
      %611 = vmatprep.subr.bf16.mxu0 0
      %612 = vmatpush1.bf16.msra.mxu0 0
      %613 = vmatprep.subr.bf16.mxu0 0
      %614 = vmatpush1.bf16.msra.mxu0 0
      %615 = vmatprep.subr.bf16.mxu0 0
      %616 = vmatpush1.bf16.msra.mxu0 0
      %617 = vmatprep.subr.bf16.mxu0 0
      %618 = vmatpush1.bf16.msra.mxu0 0
      %619 = vmatprep.subr.bf16.mxu0 0
      %620 = vmatpush1.bf16.msra.mxu0 0
      %621 = vmatprep.subr.bf16.mxu0 0
      %622 = vmatpush1.bf16.msra.mxu0 0
      %623 = vmatprep.subr.bf16.mxu0 0
      %624 = vmatpush1.bf16.msra.mxu0 0
      %625 = vmatprep.mubr.bf16.mxu0 0
      %626 = vmatmul.mubr.bf16.gmra.mrb[0].mxu0 %v579
      %v627 = vpop.f32.mrb[0].mxu0
      %v628 = vadd.f32 0.0, %v627
      %v629 = vpop.f32.mrb[0].mxu0
      %v630 = vpop.f32.mrb[0].mxu0
      %v631 = vadd.f32 0.0, %v630
      %v632 = vpop.f32.mrb[0].mxu0
      %633 = vmatprep.mubr.bf16.mxu0 0
      %634 = vmatmul.mubr.bf16.gmra.mrb[0].mxu0 %v582
      %v635 = vpop.f32.mrb[0].mxu0
      %v636 = vadd.f32 0.0, %v635
      %v637 = vpop.f32.mrb[0].mxu0
      %v638 = vpop.f32.mrb[0].mxu0
      %v639 = vadd.f32 0.0, %v638
      %v640 = vpop.f32.mrb[0].mxu0
      %641 = vmatprep.mubr.bf16.mxu0 0
      %642 = vmatmul.mubr.bf16.gmra.mrb[0].mxu0 %v585
      %v643 = vpop.f32.mrb[0].mxu0
      %v644 = vadd.f32 0.0, %v643
      %v645 = vpop.f32.mrb[0].mxu0
      %v646 = vpop.f32.mrb[0].mxu0
      %v647 = vadd.f32 0.0, %v646
      %v648 = vpop.f32.mrb[0].mxu0
      %649 = vmatprep.mubr.bf16.mxu0 0
      %650 = vmatmul.mubr.bf16.gmra.mrb[0].mxu0 %v588
      %v651 = vpop.f32.mrb[0].mxu0
      %v652 = vadd.f32 0.0, %v651
      %v653 = vpop.f32.mrb[0].mxu0
      %v654 = vpop.f32.mrb[0].mxu0
      %v655 = vadd.f32 0.0, %v654
      %v656 = vpop.f32.mrb[0].mxu0
      %657 = vdwg.mxu0
      %v658 = vadd.f32 %v558, %v628
      %v659 = vadd.f32 %v559, %v631
      %v660 = vadd.f32 %v560, %v636
      %v661 = vadd.f32 %v561, %v639
      %v662 = vadd.f32 %v562, %v644
      %v663 = vadd.f32 %v563, %v647
      %v664 = vadd.f32 %v564, %v652
      %v665 = vadd.f32 %v565, %v655
      %v666 = vld [vmem:[%s340] sm:$0xff]
      %v667 = vld [vmem:[%s340 + $0x10] sm:$0xff]
      %v668 = vld [vmem:[%s340 + $0x20] sm:$0xff]
      %v669 = vld [vmem:[%s340 + $0x30] sm:$0xff]
      %v670 = vld [vmem:[%s340 + $0x40] sm:$0xff]
      %v671 = vld [vmem:[%s340 + $0x50] sm:$0xff]
      %v672 = vld [vmem:[%s340 + $0x60] sm:$0xff]
      %v673 = vld [vmem:[%s340 + $0x70] sm:$0xff]
      %v674 = vpack.c.bf16 %v667, %v666
      %v675 = vpack.c.bf16 %v669, %v668
      %v676 = vpack.c.bf16 %v671, %v670
      %v677 = vpack.c.bf16 %v673, %v672
      %v679 = vsel %vm318, %v674, 0
      %v682 = vsel %vm318, %v675, 0
      %v685 = vsel %vm318, %v676, 0
      %v688 = vsel %vm318, %v677, 0
      %v691 = vsel %vm389, %v352, 0
      %693 = vmatprep.subr.bf16.mxu0 0
      %694 = vmatpush1.bf16.msra.mxu0 %v691
      %695 = vmatprep.subr.bf16.mxu0 0
      %696 = vmatpush1.bf16.msra.mxu0 0
      %697 = vmatprep.subr.bf16.mxu0 0
      %698 = vmatpush1.bf16.msra.mxu0 0
      %699 = vmatprep.subr.bf16.mxu0 0
      %700 = vmatpush1.bf16.msra.mxu0 0
      %701 = vmatprep.subr.bf16.mxu0 0
      %702 = vmatpush1.bf16.msra.mxu0 0
      %703 = vmatprep.subr.bf16.mxu0 0
      %704 = vmatpush1.bf16.msra.mxu0 0
      %705 = vmatprep.subr.bf16.mxu0 0
      %706 = vmatpush1.bf16.msra.mxu0 0
      %707 = vmatprep.subr.bf16.mxu0 0
      %708 = vmatpush1.bf16.msra.mxu0 0
      %709 = vmatprep.subr.bf16.mxu0 0
      %710 = vmatpush1.bf16.msra.mxu0 0
      %711 = vmatprep.subr.bf16.mxu0 0
      %712 = vmatpush1.bf16.msra.mxu0 0
      %713 = vmatprep.subr.bf16.mxu0 0
      %714 = vmatpush1.bf16.msra.mxu0 0
      %715 = vmatprep.subr.bf16.mxu0 0
      %716 = vmatpush1.bf16.msra.mxu0 0
      %717 = vmatprep.subr.bf16.mxu0 0
      %718 = vmatpush1.bf16.msra.mxu0 0
      %719 = vmatprep.subr.bf16.mxu0 0
      %720 = vmatpush1.bf16.msra.mxu0 0
      %721 = vmatprep.subr.bf16.mxu0 0
      %722 = vmatpush1.bf16.msra.mxu0 0
      %723 = vmatprep.subr.bf16.mxu0 0
      %724 = vmatpush1.bf16.msra.mxu0 0
      %725 = vmatprep.mubr.bf16.mxu0 0
      %726 = vmatmul.mubr.bf16.gmra.mrb[0].mxu0 %v679
      %v727 = vpop.f32.mrb[0].mxu0
      %v728 = vadd.f32 0.0, %v727
      %v729 = vpop.f32.mrb[0].mxu0
      %v730 = vpop.f32.mrb[0].mxu0
      %v731 = vadd.f32 0.0, %v730
      %v732 = vpop.f32.mrb[0].mxu0
      %733 = vmatprep.mubr.bf16.mxu0 0
      %734 = vmatmul.mubr.bf16.gmra.mrb[0].mxu0 %v682
      %v735 = vpop.f32.mrb[0].mxu0
      %v736 = vadd.f32 0.0, %v735
      %v737 = vpop.f32.mrb[0].mxu0
      %v738 = vpop.f32.mrb[0].mxu0
      %v739 = vadd.f32 0.0, %v738
      %v740 = vpop.f32.mrb[0].mxu0
      %741 = vmatprep.mubr.bf16.mxu0 0
      %742 = vmatmul.mubr.bf16.gmra.mrb[0].mxu0 %v685
      %v743 = vpop.f32.mrb[0].mxu0
      %v744 = vadd.f32 0.0, %v743
      %v745 = vpop.f32.mrb[0].mxu0
      %v746 = vpop.f32.mrb[0].mxu0
      %v747 = vadd.f32 0.0, %v746
      %v748 = vpop.f32.mrb[0].mxu0
      %749 = vmatprep.mubr.bf16.mxu0 0
      %750 = vmatmul.mubr.bf16.gmra.mrb[0].mxu0 %v688
      %v751 = vpop.f32.mrb[0].mxu0
      %v752 = vadd.f32 0.0, %v751
      %v753 = vpop.f32.mrb[0].mxu0
      %v754 = vpop.f32.mrb[0].mxu0
      %v755 = vadd.f32 0.0, %v754
      %v756 = vpop.f32.mrb[0].mxu0
      %757 = vdwg.mxu0
      %v758 = vadd.f32 %v658, %v728
      %v759 = vadd.f32 %v659, %v731
      %v760 = vadd.f32 %v660, %v736
      %v761 = vadd.f32 %v661, %v739
      %v762 = vadd.f32 %v662, %v744
      %v763 = vadd.f32 %v663, %v747
      %v764 = vadd.f32 %v664, %v752
      %v765 = vadd.f32 %v665, %v755
      %v766 = vld [vmem:[%s340 + $0x1] sm:$0xff]
      %v767 = vld [vmem:[%s340 + $0x11] sm:$0xff]
      %v768 = vld [vmem:[%s340 + $0x21] sm:$0xff]
      %v769 = vld [vmem:[%s340 + $0x31] sm:$0xff]
      %v770 = vld [vmem:[%s340 + $0x41] sm:$0xff]
      %v771 = vld [vmem:[%s340 + $0x51] sm:$0xff]
      %v772 = vld [vmem:[%s340 + $0x61] sm:$0xff]
      %v773 = vld [vmem:[%s340 + $0x71] sm:$0xff]
      %v774 = vpack.c.bf16 %v767, %v766
      %v775 = vpack.c.bf16 %v769, %v768
      %v776 = vpack.c.bf16 %v771, %v770
      %v777 = vpack.c.bf16 %v773, %v772
      %v779 = vsel %vm318, %v774, 0
      %v782 = vsel %vm318, %v775, 0
      %v785 = vsel %vm318, %v776, 0
      %v788 = vsel %vm318, %v777, 0
      %v791 = vsel %vm389, %v353, 0
      %793 = vmatprep.subr.bf16.mxu0 0
      %794 = vmatpush1.bf16.msra.mxu0 %v791
      %795 = vmatprep.subr.bf16.mxu0 0
      %796 = vmatpush1.bf16.msra.mxu0 0
      %797 = vmatprep.subr.bf16.mxu0 0
      %798 = vmatpush1.bf16.msra.mxu0 0
      %799 = vmatprep.subr.bf16.mxu0 0
      %800 = vmatpush1.bf16.msra.mxu0 0
      %801 = vmatprep.subr.bf16.mxu0 0
      %802 = vmatpush1.bf16.msra.mxu0 0
      %803 = vmatprep.subr.bf16.mxu0 0
      %804 = vmatpush1.bf16.msra.mxu0 0
      %805 = vmatprep.subr.bf16.mxu0 0
      %806 = vmatpush1.bf16.msra.mxu0 0
      %807 = vmatprep.subr.bf16.mxu0 0
      %808 = vmatpush1.bf16.msra.mxu0 0
      %809 = vmatprep.subr.bf16.mxu0 0
      %810 = vmatpush1.bf16.msra.mxu0 0
      %811 = vmatprep.subr.bf16.mxu0 0
      %812 = vmatpush1.bf16.msra.mxu0 0
      %813 = vmatprep.subr.bf16.mxu0 0
      %814 = vmatpush1.bf16.msra.mxu0 0
      %815 = vmatprep.subr.bf16.mxu0 0
      %816 = vmatpush1.bf16.msra.mxu0 0
      %817 = vmatprep.subr.bf16.mxu0 0
      %818 = vmatpush1.bf16.msra.mxu0 0
      %819 = vmatprep.subr.bf16.mxu0 0
      %820 = vmatpush1.bf16.msra.mxu0 0
      %821 = vmatprep.subr.bf16.mxu0 0
      %822 = vmatpush1.bf16.msra.mxu0 0
      %823 = vmatprep.subr.bf16.mxu0 0
      %824 = vmatpush1.bf16.msra.mxu0 0
      %825 = vmatprep.mubr.bf16.mxu0 0
      %826 = vmatmul.mubr.bf16.gmra.mrb[0].mxu0 %v779
      %v827 = vpop.f32.mrb[0].mxu0
      %v828 = vadd.f32 0.0, %v827
      %v829 = vpop.f32.mrb[0].mxu0
      %v830 = vpop.f32.mrb[0].mxu0
      %v831 = vadd.f32 0.0, %v830
      %v832 = vpop.f32.mrb[0].mxu0
      %833 = vmatprep.mubr.bf16.mxu0 0
      %834 = vmatmul.mubr.bf16.gmra.mrb[0].mxu0 %v782
      %v835 = vpop.f32.mrb[0].mxu0
      %v836 = vadd.f32 0.0, %v835
      %v837 = vpop.f32.mrb[0].mxu0
      %v838 = vpop.f32.mrb[0].mxu0
      %v839 = vadd.f32 0.0, %v838
      %v840 = vpop.f32.mrb[0].mxu0
      %841 = vmatprep.mubr.bf16.mxu0 0
      %842 = vmatmul.mubr.bf16.gmra.mrb[0].mxu0 %v785
      %v843 = vpop.f32.mrb[0].mxu0
      %v844 = vadd.f32 0.0, %v843
      %v845 = vpop.f32.mrb[0].mxu0
      %v846 = vpop.f32.mrb[0].mxu0
      %v847 = vadd.f32 0.0, %v846
      %v848 = vpop.f32.mrb[0].mxu0
      %849 = vmatprep.mubr.bf16.mxu0 0
      %850 = vmatmul.mubr.bf16.gmra.mrb[0].mxu0 %v788
      %v851 = vpop.f32.mrb[0].mxu0
      %v852 = vadd.f32 0.0, %v851
      %v853 = vpop.f32.mrb[0].mxu0
      %v854 = vpop.f32.mrb[0].mxu0
      %v855 = vadd.f32 0.0, %v854
      %v856 = vpop.f32.mrb[0].mxu0
      %857 = vdwg.mxu0
      %v858 = vadd.f32 %v758, %v828
      %v859 = vadd.f32 %v759, %v831
      %v860 = vadd.f32 %v760, %v836
      %v861 = vadd.f32 %v761, %v839
      %v862 = vadd.f32 %v762, %v844
      %v863 = vadd.f32 %v763, %v847
      %v864 = vadd.f32 %v764, %v852
      %v865 = vadd.f32 %v765, %v855
      %v866 = vld [vmem:[%s340 + $0x2] sm:$0xff]
      %v867 = vld [vmem:[%s340 + $0x12] sm:$0xff]
      %v868 = vld [vmem:[%s340 + $0x22] sm:$0xff]
      %v869 = vld [vmem:[%s340 + $0x32] sm:$0xff]
      %v870 = vld [vmem:[%s340 + $0x42] sm:$0xff]
      %v871 = vld [vmem:[%s340 + $0x52] sm:$0xff]
      %v872 = vld [vmem:[%s340 + $0x62] sm:$0xff]
      %v873 = vld [vmem:[%s340 + $0x72] sm:$0xff]
      %v874 = vpack.c.bf16 %v867, %v866
      %v875 = vpack.c.bf16 %v869, %v868
      %v876 = vpack.c.bf16 %v871, %v870
      %v877 = vpack.c.bf16 %v873, %v872
      %v879 = vsel %vm318, %v874, 0
      %v882 = vsel %vm318, %v875, 0
      %v885 = vsel %vm318, %v876, 0
      %v888 = vsel %vm318, %v877, 0
      %v891 = vsel %vm389, %v354, 0
      %893 = vmatprep.subr.bf16.mxu0 0
      %894 = vmatpush1.bf16.msra.mxu0 %v891
      %895 = vmatprep.subr.bf16.mxu0 0
      %896 = vmatpush1.bf16.msra.mxu0 0
      %897 = vmatprep.subr.bf16.mxu0 0
      %898 = vmatpush1.bf16.msra.mxu0 0
      %899 = vmatprep.subr.bf16.mxu0 0
      %900 = vmatpush1.bf16.msra.mxu0 0
      %901 = vmatprep.subr.bf16.mxu0 0
      %902 = vmatpush1.bf16.msra.mxu0 0
      %903 = vmatprep.subr.bf16.mxu0 0
      %904 = vmatpush1.bf16.msra.mxu0 0
      %905 = vmatprep.subr.bf16.mxu0 0
      %906 = vmatpush1.bf16.msra.mxu0 0
      %907 = vmatprep.subr.bf16.mxu0 0
      %908 = vmatpush1.bf16.msra.mxu0 0
      %909 = vmatprep.subr.bf16.mxu0 0
      %910 = vmatpush1.bf16.msra.mxu0 0
      %911 = vmatprep.subr.bf16.mxu0 0
      %912 = vmatpush1.bf16.msra.mxu0 0
      %913 = vmatprep.subr.bf16.mxu0 0
      %914 = vmatpush1.bf16.msra.mxu0 0
      %915 = vmatprep.subr.bf16.mxu0 0
      %916 = vmatpush1.bf16.msra.mxu0 0
      %917 = vmatprep.subr.bf16.mxu0 0
      %918 = vmatpush1.bf16.msra.mxu0 0
      %919 = vmatprep.subr.bf16.mxu0 0
      %920 = vmatpush1.bf16.msra.mxu0 0
      %921 = vmatprep.subr.bf16.mxu0 0
      %922 = vmatpush1.bf16.msra.mxu0 0
      %923 = vmatprep.subr.bf16.mxu0 0
      %924 = vmatpush1.bf16.msra.mxu0 0
      %925 = vmatprep.mubr.bf16.mxu0 0
      %926 = vmatmul.mubr.bf16.gmra.mrb[0].mxu0 %v879
      %v927 = vpop.f32.mrb[0].mxu0
      %v928 = vadd.f32 0.0, %v927
      %v929 = vpop.f32.mrb[0].mxu0
      %v930 = vpop.f32.mrb[0].mxu0
      %v931 = vadd.f32 0.0, %v930
      %v932 = vpop.f32.mrb[0].mxu0
      %933 = vmatprep.mubr.bf16.mxu0 0
      %934 = vmatmul.mubr.bf16.gmra.mrb[0].mxu0 %v882
      %v935 = vpop.f32.mrb[0].mxu0
      %v936 = vadd.f32 0.0, %v935
      %v937 = vpop.f32.mrb[0].mxu0
      %v938 = vpop.f32.mrb[0].mxu0
      %v939 = vadd.f32 0.0, %v938
      %v940 = vpop.f32.mrb[0].mxu0
      %941 = vmatprep.mubr.bf16.mxu0 0
      %942 = vmatmul.mubr.bf16.gmra.mrb[0].mxu0 %v885
      %v943 = vpop.f32.mrb[0].mxu0
      %v944 = vadd.f32 0.0, %v943
      %v945 = vpop.f32.mrb[0].mxu0
      %v946 = vpop.f32.mrb[0].mxu0
      %v947 = vadd.f32 0.0, %v946
      %v948 = vpop.f32.mrb[0].mxu0
      %949 = vmatprep.mubr.bf16.mxu0 0
      %950 = vmatmul.mubr.bf16.gmra.mrb[0].mxu0 %v888
      %v951 = vpop.f32.mrb[0].mxu0
      %v952 = vadd.f32 0.0, %v951
      %v953 = vpop.f32.mrb[0].mxu0
      %v954 = vpop.f32.mrb[0].mxu0
      %v955 = vadd.f32 0.0, %v954
      %v956 = vpop.f32.mrb[0].mxu0
      %957 = vdwg.mxu0
      %v958 = vadd.f32 %v858, %v928
      %v959 = vadd.f32 %v859, %v931
      %v960 = vadd.f32 %v860, %v936
      %v961 = vadd.f32 %v861, %v939
      %v962 = vadd.f32 %v862, %v944
      %v963 = vadd.f32 %v863, %v947
      %v964 = vadd.f32 %v864, %v952
      %v965 = vadd.f32 %v865, %v955
      %s966 = scalar_lea.vmem [#allocation2], 32
      %v967 = vld [vmem:[%s966] sm:$0xff]
      %v968 = vld [vmem:[%s966 + $0x10] sm:$0xff]
      %v969 = vld [vmem:[%s966 + $0x20] sm:$0xff]
      %v970 = vld [vmem:[%s966 + $0x30] sm:$0xff]
      %v971 = vld [vmem:[%s966 + $0x40] sm:$0xff]
      %v972 = vld [vmem:[%s966 + $0x50] sm:$0xff]
      %v973 = vld [vmem:[%s966 + $0x60] sm:$0xff]
      %v974 = vld [vmem:[%s966 + $0x70] sm:$0xff]
      %v975 = vpack.c.bf16 %v968, %v967
      %v976 = vpack.c.bf16 %v970, %v969
      %v977 = vpack.c.bf16 %v972, %v971
      %v978 = vpack.c.bf16 %v974, %v973
      %v980 = vsel %vm318, %v975, 0
      %v983 = vsel %vm318, %v976, 0
      %v986 = vsel %vm318, %v977, 0
      %v989 = vsel %vm318, %v978, 0
      %v992 = vsel %vm389, %v355, 0
      %994 = vmatprep.subr.bf16.mxu0 0
      %995 = vmatpush1.bf16.msra.mxu0 %v992
      %996 = vmatprep.subr.bf16.mxu0 0
      %997 = vmatpush1.bf16.msra.mxu0 0
      %998 = vmatprep.subr.bf16.mxu0 0
      %999 = vmatpush1.bf16.msra.mxu0 0
      %1000 = vmatprep.subr.bf16.mxu0 0
      %1001 = vmatpush1.bf16.msra.mxu0 0
      %1002 = vmatprep.subr.bf16.mxu0 0
      %1003 = vmatpush1.bf16.msra.mxu0 0
      %1004 = vmatprep.subr.bf16.mxu0 0
      %1005 = vmatpush1.bf16.msra.mxu0 0
      %1006 = vmatprep.subr.bf16.mxu0 0
      %1007 = vmatpush1.bf16.msra.mxu0 0
      %1008 = vmatprep.subr.bf16.mxu0 0
      %1009 = vmatpush1.bf16.msra.mxu0 0
      %1010 = vmatprep.subr.bf16.mxu0 0
      %1011 = vmatpush1.bf16.msra.mxu0 0
      %1012 = vmatprep.subr.bf16.mxu0 0
      %1013 = vmatpush1.bf16.msra.mxu0 0
      %1014 = vmatprep.subr.bf16.mxu0 0
      %1015 = vmatpush1.bf16.msra.mxu0 0
      %1016 = vmatprep.subr.bf16.mxu0 0
      %1017 = vmatpush1.bf16.msra.mxu0 0
      %1018 = vmatprep.subr.bf16.mxu0 0
      %1019 = vmatpush1.bf16.msra.mxu0 0
      %1020 = vmatprep.subr.bf16.mxu0 0
      %1021 = vmatpush1.bf16.msra.mxu0 0
      %1022 = vmatprep.subr.bf16.mxu0 0
      %1023 = vmatpush1.bf16.msra.mxu0 0
      %1024 = vmatprep.subr.bf16.mxu0 0
      %1025 = vmatpush1.bf16.msra.mxu0 0
      %1026 = vmatprep.mubr.bf16.mxu0 0
      %1027 = vmatmul.mubr.bf16.gmra.mrb[0].mxu0 %v980
      %v1028 = vpop.f32.mrb[0].mxu0
      %v1029 = vadd.f32 0.0, %v1028
      %v1030 = vpop.f32.mrb[0].mxu0
      %v1031 = vpop.f32.mrb[0].mxu0
      %v1032 = vadd.f32 0.0, %v1031
      %v1033 = vpop.f32.mrb[0].mxu0
      %1034 = vmatprep.mubr.bf16.mxu0 0
      %1035 = vmatmul.mubr.bf16.gmra.mrb[0].mxu0 %v983
      %v1036 = vpop.f32.mrb[0].mxu0
      %v1037 = vadd.f32 0.0, %v1036
      %v1038 = vpop.f32.mrb[0].mxu0
      %v1039 = vpop.f32.mrb[0].mxu0
      %v1040 = vadd.f32 0.0, %v1039
      %v1041 = vpop.f32.mrb[0].mxu0
      %1042 = vmatprep.mubr.bf16.mxu0 0
      %1043 = vmatmul.mubr.bf16.gmra.mrb[0].mxu0 %v986
      %v1044 = vpop.f32.mrb[0].mxu0
      %v1045 = vadd.f32 0.0, %v1044
      %v1046 = vpop.f32.mrb[0].mxu0
      %v1047 = vpop.f32.mrb[0].mxu0
      %v1048 = vadd.f32 0.0, %v1047
      %v1049 = vpop.f32.mrb[0].mxu0
      %1050 = vmatprep.mubr.bf16.mxu0 0
      %1051 = vmatmul.mubr.bf16.gmra.mrb[0].mxu0 %v989
      %v1052 = vpop.f32.mrb[0].mxu0
      %v1053 = vadd.f32 0.0, %v1052
      %v1054 = vpop.f32.mrb[0].mxu0
      %v1055 = vpop.f32.mrb[0].mxu0
      %v1056 = vadd.f32 0.0, %v1055
      %v1057 = vpop.f32.mrb[0].mxu0
      %1058 = vdwg.mxu0
      %v1059 = vadd.f32 %v958, %v1029
      %v1060 = vadd.f32 %v959, %v1032
      %v1061 = vadd.f32 %v960, %v1037
      %v1062 = vadd.f32 %v961, %v1040
      %v1063 = vadd.f32 %v962, %v1045
      %v1064 = vadd.f32 %v963, %v1048
      %v1065 = vadd.f32 %v964, %v1053
      %v1066 = vadd.f32 %v965, %v1056
      %v1067 = vld [vmem:[%s966 + $0x1] sm:$0xff]
      %v1068 = vld [vmem:[%s966 + $0x11] sm:$0xff]
      %v1069 = vld [vmem:[%s966 + $0x21] sm:$0xff]
      %v1070 = vld [vmem:[%s966 + $0x31] sm:$0xff]
      %v1071 = vld [vmem:[%s966 + $0x41] sm:$0xff]
      %v1072 = vld [vmem:[%s966 + $0x51] sm:$0xff]
      %v1073 = vld [vmem:[%s966 + $0x61] sm:$0xff]
      %v1074 = vld [vmem:[%s966 + $0x71] sm:$0xff]
      %v1075 = vpack.c.bf16 %v1068, %v1067
      %v1076 = vpack.c.bf16 %v1070, %v1069
      %v1077 = vpack.c.bf16 %v1072, %v1071
      %v1078 = vpack.c.bf16 %v1074, %v1073
      %v1080 = vsel %vm318, %v1075, 0
      %v1083 = vsel %vm318, %v1076, 0
      %v1086 = vsel %vm318, %v1077, 0
      %v1089 = vsel %vm318, %v1078, 0
      %v1092 = vsel %vm389, %v356, 0
      %1094 = vmatprep.subr.bf16.mxu0 0
      %1095 = vmatpush1.bf16.msra.mxu0 %v1092
      %1096 = vmatprep.subr.bf16.mxu0 0
      %1097 = vmatpush1.bf16.msra.mxu0 0
      %1098 = vmatprep.subr.bf16.mxu0 0
      %1099 = vmatpush1.bf16.msra.mxu0 0
      %1100 = vmatprep.subr.bf16.mxu0 0
      %1101 = vmatpush1.bf16.msra.mxu0 0
      %1102 = vmatprep.subr.bf16.mxu0 0
      %1103 = vmatpush1.bf16.msra.mxu0 0
      %1104 = vmatprep.subr.bf16.mxu0 0
      %1105 = vmatpush1.bf16.msra.mxu0 0
      %1106 = vmatprep.subr.bf16.mxu0 0
      %1107 = vmatpush1.bf16.msra.mxu0 0
      %1108 = vmatprep.subr.bf16.mxu0 0
      %1109 = vmatpush1.bf16.msra.mxu0 0
      %1110 = vmatprep.subr.bf16.mxu0 0
      %1111 = vmatpush1.bf16.msra.mxu0 0
      %1112 = vmatprep.subr.bf16.mxu0 0
      %1113 = vmatpush1.bf16.msra.mxu0 0
      %1114 = vmatprep.subr.bf16.mxu0 0
      %1115 = vmatpush1.bf16.msra.mxu0 0
      %1116 = vmatprep.subr.bf16.mxu0 0
      %1117 = vmatpush1.bf16.msra.mxu0 0
      %1118 = vmatprep.subr.bf16.mxu0 0
      %1119 = vmatpush1.bf16.msra.mxu0 0
      %1120 = vmatprep.subr.bf16.mxu0 0
      %1121 = vmatpush1.bf16.msra.mxu0 0
      %1122 = vmatprep.subr.bf16.mxu0 0
      %1123 = vmatpush1.bf16.msra.mxu0 0
      %1124 = vmatprep.subr.bf16.mxu0 0
      %1125 = vmatpush1.bf16.msra.mxu0 0
      %1126 = vmatprep.mubr.bf16.mxu0 0
      %1127 = vmatmul.mubr.bf16.gmra.mrb[0].mxu0 %v1080
      %v1128 = vpop.f32.mrb[0].mxu0
      %v1129 = vadd.f32 0.0, %v1128
      %v1130 = vpop.f32.mrb[0].mxu0
      %v1131 = vpop.f32.mrb[0].mxu0
      %v1132 = vadd.f32 0.0, %v1131
      %v1133 = vpop.f32.mrb[0].mxu0
      %1134 = vmatprep.mubr.bf16.mxu0 0
      %1135 = vmatmul.mubr.bf16.gmra.mrb[0].mxu0 %v1083
      %v1136 = vpop.f32.mrb[0].mxu0
      %v1137 = vadd.f32 0.0, %v1136
      %v1138 = vpop.f32.mrb[0].mxu0
      %v1139 = vpop.f32.mrb[0].mxu0
      %v1140 = vadd.f32 0.0, %v1139
      %v1141 = vpop.f32.mrb[0].mxu0
      %1142 = vmatprep.mubr.bf16.mxu0 0
      %1143 = vmatmul.mubr.bf16.gmra.mrb[0].mxu0 %v1086
      %v1144 = vpop.f32.mrb[0].mxu0
      %v1145 = vadd.f32 0.0, %v1144
      %v1146 = vpop.f32.mrb[0].mxu0
      %v1147 = vpop.f32.mrb[0].mxu0
      %v1148 = vadd.f32 0.0, %v1147
      %v1149 = vpop.f32.mrb[0].mxu0
      %1150 = vmatprep.mubr.bf16.mxu0 0
      %1151 = vmatmul.mubr.bf16.gmra.mrb[0].mxu0 %v1089
      %v1152 = vpop.f32.mrb[0].mxu0
      %v1153 = vadd.f32 0.0, %v1152
      %v1154 = vpop.f32.mrb[0].mxu0
      %v1155 = vpop.f32.mrb[0].mxu0
      %v1156 = vadd.f32 0.0, %v1155
      %v1157 = vpop.f32.mrb[0].mxu0
      %1158 = vdwg.mxu0
      %v1159 = vadd.f32 %v1059, %v1129
      %v1160 = vadd.f32 %v1060, %v1132
      %v1161 = vadd.f32 %v1061, %v1137
      %v1162 = vadd.f32 %v1062, %v1140
      %v1163 = vadd.f32 %v1063, %v1145
      %v1164 = vadd.f32 %v1064, %v1148
      %v1165 = vadd.f32 %v1065, %v1153
      %v1166 = vadd.f32 %v1066, %v1156
      %v1167 = vld [vmem:[%s966 + $0x2] sm:$0xff]
      %v1168 = vld [vmem:[%s966 + $0x12] sm:$0xff]
      %v1169 = vld [vmem:[%s966 + $0x22] sm:$0xff]
      %v1170 = vld [vmem:[%s966 + $0x32] sm:$0xff]
      %v1171 = vld [vmem:[%s966 + $0x42] sm:$0xff]
      %v1172 = vld [vmem:[%s966 + $0x52] sm:$0xff]
      %v1173 = vld [vmem:[%s966 + $0x62] sm:$0xff]
      %v1174 = vld [vmem:[%s966 + $0x72] sm:$0xff]
      %v1175 = vpack.c.bf16 %v1168, %v1167
      %v1176 = vpack.c.bf16 %v1170, %v1169
      %v1177 = vpack.c.bf16 %v1172, %v1171
      %v1178 = vpack.c.bf16 %v1174, %v1173
      %v1180 = vsel %vm318, %v1175, 0
      %v1183 = vsel %vm318, %v1176, 0
      %v1186 = vsel %vm318, %v1177, 0
      %v1189 = vsel %vm318, %v1178, 0
      %v1192 = vsel %vm389, %v357, 0
      %1194 = vmatprep.subr.bf16.mxu0 0
      %1195 = vmatpush1.bf16.msra.mxu0 %v1192
      %1196 = vmatprep.subr.bf16.mxu0 0
      %1197 = vmatpush1.bf16.msra.mxu0 0
      %1198 = vmatprep.subr.bf16.mxu0 0
      %1199 = vmatpush1.bf16.msra.mxu0 0
      %1200 = vmatprep.subr.bf16.mxu0 0
      %1201 = vmatpush1.bf16.msra.mxu0 0
      %1202 = vmatprep.subr.bf16.mxu0 0
      %1203 = vmatpush1.bf16.msra.mxu0 0
      %1204 = vmatprep.subr.bf16.mxu0 0
      %1205 = vmatpush1.bf16.msra.mxu0 0
      %1206 = vmatprep.subr.bf16.mxu0 0
      %1207 = vmatpush1.bf16.msra.mxu0 0
      %1208 = vmatprep.subr.bf16.mxu0 0
      %1209 = vmatpush1.bf16.msra.mxu0 0
      %1210 = vmatprep.subr.bf16.mxu0 0
      %1211 = vmatpush1.bf16.msra.mxu0 0
      %1212 = vmatprep.subr.bf16.mxu0 0
      %1213 = vmatpush1.bf16.msra.mxu0 0
      %1214 = vmatprep.subr.bf16.mxu0 0
      %1215 = vmatpush1.bf16.msra.mxu0 0
      %1216 = vmatprep.subr.bf16.mxu0 0
      %1217 = vmatpush1.bf16.msra.mxu0 0
      %1218 = vmatprep.subr.bf16.mxu0 0
      %1219 = vmatpush1.bf16.msra.mxu0 0
      %1220 = vmatprep.subr.bf16.mxu0 0
      %1221 = vmatpush1.bf16.msra.mxu0 0
      %1222 = vmatprep.subr.bf16.mxu0 0
      %1223 = vmatpush1.bf16.msra.mxu0 0
      %1224 = vmatprep.subr.bf16.mxu0 0
      %1225 = vmatpush1.bf16.msra.mxu0 0
      %1226 = vmatprep.mubr.bf16.mxu0 0
      %1227 = vmatmul.mubr.bf16.gmra.mrb[0].mxu0 %v1180
      %v1228 = vpop.f32.mrb[0].mxu0
      %v1229 = vadd.f32 0.0, %v1228
      %v1230 = vpop.f32.mrb[0].mxu0
      %v1231 = vpop.f32.mrb[0].mxu0
      %v1232 = vadd.f32 0.0, %v1231
      %v1233 = vpop.f32.mrb[0].mxu0
      %1234 = vmatprep.mubr.bf16.mxu0 0
      %1235 = vmatmul.mubr.bf16.gmra.mrb[0].mxu0 %v1183
      %v1236 = vpop.f32.mrb[0].mxu0
      %v1237 = vadd.f32 0.0, %v1236
      %v1238 = vpop.f32.mrb[0].mxu0
      %v1239 = vpop.f32.mrb[0].mxu0
      %v1240 = vadd.f32 0.0, %v1239
      %v1241 = vpop.f32.mrb[0].mxu0
      %1242 = vmatprep.mubr.bf16.mxu0 0
      %1243 = vmatmul.mubr.bf16.gmra.mrb[0].mxu0 %v1186
      %v1244 = vpop.f32.mrb[0].mxu0
      %v1245 = vadd.f32 0.0, %v1244
      %v1246 = vpop.f32.mrb[0].mxu0
      %v1247 = vpop.f32.mrb[0].mxu0
      %v1248 = vadd.f32 0.0, %v1247
      %v1249 = vpop.f32.mrb[0].mxu0
      %1250 = vmatprep.mubr.bf16.mxu0 0
      %1251 = vmatmul.mubr.bf16.gmra.mrb[0].mxu0 %v1189
      %v1252 = vpop.f32.mrb[0].mxu0
      %v1253 = vadd.f32 0.0, %v1252
      %v1254 = vpop.f32.mrb[0].mxu0
      %v1255 = vpop.f32.mrb[0].mxu0
      %v1256 = vadd.f32 0.0, %v1255
      %v1257 = vpop.f32.mrb[0].mxu0
      %1258 = vdwg.mxu0
      %v1259 = vadd.f32 %v1159, %v1229
      %v1260 = vadd.f32 %v1160, %v1232
      %v1261 = vadd.f32 %v1161, %v1237
      %v1262 = vadd.f32 %v1162, %v1240
      %v1263 = vadd.f32 %v1163, %v1245
      %v1264 = vadd.f32 %v1164, %v1248
      %v1265 = vadd.f32 %v1165, %v1253
      %v1266 = vadd.f32 %v1166, %v1256
      %v1267 = vpack.c.bf16 %v1259, %v1259
      %v1268 = vpack.c.bf16 %v1260, %v1260
      %v1269 = vpack.c.bf16 %v1261, %v1261
      %v1270 = vpack.c.bf16 %v1262, %v1262
      %v1271 = vpack.c.bf16 %v1263, %v1263
      %v1272 = vpack.c.bf16 %v1264, %v1264
      %v1273 = vpack.c.bf16 %v1265, %v1265
      %v1274 = vpack.c.bf16 %v1266, %v1266
      %vm1275 = vcmask 60416
      %1276 = vst.msk [vmem:[%s258] sm:$0xf] %vm1275, %v1267
      %1277 = vst.msk [vmem:[%s258 + $0x4] sm:$0xf] %vm1275, %v1268
      %1278 = vst.msk [vmem:[%s258 + $0x8] sm:$0xf] %vm1275, %v1269
      %1279 = vst.msk [vmem:[%s258 + $0xc] sm:$0xf] %vm1275, %v1270
      %1280 = vst.msk [vmem:[%s258 + $0x10] sm:$0xf] %vm1275, %v1271
      %1281 = vst.msk [vmem:[%s258 + $0x14] sm:$0xf] %vm1275, %v1272
      %1282 = vst.msk [vmem:[%s258 + $0x18] sm:$0xf] %vm1275, %v1273
      %1283 = vst.msk [vmem:[%s258 + $0x1c] sm:$0xf] %vm1275, %v1274
      %v1284 = vsel %vm318, %v1259, 0.0
      %v1285 = vsel %vm318, %v1260, 0.0
      %v1286 = vadd.f32 %v1284, %v1285
      %v1287 = vsel %vm318, %v1261, 0.0
      %v1288 = vadd.f32 %v1286, %v1287
      %v1289 = vsel %vm318, %v1262, 0.0
      %v1290 = vadd.f32 %v1288, %v1289
      %v1291 = vsel %vm318, %v1263, 0.0
      %v1292 = vadd.f32 %v1290, %v1291
      %v1293 = vsel %vm318, %v1264, 0.0
      %v1294 = vadd.f32 %v1292, %v1293
      %v1295 = vsel %vm318, %v1265, 0.0
      %v1296 = vadd.f32 %v1294, %v1295
      %v1297 = vsel %vm318, %v1266, 0.0
      %v1298 = vadd.f32 %v1296, %v1297
      %v1299 = vrot.slane %v1298, 4
      %v1300 = vadd.f32 %v1298, %v1299
      %v1301 = vrot.slane %v1300, 2
      %v1302 = vadd.f32 %v1300, %v1301
      %v1303 = vrot.slane %v1302, 1
      %v1304 = vadd.f32 %v1302, %v1303
      %v1305 = vmul.f32 %v1304, 0.015625
      %v1306 = vsub.f32 %v1259, %v1305
      %v1307 = vsub.f32 %v1260, %v1305
      %v1308 = vsub.f32 %v1261, %v1305
      %v1309 = vsub.f32 %v1262, %v1305
      %v1310 = vsub.f32 %v1263, %v1305
      %v1311 = vsub.f32 %v1264, %v1305
      %v1312 = vsub.f32 %v1265, %v1305
      %v1313 = vsub.f32 %v1266, %v1305
      %v1314 = vmul.f32 %v1306, %v1306
      %v1315 = vmul.f32 %v1307, %v1307
      %v1316 = vmul.f32 %v1308, %v1308
      %v1317 = vmul.f32 %v1309, %v1309
      %v1318 = vmul.f32 %v1310, %v1310
      %v1319 = vmul.f32 %v1311, %v1311
      %v1320 = vmul.f32 %v1312, %v1312
      %v1321 = vmul.f32 %v1313, %v1313
      %v1322 = vsel %vm318, %v1314, 0.0
      %v1323 = vsel %vm318, %v1315, 0.0
      %v1324 = vadd.f32 %v1322, %v1323
      %v1325 = vsel %vm318, %v1316, 0.0
      %v1326 = vadd.f32 %v1324, %v1325
      %v1327 = vsel %vm318, %v1317, 0.0
      %v1328 = vadd.f32 %v1326, %v1327
      %v1329 = vsel %vm318, %v1318, 0.0
      %v1330 = vadd.f32 %v1328, %v1329
      %v1331 = vsel %vm318, %v1319, 0.0
      %v1332 = vadd.f32 %v1330, %v1331
      %v1333 = vsel %vm318, %v1320, 0.0
      %v1334 = vadd.f32 %v1332, %v1333
      %v1335 = vsel %vm318, %v1321, 0.0
      %v1336 = vadd.f32 %v1334, %v1335
      %v1337 = vrot.slane %v1336, 4
      %v1338 = vadd.f32 %v1336, %v1337
      %v1339 = vrot.slane %v1338, 2
      %v1340 = vadd.f32 %v1338, %v1339
      %v1341 = vrot.slane %v1340, 1
      %v1342 = vadd.f32 %v1340, %v1341
      %vm1343 = vcmask 57344
      %1344 = vst.msk [vmem:[%s262] sm:$0x1] %vm1343, %v1305
      %1345 = vst.msk [vmem:[%s262 + $0x1] sm:$0x1] %vm1343, %v1342
      %p1346 = scmp.lt.s32.totalorder %s18, 1
      %s1347 = scalar_select %p1346, %s18, 1
      %s1348 = smul.addr %s1347, 8
      %s1349 = smul.addr %s1348, 4
      %s1350 = scalar_lea.vmem %s5, %s1349
      %p1351 = scmp.lt.s32.totalorder %s18, 1
      %s1352 = scalar_select %p1351, %s18, 1
      %s1353 = smul.addr %s1352, 2
      %s1354 = scalar_lea.vmem %s6, %s1353
      // Predicated region
      $region41: #{unet_down_forward.4} parent=39 // pred_check
        %p1355 = pneg %p146
      $region42: #{unet_down_forward.4} parent=39 // pred_check_branch
        %1357 = sbr.rel (%p1355) target = $region44
      $region43: #{unet_down_forward.4} parent=39 // pred_region
        _
      $region44: #{unet_down_forward.4} parent=39 // pred_fallthru
        _
      // Predicated region
      $region45: #{unet_down_forward.4} parent=39 // pred_check
        %p1358 = pneg %p172
      $region46: #{unet_down_forward.4} parent=39 // pred_check_branch
        %1360 = sbr.rel (%p1358) target = $region48
      $region47: #{unet_down_forward.4} parent=39 // pred_region
        _
      $region48: #{unet_down_forward.4} parent=39 // pred_fallthru
        _
    $region40: #{unet_down_forward.4} parent=5 // pred_fallthru
      _
    %p1361 = scmp.le.s32.totalorder 2, %s13
    // Predicated region
    $region49: #{unet_down_forward.4} parent=5 // pred_check
      %p1362 = pneg %p1361
    $region50: #{unet_down_forward.4} parent=5 // pred_check_branch
      %1364 = sbr.rel (%p1362) target = $region52
    $region51: #{unet_down_forward.4} parent=5 // pred_region
      %s1365 = ssub.s32 %s13, 2
      // Predicated region
      $region53: #{unet_down_forward.4} parent=51 // pred_check
        %p1366 = pneg %p152
      $region54: #{unet_down_forward.4} parent=51 // pred_check_branch
        %1368 = sbr.rel (%p1366) target = $region56
      $region55: #{unet_down_forward.4} parent=51 // pred_region
        %p1369 = scmp.lt.s32.totalorder %s19, 1
        %s1370 = scalar_select %p1369, %s19, 1
        %s1371 = smul.addr %s1370, 8
        %s1372 = smul.addr %s1371, 4
        %s1373 = scalar_lea.vmem %s5, %s1372
      $region56: #{unet_down_forward.4} parent=51 // pred_fallthru
        _
      // Predicated region
      $region57: #{unet_down_forward.4} parent=51 // pred_check
        %p1374 = pneg %p178
      $region58: #{unet_down_forward.4} parent=51 // pred_check_branch
        %1376 = sbr.rel (%p1374) target = $region60
      $region59: #{unet_down_forward.4} parent=51 // pred_region
        %p1377 = scmp.lt.s32.totalorder %s19, 1
        %s1378 = scalar_select %p1377, %s19, 1
        %s1379 = smul.addr %s1378, 2
        %s1380 = scalar_lea.vmem %s6, %s1379
      $region60: #{unet_down_forward.4} parent=51 // pred_fallthru
        _
    $region52: #{unet_down_forward.4} parent=5 // pred_fallthru
      _
  $region6: #{unet_down_forward.4} parent=0 // loop_footer
    %s17 = sadd.s32 1, %s13
  $region7: #{unet_down_forward.4} parent=0 // loop_footer_branch
    %12 = sbr.rel target = $region3
  $region8: #{unet_down_forward.4} parent=0 // loop_exit
    _

</llo_original>
